<compile_context>
chip_gen: v5e
topology: v5e:2x2
jax: 0.10.0
libtpu: 0.0.40
codegen_flags: <defaults>
</compile_context>

<pallas_src>
import functools

import jax
import jax.numpy as jnp
from jax.experimental import pallas as pl
from jax.experimental.pallas import tpu as pltpu

LRELU_SLOPE = 0.2
BN_EPS = 1e-5
KSIZE = 4          # both convs are 4x4, stride 2, pad 1
OUT_LANES = 128    # lane-dense output block (col 0..output_dim-1 used)


# ----------------------------- fused Pallas kernel --------------------------

def _disc_kernel(patches_ref, w1_ref, b1_ref,
                 w2_ref, b2_ref, g2_ref, bt2_ref,
                 w3_ref, b3_ref, g3_ref, bt3_ref,
                 w4_ref, b4_ref,
                 o_ref,
                 y1pad_ref, y2_ref, acc_ref):
    k = pl.program_id(0)
    _, hh, wh, bsz, c1 = y1pad_ref.shape          # (4, H2+1, W2+1, B, 64)
    h2, w2 = hh - 1, wh - 1
    hw2, _, c2 = y2_ref.shape                     # (H2*W2, B, 128)
    pos_per_step = w3_ref.shape[0]

    # ---- step 0: conv1 -> conv2 -> BN2d -> LReLU into VMEM scratch ----------
    @pl.when(k == 0)
    def _conv_stages():
        # conv1 (+bias, LeakyReLU): single (B*H1*W1, 256) @ (256, 64) matmul.
        # Patch-matrix rows are ordered ((po,qo) parity group, rr, cc, b).
        y1 = jnp.dot(patches_ref[...], w1_ref[...],
                     preferred_element_type=jnp.float32) + b1_ref[...]
        y1 = jnp.where(y1 > 0, y1, LRELU_SLOPE * y1)

        # Scatter into the parity-split, zero-padded scratch with static slices:
        # scratch[pr*2+pc, r, c, b, :] = conv1_out[b, 2r+pr-1, 2c+pc-1, :] (0 on ring)
        y1pad_ref[...] = jnp.zeros_like(y1pad_ref)
        npos = h2 * w2 * bsz
        for g1 in range(4):
            po, qo = g1 // 2, g1 % 2
            blk = y1[g1 * npos:(g1 + 1) * npos, :].reshape(h2, w2, bsz, c1)
            y1pad_ref[(1 - po) * 2 + (1 - qo), po:po + h2, qo:qo + w2, :, :] = blk

        # conv2: 16 static-slice tap matmuls (no sel gather, no strided access).
        z2 = jnp.zeros((h2 * w2 * bsz, c2), jnp.float32)
        for t in range(KSIZE * KSIZE):
            i, j = t // KSIZE, t % KSIZE
            g = (i % 2) * 2 + (j % 2)
            slab = y1pad_ref[g, i // 2:i // 2 + h2, j // 2:j // 2 + w2, :, :]
            z2 = z2 + jnp.dot(slab.reshape(h2 * w2 * bsz, c1), w2_ref[t],
                              preferred_element_type=jnp.float32)
        z2 = z2 + b2_ref[...]

        # BatchNorm2d(128): batch statistics over all (B, H2, W2) rows.
        mean2 = jnp.mean(z2, axis=0, keepdims=True)
        var2 = jnp.mean((z2 - mean2) ** 2, axis=0, keepdims=True)
        z2 = (z2 - mean2) * jax.lax.rsqrt(var2 + BN_EPS) * g2_ref[...] + bt2_ref[...]
        y2 = jnp.where(z2 > 0, z2, LRELU_SLOPE * z2)   # rows are (p2, b): position-major

        y2_ref[...] = y2.reshape(hw2, bsz, c2)
        acc_ref[...] = jnp.zeros_like(acc_ref)

    # ---- every step: fc1 partial against this step's streamed w3 tile -------
    acc = acc_ref[...]
    for q in range(pos_per_step):
        a = y2_ref[k * pos_per_step + q].astype(w3_ref.dtype)     # (B, 128)
        acc = acc + jnp.dot(a, w3_ref[q], preferred_element_type=jnp.float32)
    acc_ref[...] = acc

    # ---- last step: BN1d + LReLU + fc2 + Sigmoid, lane-dense output ---------
    @pl.when(k == pl.num_programs(0) - 1)
    def _head():
        y3 = acc_ref[...] + b3_ref[...]
        mean3 = jnp.mean(y3, axis=0, keepdims=True)
        var3 = jnp.mean((y3 - mean3) ** 2, axis=0, keepdims=True)
        y3 = (y3 - mean3) * jax.lax.rsqrt(var3 + BN_EPS) * g3_ref[...] + bt3_ref[...]
        y3 = jnp.where(y3 > 0, y3, LRELU_SLOPE * y3)
        y4 = jnp.dot(y3, w4_ref[...], preferred_element_type=jnp.float32) + b4_ref[...]
        o_ref[...] = pl.reciprocal(1.0 + jnp.exp(-y4), approx=False)


# ------------------------------ host-side helpers ---------------------------

def init_params(key, input_dim=1, class_num=10, input_size=16, output_dim=1):
    """Deterministic synthetic init in PyTorch layout (mirrors
    utils.initialize_weights: conv/linear ~ N(0, 0.02), BN gamma ~ N(1, 0.02),
    biases / beta = 0)."""
    ks = jax.random.split(key, 6)
    cin = input_dim + class_num
    feat = 128 * (input_size // 4) * (input_size // 4)
    return dict(
        conv1_w=0.02 * jax.random.normal(ks[0], (64, cin, KSIZE, KSIZE), jnp.float32),
        conv1_b=jnp.zeros((64,), jnp.float32),
        conv2_w=0.02 * jax.random.normal(ks[1], (128, 64, KSIZE, KSIZE), jnp.float32),
        conv2_b=jnp.zeros((128,), jnp.float32),
        bn2_g=1.0 + 0.02 * jax.random.normal(ks[2], (128,), jnp.float32),
        bn2_b=jnp.zeros((128,), jnp.float32),
        fc1_w=0.02 * jax.random.normal(ks[3], (1024, feat), jnp.float32),
        fc1_b=jnp.zeros((1024,), jnp.float32),
        bn3_g=1.0 + 0.02 * jax.random.normal(ks[4], (1024,), jnp.float32),
        bn3_b=jnp.zeros((1024,), jnp.float32),
        fc2_w=0.02 * jax.random.normal(ks[5], (output_dim, 1024), jnp.float32),
        fc2_b=jnp.zeros((output_dim,), jnp.float32),
    )


def pack_params(tp, w3_dtype=jnp.float32):
    """One-time host-side layout permutation of PyTorch-layout weights.
    w3_dtype=jnp.bfloat16 halves the dominant HBM stream (opt-in; default f32
    keeps numerical parity with the PyTorch module)."""
    w1 = tp["conv1_w"]                            # (64, Cin, 4, 4)
    c1, cin = w1.shape[0], w1.shape[1]
    cin_pad = ((cin + 7) // 8) * 8                # 11 -> 16
    w1 = jnp.pad(w1, ((0, 0), (0, cin_pad - cin), (0, 0), (0, 0)))
    # col index = (i*4+j)*cin_pad + ch, matching the im2col patch matrix
    w1col = jnp.transpose(w1, (2, 3, 1, 0)).reshape(KSIZE * KSIZE * cin_pad, c1)

    w2 = tp["conv2_w"]                            # (128, 64, 4, 4)
    c2 = w2.shape[0]
    w2col = jnp.transpose(w2, (2, 3, 1, 0)).reshape(KSIZE * KSIZE, c1, c2)

    w3 = tp["fc1_w"]                              # (1024, C2*HW2), torch feat = c*HW2 + p2
    f1 = w3.shape[0]
    hw2 = w3.shape[1] // c2
    # position-major packing: w3pos[p2, c, o] = fc1_w[o, c*HW2 + p2]
    w3pos = jnp.transpose(w3.reshape(f1, c2, hw2), (2, 1, 0)).astype(w3_dtype)

    w4 = tp["fc2_w"]                              # (output_dim, 1024)
    od = w4.shape[0]
    w4pad = jnp.zeros((f1, OUT_LANES), jnp.float32).at[:, :od].set(jnp.transpose(w4))
    b4pad = jnp.zeros((1, OUT_LANES), jnp.float32).at[:, :od].set(
        tp["fc2_b"].reshape(1, od))

    return dict(
        w1=w1col, b1=tp["conv1_b"].reshape(1, c1),
        w2=w2col, b2=tp["conv2_b"].reshape(1, c2),
        g2=tp["bn2_g"].reshape(1, c2), beta2=tp["bn2_b"].reshape(1, c2),
        w3=w3pos, b3=tp["fc1_b"].reshape(1, f1),
        g3=tp["bn3_g"].reshape(1, f1), beta3=tp["bn3_b"].reshape(1, f1),
        w4=w4pad, b4=b4pad,
    )


@functools.partial(jax.jit, static_argnames=("output_dim",))
def discriminator_forward(packed, image, label, output_dim=1):
    """image: [B, input_dim, H, W], label: [B, class_num, H, W] (NCHW)."""
    B, _, H, W = image.shape
    H1, W1 = H // 2, W // 2
    H2, W2 = H1 // 2, W1 // 2
    HW2 = H2 * W2
    c1 = packed["w1"].shape[1]
    c2 = packed["w2"].shape[2]
    f1 = packed["w3"].shape[2]
    cin_pad = packed["w1"].shape[0] // (KSIZE * KSIZE)

    # Entry-only XLA glue on a tiny tensor: concat + NCHW->NHWC + channel pad
    # + conv padding + conv1 im2col.  Rows are ordered (parity-group, rr, cc, b)
    # so conv1's output scatters into the kernel's parity-split scratch with
    # static slices; columns are (tap, channel) matching the packed w1.
    x = jnp.concatenate([image, label], axis=1)
    x = jnp.transpose(x, (0, 2, 3, 1)).astype(jnp.float32)            # NHWC
    cin = x.shape[-1]
    x = jnp.pad(x, ((0, 0), (1, 1), (1, 1), (0, cin_pad - cin)))       # [B,H+2,W+2,cp]
    taps = [x[:, i:i + 2 * H1:2, j:j + 2 * W1:2, :]
            for i in range(KSIZE) for j in range(KSIZE)]
    patches = jnp.stack(taps, axis=3)                                  # (B,H1,W1,16,cp)
    patches = patches.reshape(B, H2, 2, W2, 2, KSIZE * KSIZE, cin_pad)
    patches = jnp.transpose(patches, (2, 4, 1, 3, 0, 5, 6))            # (po,qo,rr,cc,b,tap,ch)
    patches = patches.reshape(B * H1 * W1, KSIZE * KSIZE * cin_pad)

    pos_per_step = next(p for p in (4, 2, 1) if HW2 % p == 0)
    n_steps = HW2 // pos_per_step

    args = (patches, packed["w1"], packed["b1"],
            packed["w2"], packed["b2"], packed["g2"], packed["beta2"],
            packed["w3"], packed["b3"], packed["g3"], packed["beta3"],
            packed["w4"], packed["b4"])

    def const_spec(a):
        return pl.BlockSpec(a.shape, lambda k, n=a.ndim: (0,) * n)

    in_specs = [const_spec(a) for a in args]
    # stream the 8 MiB fc1 weight in pos_per_step-position tiles (double-buffered)
    in_specs[7] = pl.BlockSpec((pos_per_step, c2, f1), lambda k: (k, 0, 0))

    grid_spec = pltpu.PrefetchScalarGridSpec(
        num_scalar_prefetch=0,
        grid=(n_steps,),
        in_specs=in_specs,
        out_specs=pl.BlockSpec((B, OUT_LANES), lambda k: (0, 0)),
        scratch_shapes=[
            pltpu.VMEM((4, H2 + 1, W2 + 1, B, c1), jnp.float32),  # padded conv1 out
            pltpu.VMEM((HW2, B, c2), jnp.float32),                # conv2+BN+LReLU out
            pltpu.VMEM((B, f1), jnp.float32),                     # fc1 accumulator
        ])

    out = pl.pallas_call(
        _disc_kernel,
        out_shape=jax.ShapeDtypeStruct((B, OUT_LANES), jnp.float32),
        grid_spec=grid_spec,
        compiler_params=pltpu.CompilerParams(
            # fc1 accumulation axis is sequential (init at k==0, finalize at last)
            dimension_semantics=("arbitrary",),
            vmem_limit_bytes=32 * 1024 * 1024),
    )(*args)
    return out[:, :output_dim]


if __name__ == "__main__":
    key = jax.random.PRNGKey(0)
    k_par, k_img, k_lbl = jax.random.split(key, 3)

    B, INPUT_DIM, CLASS_NUM, INPUT_SIZE, OUTPUT_DIM = 2, 1, 10, 16, 1
    torch_layout_params = init_params(k_par, input_dim=INPUT_DIM,
                                      class_num=CLASS_NUM,
                                      input_size=INPUT_SIZE,
                                      output_dim=OUTPUT_DIM)
    packed = pack_params(torch_layout_params)

    image = jax.random.normal(k_img, (B, INPUT_DIM, INPUT_SIZE, INPUT_SIZE),
                              jnp.float32)
    # CGAN-style label maps: one-hot class expanded over the spatial dims.
    class_ids = jax.random.randint(k_lbl, (B,), 0, CLASS_NUM)
    label = jnp.broadcast_to(
        jax.nn.one_hot(class_ids, CLASS_NUM, dtype=jnp.float32)[:, :, None, None],
        (B, CLASS_NUM, INPUT_SIZE, INPUT_SIZE))

    out = discriminator_forward(packed, image, label, output_dim=OUTPUT_DIM)
    jax.block_until_ready(out)
    assert out.shape == (B, OUTPUT_DIM)
    assert bool(jnp.all(jnp.isfinite(out)))
    print("KERNEL_OK")
</pallas_src>

<mosaic_0001>
module attributes {stable_mosaic.version = 11 : i64} {
  func.func @_disc_kernel(%arg0: i32, %arg1: memref<128x256xf32, #tpu.memory_space<vmem>>, %arg2: memref<256x64xf32, #tpu.memory_space<vmem>>, %arg3: memref<1x64xf32, #tpu.memory_space<vmem>>, %arg4: memref<16x64x128xf32, #tpu.memory_space<vmem>>, %arg5: memref<1x128xf32, #tpu.memory_space<vmem>>, %arg6: memref<1x128xf32, #tpu.memory_space<vmem>>, %arg7: memref<1x128xf32, #tpu.memory_space<vmem>>, %arg8: memref<4x128x1024xf32, #tpu.memory_space<vmem>>, %arg9: memref<1x1024xf32, #tpu.memory_space<vmem>>, %arg10: memref<1x1024xf32, #tpu.memory_space<vmem>>, %arg11: memref<1x1024xf32, #tpu.memory_space<vmem>>, %arg12: memref<1024x128xf32, #tpu.memory_space<vmem>>, %arg13: memref<1x128xf32, #tpu.memory_space<vmem>>, %arg14: memref<2x128xf32, #tpu.memory_space<vmem>>, %arg15: memref<4x5x5x2x64xf32, #tpu.memory_space<vmem>>, %arg16: memref<16x2x128xf32, #tpu.memory_space<vmem>>, %arg17: memref<2x1024xf32, #tpu.memory_space<vmem>>) attributes {dimension_semantics = [#tpu.dimension_semantics<arbitrary>], iteration_bounds = array<i64: 4>, scalar_prefetch = 0 : i64, scratch_operands = 3 : i64, tpu.core_type = #tpu.core_type<tc>, window_params = [{pipeline_mode = #tpu.pipeline_mode<synchronous>, transform_indices = @transform_0, window_bounds = array<i64: 128, 256>}, {pipeline_mode = #tpu.pipeline_mode<synchronous>, transform_indices = @transform_1, window_bounds = array<i64: 256, 64>}, {pipeline_mode = #tpu.pipeline_mode<synchronous>, transform_indices = @transform_2, window_bounds = array<i64: 1, 64>}, {pipeline_mode = #tpu.pipeline_mode<synchronous>, transform_indices = @transform_3, window_bounds = array<i64: 16, 64, 128>}, {pipeline_mode = #tpu.pipeline_mode<synchronous>, transform_indices = @transform_4, window_bounds = array<i64: 1, 128>}, {pipeline_mode = #tpu.pipeline_mode<synchronous>, transform_indices = @transform_5, window_bounds = array<i64: 1, 128>}, {pipeline_mode = #tpu.pipeline_mode<synchronous>, transform_indices = @transform_6, window_bounds = array<i64: 1, 128>}, {transform_indices = @transform_7, window_bounds = array<i64: 4, 128, 1024>}, {pipeline_mode = #tpu.pipeline_mode<synchronous>, transform_indices = @transform_8, window_bounds = array<i64: 1, 1024>}, {pipeline_mode = #tpu.pipeline_mode<synchronous>, transform_indices = @transform_9, window_bounds = array<i64: 1, 1024>}, {pipeline_mode = #tpu.pipeline_mode<synchronous>, transform_indices = @transform_10, window_bounds = array<i64: 1, 1024>}, {pipeline_mode = #tpu.pipeline_mode<synchronous>, transform_indices = @transform_11, window_bounds = array<i64: 1024, 128>}, {pipeline_mode = #tpu.pipeline_mode<synchronous>, transform_indices = @transform_12, window_bounds = array<i64: 1, 128>}, {pipeline_mode = #tpu.pipeline_mode<synchronous>, transform_indices = @transform_13, window_bounds = array<i64: 2, 128>}]} {
    %c0_i32 = arith.constant 0 : i32
    %0 = arith.cmpi eq, %arg0, %c0_i32 : i32
    %1 = arith.extui %0 : i1 to i32
    %c0_i32_0 = arith.constant 0 : i32
    %2 = arith.cmpi ne, %1, %c0_i32_0 : i32
    scf.if %2 {
      %c0_30 = arith.constant 0 : index
      %c0_31 = arith.constant 0 : index
      %44 = vector.load %arg1[%c0_30, %c0_31] : memref<128x256xf32, #tpu.memory_space<vmem>>, vector<128x256xf32>
      %c0_32 = arith.constant 0 : index
      %c0_33 = arith.constant 0 : index
      %45 = vector.load %arg2[%c0_32, %c0_33] : memref<256x64xf32, #tpu.memory_space<vmem>>, vector<256x64xf32>
      %cst_34 = arith.constant dense<0.000000e+00> : vector<128x64xf32>
      %46 = tpu.matmul %44, %45, %cst_34 {dimension_numbers = #tpu.dot_dimension_numbers<[1], [0], [0], [1], [0, 0, 1, 1], [], []>} : vector<128x256xf32>, vector<256x64xf32>, vector<128x64xf32> -> vector<128x64xf32>
      %c0_35 = arith.constant 0 : index
      %c0_36 = arith.constant 0 : index
      %47 = vector.load %arg3[%c0_35, %c0_36] : memref<1x64xf32, #tpu.memory_space<vmem>>, vector<1x64xf32>
      %48 = vector.broadcast %47 : vector<1x64xf32> to vector<128x64xf32>
      %49 = arith.addf %46, %48 : vector<128x64xf32>
      %cst_37 = arith.constant 0.000000e+00 : f32
      %50 = vector.broadcast %cst_37 : f32 to vector<128x64xf32>
      %51 = arith.cmpf ogt, %49, %50 : vector<128x64xf32>
      %cst_38 = arith.constant 2.000000e-01 : f32
      %52 = vector.broadcast %cst_38 : f32 to vector<128x64xf32>
      %53 = arith.mulf %52, %49 : vector<128x64xf32>
      %54 = arith.select %51, %49, %53 : vector<128x64xi1>, vector<128x64xf32>
      %cst_39 = arith.constant 0.000000e+00 : f32
      %55 = vector.broadcast %cst_39 : f32 to vector<4x5x5x2x64xf32>
      %c0_40 = arith.constant 0 : index
      %c0_41 = arith.constant 0 : index
      %c0_42 = arith.constant 0 : index
      %c0_43 = arith.constant 0 : index
      %c0_44 = arith.constant 0 : index
      %56 = vector.load %arg15[%c0_40, %c0_41, %c0_42, %c0_43, %c0_44] : memref<4x5x5x2x64xf32, #tpu.memory_space<vmem>>, vector<4x5x5x2x64xf32>
      tpu.vector_store %arg15[%c0_40, %c0_41, %c0_42, %c0_43, %c0_44], %55 {strides = array<i32>} : memref<4x5x5x2x64xf32, #tpu.memory_space<vmem>>, vector<4x5x5x2x64xf32>,
      %57 = vector.extract_strided_slice %54 {offsets = [0, 0], sizes = [32, 64], strides = [1, 1]} : vector<128x64xf32> to vector<32x64xf32>
      %58 = vector.shape_cast %57 : vector<32x64xf32> to vector<4x4x2x64xf32>
      %c3_45 = arith.constant 3 : index
      %c0_46 = arith.constant 0 : index
      %c0_47 = arith.constant 0 : index
      %c0_48 = arith.constant 0 : index
      %c0_49 = arith.constant 0 : index
      %59 = vector.load %arg15[%c3_45, %c0_46, %c0_47, %c0_48, %c0_49] : memref<4x5x5x2x64xf32, #tpu.memory_space<vmem>>, vector<1x4x4x2x64xf32>
      %60 = vector.shape_cast %59 : vector<1x4x4x2x64xf32> to vector<4x4x2x64xf32>
      %61 = vector.shape_cast %58 : vector<4x4x2x64xf32> to vector<1x4x4x2x64xf32>
      tpu.vector_store %arg15[%c3_45, %c0_46, %c0_47, %c0_48, %c0_49], %61 {strides = array<i32>} : memref<4x5x5x2x64xf32, #tpu.memory_space<vmem>>, vector<1x4x4x2x64xf32>,
      %62 = vector.extract_strided_slice %54 {offsets = [32, 0], sizes = [32, 64], strides = [1, 1]} : vector<128x64xf32> to vector<32x64xf32>
      %63 = vector.shape_cast %62 : vector<32x64xf32> to vector<4x4x2x64xf32>
      %c2_50 = arith.constant 2 : index
      %c0_51 = arith.constant 0 : index
      %c1_52 = arith.constant 1 : index
      %c0_53 = arith.constant 0 : index
      %c0_54 = arith.constant 0 : index
      %64 = vector.load %arg15[%c2_50, %c0_51, %c1_52, %c0_53, %c0_54] : memref<4x5x5x2x64xf32, #tpu.memory_space<vmem>>, vector<1x4x4x2x64xf32>
      %65 = vector.shape_cast %64 : vector<1x4x4x2x64xf32> to vector<4x4x2x64xf32>
      %66 = vector.shape_cast %63 : vector<4x4x2x64xf32> to vector<1x4x4x2x64xf32>
      tpu.vector_store %arg15[%c2_50, %c0_51, %c1_52, %c0_53, %c0_54], %66 {strides = array<i32>} : memref<4x5x5x2x64xf32, #tpu.memory_space<vmem>>, vector<1x4x4x2x64xf32>,
      %67 = vector.extract_strided_slice %54 {offsets = [64, 0], sizes = [32, 64], strides = [1, 1]} : vector<128x64xf32> to vector<32x64xf32>
      %68 = vector.shape_cast %67 : vector<32x64xf32> to vector<4x4x2x64xf32>
      %c1_55 = arith.constant 1 : index
      %c1_56 = arith.constant 1 : index
      %c0_57 = arith.constant 0 : index
      %c0_58 = arith.constant 0 : index
      %c0_59 = arith.constant 0 : index
      %69 = vector.load %arg15[%c1_55, %c1_56, %c0_57, %c0_58, %c0_59] : memref<4x5x5x2x64xf32, #tpu.memory_space<vmem>>, vector<1x4x4x2x64xf32>
      %70 = vector.shape_cast %69 : vector<1x4x4x2x64xf32> to vector<4x4x2x64xf32>
      %71 = vector.shape_cast %68 : vector<4x4x2x64xf32> to vector<1x4x4x2x64xf32>
      tpu.vector_store %arg15[%c1_55, %c1_56, %c0_57, %c0_58, %c0_59], %71 {strides = array<i32>} : memref<4x5x5x2x64xf32, #tpu.memory_space<vmem>>, vector<1x4x4x2x64xf32>,
      %72 = vector.extract_strided_slice %54 {offsets = [96, 0], sizes = [32, 64], strides = [1, 1]} : vector<128x64xf32> to vector<32x64xf32>
      %73 = vector.shape_cast %72 : vector<32x64xf32> to vector<4x4x2x64xf32>
      %c0_60 = arith.constant 0 : index
      %c1_61 = arith.constant 1 : index
      %c1_62 = arith.constant 1 : index
      %c0_63 = arith.constant 0 : index
      %c0_64 = arith.constant 0 : index
      %74 = vector.load %arg15[%c0_60, %c1_61, %c1_62, %c0_63, %c0_64] : memref<4x5x5x2x64xf32, #tpu.memory_space<vmem>>, vector<1x4x4x2x64xf32>
      %75 = vector.shape_cast %74 : vector<1x4x4x2x64xf32> to vector<4x4x2x64xf32>
      %76 = vector.shape_cast %73 : vector<4x4x2x64xf32> to vector<1x4x4x2x64xf32>
      tpu.vector_store %arg15[%c0_60, %c1_61, %c1_62, %c0_63, %c0_64], %76 {strides = array<i32>} : memref<4x5x5x2x64xf32, #tpu.memory_space<vmem>>, vector<1x4x4x2x64xf32>,
      %cst_65 = arith.constant 0.000000e+00 : f32
      %77 = vector.broadcast %cst_65 : f32 to vector<32x128xf32>
      %c0_66 = arith.constant 0 : index
      %c0_67 = arith.constant 0 : index
      %c0_68 = arith.constant 0 : index
      %c0_69 = arith.constant 0 : index
      %c0_70 = arith.constant 0 : index
      %78 = vector.load %arg15[%c0_66, %c0_67, %c0_68, %c0_69, %c0_70] : memref<4x5x5x2x64xf32, #tpu.memory_space<vmem>>, vector<1x4x4x2x64xf32>
      %79 = vector.shape_cast %78 : vector<1x4x4x2x64xf32> to vector<4x4x2x64xf32>
      %80 = vector.shape_cast %79 : vector<4x4x2x64xf32> to vector<32x64xf32>
      %c0_71 = arith.constant 0 : index
      %c0_72 = arith.constant 0 : index
      %c0_73 = arith.constant 0 : index
      %81 = vector.load %arg4[%c0_71, %c0_72, %c0_73] : memref<16x64x128xf32, #tpu.memory_space<vmem>>, vector<1x64x128xf32>
      %82 = vector.shape_cast %81 : vector<1x64x128xf32> to vector<64x128xf32>
      %cst_74 = arith.constant dense<0.000000e+00> : vector<32x128xf32>
      %83 = tpu.matmul %80, %82, %cst_74 {dimension_numbers = #tpu.dot_dimension_numbers<[1], [0], [0], [1], [0, 0, 1, 1], [], []>} : vector<32x64xf32>, vector<64x128xf32>, vector<32x128xf32> -> vector<32x128xf32>
      %84 = arith.addf %77, %83 : vector<32x128xf32>
      %c1_75 = arith.constant 1 : index
      %c0_76 = arith.constant 0 : index
      %c0_77 = arith.constant 0 : index
      %c0_78 = arith.constant 0 : index
      %c0_79 = arith.constant 0 : index
      %85 = vector.load %arg15[%c1_75, %c0_76, %c0_77, %c0_78, %c0_79] : memref<4x5x5x2x64xf32, #tpu.memory_space<vmem>>, vector<1x4x4x2x64xf32>
      %86 = vector.shape_cast %85 : vector<1x4x4x2x64xf32> to vector<4x4x2x64xf32>
      %87 = vector.shape_cast %86 : vector<4x4x2x64xf32> to vector<32x64xf32>
      %c1_80 = arith.constant 1 : index
      %c0_81 = arith.constant 0 : index
      %c0_82 = arith.constant 0 : index
      %88 = vector.load %arg4[%c1_80, %c0_81, %c0_82] : memref<16x64x128xf32, #tpu.memory_space<vmem>>, vector<1x64x128xf32>
      %89 = vector.shape_cast %88 : vector<1x64x128xf32> to vector<64x128xf32>
      %cst_83 = arith.constant dense<0.000000e+00> : vector<32x128xf32>
      %90 = tpu.matmul %87, %89, %cst_83 {dimension_numbers = #tpu.dot_dimension_numbers<[1], [0], [0], [1], [0, 0, 1, 1], [], []>} : vector<32x64xf32>, vector<64x128xf32>, vector<32x128xf32> -> vector<32x128xf32>
      %91 = arith.addf %84, %90 : vector<32x128xf32>
      %c0_84 = arith.constant 0 : index
      %c0_85 = arith.constant 0 : index
      %c1_86 = arith.constant 1 : index
      %c0_87 = arith.constant 0 : index
      %c0_88 = arith.constant 0 : index
      %92 = vector.load %arg15[%c0_84, %c0_85, %c1_86, %c0_87, %c0_88] : memref<4x5x5x2x64xf32, #tpu.memory_space<vmem>>, vector<1x4x4x2x64xf32>
      %93 = vector.shape_cast %92 : vector<1x4x4x2x64xf32> to vector<4x4x2x64xf32>
      %94 = vector.shape_cast %93 : vector<4x4x2x64xf32> to vector<32x64xf32>
      %c2_89 = arith.constant 2 : index
      %c0_90 = arith.constant 0 : index
      %c0_91 = arith.constant 0 : index
      %95 = vector.load %arg4[%c2_89, %c0_90, %c0_91] : memref<16x64x128xf32, #tpu.memory_space<vmem>>, vector<1x64x128xf32>
      %96 = vector.shape_cast %95 : vector<1x64x128xf32> to vector<64x128xf32>
      %cst_92 = arith.constant dense<0.000000e+00> : vector<32x128xf32>
      %97 = tpu.matmul %94, %96, %cst_92 {dimension_numbers = #tpu.dot_dimension_numbers<[1], [0], [0], [1], [0, 0, 1, 1], [], []>} : vector<32x64xf32>, vector<64x128xf32>, vector<32x128xf32> -> vector<32x128xf32>
      %98 = arith.addf %91, %97 : vector<32x128xf32>
      %c1_93 = arith.constant 1 : index
      %c0_94 = arith.constant 0 : index
      %c1_95 = arith.constant 1 : index
      %c0_96 = arith.constant 0 : index
      %c0_97 = arith.constant 0 : index
      %99 = vector.load %arg15[%c1_93, %c0_94, %c1_95, %c0_96, %c0_97] : memref<4x5x5x2x64xf32, #tpu.memory_space<vmem>>, vector<1x4x4x2x64xf32>
      %100 = vector.shape_cast %99 : vector<1x4x4x2x64xf32> to vector<4x4x2x64xf32>
      %101 = vector.shape_cast %100 : vector<4x4x2x64xf32> to vector<32x64xf32>
      %c3_98 = arith.constant 3 : index
      %c0_99 = arith.constant 0 : index
      %c0_100 = arith.constant 0 : index
      %102 = vector.load %arg4[%c3_98, %c0_99, %c0_100] : memref<16x64x128xf32, #tpu.memory_space<vmem>>, vector<1x64x128xf32>
      %103 = vector.shape_cast %102 : vector<1x64x128xf32> to vector<64x128xf32>
      %cst_101 = arith.constant dense<0.000000e+00> : vector<32x128xf32>
      %104 = tpu.matmul %101, %103, %cst_101 {dimension_numbers = #tpu.dot_dimension_numbers<[1], [0], [0], [1], [0, 0, 1, 1], [], []>} : vector<32x64xf32>, vector<64x128xf32>, vector<32x128xf32> -> vector<32x128xf32>
      %105 = arith.addf %98, %104 : vector<32x128xf32>
      %c2_102 = arith.constant 2 : index
      %c0_103 = arith.constant 0 : index
      %c0_104 = arith.constant 0 : index
      %c0_105 = arith.constant 0 : index
      %c0_106 = arith.constant 0 : index
      %106 = vector.load %arg15[%c2_102, %c0_103, %c0_104, %c0_105, %c0_106] : memref<4x5x5x2x64xf32, #tpu.memory_space<vmem>>, vector<1x4x4x2x64xf32>
      %107 = vector.shape_cast %106 : vector<1x4x4x2x64xf32> to vector<4x4x2x64xf32>
      %108 = vector.shape_cast %107 : vector<4x4x2x64xf32> to vector<32x64xf32>
      %c4 = arith.constant 4 : index
      %c0_107 = arith.constant 0 : index
      %c0_108 = arith.constant 0 : index
      %109 = vector.load %arg4[%c4, %c0_107, %c0_108] : memref<16x64x128xf32, #tpu.memory_space<vmem>>, vector<1x64x128xf32>
      %110 = vector.shape_cast %109 : vector<1x64x128xf32> to vector<64x128xf32>
      %cst_109 = arith.constant dense<0.000000e+00> : vector<32x128xf32>
      %111 = tpu.matmul %108, %110, %cst_109 {dimension_numbers = #tpu.dot_dimension_numbers<[1], [0], [0], [1], [0, 0, 1, 1], [], []>} : vector<32x64xf32>, vector<64x128xf32>, vector<32x128xf32> -> vector<32x128xf32>
      %112 = arith.addf %105, %111 : vector<32x128xf32>
      %c3_110 = arith.constant 3 : index
      %c0_111 = arith.constant 0 : index
      %c0_112 = arith.constant 0 : index
      %c0_113 = arith.constant 0 : index
      %c0_114 = arith.constant 0 : index
      %113 = vector.load %arg15[%c3_110, %c0_111, %c0_112, %c0_113, %c0_114] : memref<4x5x5x2x64xf32, #tpu.memory_space<vmem>>, vector<1x4x4x2x64xf32>
      %114 = vector.shape_cast %113 : vector<1x4x4x2x64xf32> to vector<4x4x2x64xf32>
      %115 = vector.shape_cast %114 : vector<4x4x2x64xf32> to vector<32x64xf32>
      %c5 = arith.constant 5 : index
      %c0_115 = arith.constant 0 : index
      %c0_116 = arith.constant 0 : index
      %116 = vector.load %arg4[%c5, %c0_115, %c0_116] : memref<16x64x128xf32, #tpu.memory_space<vmem>>, vector<1x64x128xf32>
      %117 = vector.shape_cast %116 : vector<1x64x128xf32> to vector<64x128xf32>
      %cst_117 = arith.constant dense<0.000000e+00> : vector<32x128xf32>
      %118 = tpu.matmul %115, %117, %cst_117 {dimension_numbers = #tpu.dot_dimension_numbers<[1], [0], [0], [1], [0, 0, 1, 1], [], []>} : vector<32x64xf32>, vector<64x128xf32>, vector<32x128xf32> -> vector<32x128xf32>
      %119 = arith.addf %112, %118 : vector<32x128xf32>
      %c2_118 = arith.constant 2 : index
      %c0_119 = arith.constant 0 : index
      %c1_120 = arith.constant 1 : index
      %c0_121 = arith.constant 0 : index
      %c0_122 = arith.constant 0 : index
      %120 = vector.load %arg15[%c2_118, %c0_119, %c1_120, %c0_121, %c0_122] : memref<4x5x5x2x64xf32, #tpu.memory_space<vmem>>, vector<1x4x4x2x64xf32>
      %121 = vector.shape_cast %120 : vector<1x4x4x2x64xf32> to vector<4x4x2x64xf32>
      %122 = vector.shape_cast %121 : vector<4x4x2x64xf32> to vector<32x64xf32>
      %c6 = arith.constant 6 : index
      %c0_123 = arith.constant 0 : index
      %c0_124 = arith.constant 0 : index
      %123 = vector.load %arg4[%c6, %c0_123, %c0_124] : memref<16x64x128xf32, #tpu.memory_space<vmem>>, vector<1x64x128xf32>
      %124 = vector.shape_cast %123 : vector<1x64x128xf32> to vector<64x128xf32>
      %cst_125 = arith.constant dense<0.000000e+00> : vector<32x128xf32>
      %125 = tpu.matmul %122, %124, %cst_125 {dimension_numbers = #tpu.dot_dimension_numbers<[1], [0], [0], [1], [0, 0, 1, 1], [], []>} : vector<32x64xf32>, vector<64x128xf32>, vector<32x128xf32> -> vector<32x128xf32>
      %126 = arith.addf %119, %125 : vector<32x128xf32>
      %c3_126 = arith.constant 3 : index
      %c0_127 = arith.constant 0 : index
      %c1_128 = arith.constant 1 : index
      %c0_129 = arith.constant 0 : index
      %c0_130 = arith.constant 0 : index
      %127 = vector.load %arg15[%c3_126, %c0_127, %c1_128, %c0_129, %c0_130] : memref<4x5x5x2x64xf32, #tpu.memory_space<vmem>>, vector<1x4x4x2x64xf32>
      %128 = vector.shape_cast %127 : vector<1x4x4x2x64xf32> to vector<4x4x2x64xf32>
      %129 = vector.shape_cast %128 : vector<4x4x2x64xf32> to vector<32x64xf32>
      %c7 = arith.constant 7 : index
      %c0_131 = arith.constant 0 : index
      %c0_132 = arith.constant 0 : index
      %130 = vector.load %arg4[%c7, %c0_131, %c0_132] : memref<16x64x128xf32, #tpu.memory_space<vmem>>, vector<1x64x128xf32>
      %131 = vector.shape_cast %130 : vector<1x64x128xf32> to vector<64x128xf32>
      %cst_133 = arith.constant dense<0.000000e+00> : vector<32x128xf32>
      %132 = tpu.matmul %129, %131, %cst_133 {dimension_numbers = #tpu.dot_dimension_numbers<[1], [0], [0], [1], [0, 0, 1, 1], [], []>} : vector<32x64xf32>, vector<64x128xf32>, vector<32x128xf32> -> vector<32x128xf32>
      %133 = arith.addf %126, %132 : vector<32x128xf32>
      %c0_134 = arith.constant 0 : index
      %c1_135 = arith.constant 1 : index
      %c0_136 = arith.constant 0 : index
      %c0_137 = arith.constant 0 : index
      %c0_138 = arith.constant 0 : index
      %134 = vector.load %arg15[%c0_134, %c1_135, %c0_136, %c0_137, %c0_138] : memref<4x5x5x2x64xf32, #tpu.memory_space<vmem>>, vector<1x4x4x2x64xf32>
      %135 = vector.shape_cast %134 : vector<1x4x4x2x64xf32> to vector<4x4x2x64xf32>
      %136 = vector.shape_cast %135 : vector<4x4x2x64xf32> to vector<32x64xf32>
      %c8 = arith.constant 8 : index
      %c0_139 = arith.constant 0 : index
      %c0_140 = arith.constant 0 : index
      %137 = vector.load %arg4[%c8, %c0_139, %c0_140] : memref<16x64x128xf32, #tpu.memory_space<vmem>>, vector<1x64x128xf32>
      %138 = vector.shape_cast %137 : vector<1x64x128xf32> to vector<64x128xf32>
      %cst_141 = arith.constant dense<0.000000e+00> : vector<32x128xf32>
      %139 = tpu.matmul %136, %138, %cst_141 {dimension_numbers = #tpu.dot_dimension_numbers<[1], [0], [0], [1], [0, 0, 1, 1], [], []>} : vector<32x64xf32>, vector<64x128xf32>, vector<32x128xf32> -> vector<32x128xf32>
      %140 = arith.addf %133, %139 : vector<32x128xf32>
      %c1_142 = arith.constant 1 : index
      %c1_143 = arith.constant 1 : index
      %c0_144 = arith.constant 0 : index
      %c0_145 = arith.constant 0 : index
      %c0_146 = arith.constant 0 : index
      %141 = vector.load %arg15[%c1_142, %c1_143, %c0_144, %c0_145, %c0_146] : memref<4x5x5x2x64xf32, #tpu.memory_space<vmem>>, vector<1x4x4x2x64xf32>
      %142 = vector.shape_cast %141 : vector<1x4x4x2x64xf32> to vector<4x4x2x64xf32>
      %143 = vector.shape_cast %142 : vector<4x4x2x64xf32> to vector<32x64xf32>
      %c9 = arith.constant 9 : index
      %c0_147 = arith.constant 0 : index
      %c0_148 = arith.constant 0 : index
      %144 = vector.load %arg4[%c9, %c0_147, %c0_148] : memref<16x64x128xf32, #tpu.memory_space<vmem>>, vector<1x64x128xf32>
      %145 = vector.shape_cast %144 : vector<1x64x128xf32> to vector<64x128xf32>
      %cst_149 = arith.constant dense<0.000000e+00> : vector<32x128xf32>
      %146 = tpu.matmul %143, %145, %cst_149 {dimension_numbers = #tpu.dot_dimension_numbers<[1], [0], [0], [1], [0, 0, 1, 1], [], []>} : vector<32x64xf32>, vector<64x128xf32>, vector<32x128xf32> -> vector<32x128xf32>
      %147 = arith.addf %140, %146 : vector<32x128xf32>
      %c0_150 = arith.constant 0 : index
      %c1_151 = arith.constant 1 : index
      %c1_152 = arith.constant 1 : index
      %c0_153 = arith.constant 0 : index
      %c0_154 = arith.constant 0 : index
      %148 = vector.load %arg15[%c0_150, %c1_151, %c1_152, %c0_153, %c0_154] : memref<4x5x5x2x64xf32, #tpu.memory_space<vmem>>, vector<1x4x4x2x64xf32>
      %149 = vector.shape_cast %148 : vector<1x4x4x2x64xf32> to vector<4x4x2x64xf32>
      %150 = vector.shape_cast %149 : vector<4x4x2x64xf32> to vector<32x64xf32>
      %c10 = arith.constant 10 : index
      %c0_155 = arith.constant 0 : index
      %c0_156 = arith.constant 0 : index
      %151 = vector.load %arg4[%c10, %c0_155, %c0_156] : memref<16x64x128xf32, #tpu.memory_space<vmem>>, vector<1x64x128xf32>
      %152 = vector.shape_cast %151 : vector<1x64x128xf32> to vector<64x128xf32>
      %cst_157 = arith.constant dense<0.000000e+00> : vector<32x128xf32>
      %153 = tpu.matmul %150, %152, %cst_157 {dimension_numbers = #tpu.dot_dimension_numbers<[1], [0], [0], [1], [0, 0, 1, 1], [], []>} : vector<32x64xf32>, vector<64x128xf32>, vector<32x128xf32> -> vector<32x128xf32>
      %154 = arith.addf %147, %153 : vector<32x128xf32>
      %c1_158 = arith.constant 1 : index
      %c1_159 = arith.constant 1 : index
      %c1_160 = arith.constant 1 : index
      %c0_161 = arith.constant 0 : index
      %c0_162 = arith.constant 0 : index
      %155 = vector.load %arg15[%c1_158, %c1_159, %c1_160, %c0_161, %c0_162] : memref<4x5x5x2x64xf32, #tpu.memory_space<vmem>>, vector<1x4x4x2x64xf32>
      %156 = vector.shape_cast %155 : vector<1x4x4x2x64xf32> to vector<4x4x2x64xf32>
      %157 = vector.shape_cast %156 : vector<4x4x2x64xf32> to vector<32x64xf32>
      %c11 = arith.constant 11 : index
      %c0_163 = arith.constant 0 : index
      %c0_164 = arith.constant 0 : index
      %158 = vector.load %arg4[%c11, %c0_163, %c0_164] : memref<16x64x128xf32, #tpu.memory_space<vmem>>, vector<1x64x128xf32>
      %159 = vector.shape_cast %158 : vector<1x64x128xf32> to vector<64x128xf32>
      %cst_165 = arith.constant dense<0.000000e+00> : vector<32x128xf32>
      %160 = tpu.matmul %157, %159, %cst_165 {dimension_numbers = #tpu.dot_dimension_numbers<[1], [0], [0], [1], [0, 0, 1, 1], [], []>} : vector<32x64xf32>, vector<64x128xf32>, vector<32x128xf32> -> vector<32x128xf32>
      %161 = arith.addf %154, %160 : vector<32x128xf32>
      %c2_166 = arith.constant 2 : index
      %c1_167 = arith.constant 1 : index
      %c0_168 = arith.constant 0 : index
      %c0_169 = arith.constant 0 : index
      %c0_170 = arith.constant 0 : index
      %162 = vector.load %arg15[%c2_166, %c1_167, %c0_168, %c0_169, %c0_170] : memref<4x5x5x2x64xf32, #tpu.memory_space<vmem>>, vector<1x4x4x2x64xf32>
      %163 = vector.shape_cast %162 : vector<1x4x4x2x64xf32> to vector<4x4x2x64xf32>
      %164 = vector.shape_cast %163 : vector<4x4x2x64xf32> to vector<32x64xf32>
      %c12 = arith.constant 12 : index
      %c0_171 = arith.constant 0 : index
      %c0_172 = arith.constant 0 : index
      %165 = vector.load %arg4[%c12, %c0_171, %c0_172] : memref<16x64x128xf32, #tpu.memory_space<vmem>>, vector<1x64x128xf32>
      %166 = vector.shape_cast %165 : vector<1x64x128xf32> to vector<64x128xf32>
      %cst_173 = arith.constant dense<0.000000e+00> : vector<32x128xf32>
      %167 = tpu.matmul %164, %166, %cst_173 {dimension_numbers = #tpu.dot_dimension_numbers<[1], [0], [0], [1], [0, 0, 1, 1], [], []>} : vector<32x64xf32>, vector<64x128xf32>, vector<32x128xf32> -> vector<32x128xf32>
      %168 = arith.addf %161, %167 : vector<32x128xf32>
      %c3_174 = arith.constant 3 : index
      %c1_175 = arith.constant 1 : index
      %c0_176 = arith.constant 0 : index
      %c0_177 = arith.constant 0 : index
      %c0_178 = arith.constant 0 : index
      %169 = vector.load %arg15[%c3_174, %c1_175, %c0_176, %c0_177, %c0_178] : memref<4x5x5x2x64xf32, #tpu.memory_space<vmem>>, vector<1x4x4x2x64xf32>
      %170 = vector.shape_cast %169 : vector<1x4x4x2x64xf32> to vector<4x4x2x64xf32>
      %171 = vector.shape_cast %170 : vector<4x4x2x64xf32> to vector<32x64xf32>
      %c13 = arith.constant 13 : index
      %c0_179 = arith.constant 0 : index
      %c0_180 = arith.constant 0 : index
      %172 = vector.load %arg4[%c13, %c0_179, %c0_180] : memref<16x64x128xf32, #tpu.memory_space<vmem>>, vector<1x64x128xf32>
      %173 = vector.shape_cast %172 : vector<1x64x128xf32> to vector<64x128xf32>
      %cst_181 = arith.constant dense<0.000000e+00> : vector<32x128xf32>
      %174 = tpu.matmul %171, %173, %cst_181 {dimension_numbers = #tpu.dot_dimension_numbers<[1], [0], [0], [1], [0, 0, 1, 1], [], []>} : vector<32x64xf32>, vector<64x128xf32>, vector<32x128xf32> -> vector<32x128xf32>
      %175 = arith.addf %168, %174 : vector<32x128xf32>
      %c2_182 = arith.constant 2 : index
      %c1_183 = arith.constant 1 : index
      %c1_184 = arith.constant 1 : index
      %c0_185 = arith.constant 0 : index
      %c0_186 = arith.constant 0 : index
      %176 = vector.load %arg15[%c2_182, %c1_183, %c1_184, %c0_185, %c0_186] : memref<4x5x5x2x64xf32, #tpu.memory_space<vmem>>, vector<1x4x4x2x64xf32>
      %177 = vector.shape_cast %176 : vector<1x4x4x2x64xf32> to vector<4x4x2x64xf32>
      %178 = vector.shape_cast %177 : vector<4x4x2x64xf32> to vector<32x64xf32>
      %c14 = arith.constant 14 : index
      %c0_187 = arith.constant 0 : index
      %c0_188 = arith.constant 0 : index
      %179 = vector.load %arg4[%c14, %c0_187, %c0_188] : memref<16x64x128xf32, #tpu.memory_space<vmem>>, vector<1x64x128xf32>
      %180 = vector.shape_cast %179 : vector<1x64x128xf32> to vector<64x128xf32>
      %cst_189 = arith.constant dense<0.000000e+00> : vector<32x128xf32>
      %181 = tpu.matmul %178, %180, %cst_189 {dimension_numbers = #tpu.dot_dimension_numbers<[1], [0], [0], [1], [0, 0, 1, 1], [], []>} : vector<32x64xf32>, vector<64x128xf32>, vector<32x128xf32> -> vector<32x128xf32>
      %182 = arith.addf %175, %181 : vector<32x128xf32>
      %c3_190 = arith.constant 3 : index
      %c1_191 = arith.constant 1 : index
      %c1_192 = arith.constant 1 : index
      %c0_193 = arith.constant 0 : index
      %c0_194 = arith.constant 0 : index
      %183 = vector.load %arg15[%c3_190, %c1_191, %c1_192, %c0_193, %c0_194] : memref<4x5x5x2x64xf32, #tpu.memory_space<vmem>>, vector<1x4x4x2x64xf32>
      %184 = vector.shape_cast %183 : vector<1x4x4x2x64xf32> to vector<4x4x2x64xf32>
      %185 = vector.shape_cast %184 : vector<4x4x2x64xf32> to vector<32x64xf32>
      %c15 = arith.constant 15 : index
      %c0_195 = arith.constant 0 : index
      %c0_196 = arith.constant 0 : index
      %186 = vector.load %arg4[%c15, %c0_195, %c0_196] : memref<16x64x128xf32, #tpu.memory_space<vmem>>, vector<1x64x128xf32>
      %187 = vector.shape_cast %186 : vector<1x64x128xf32> to vector<64x128xf32>
      %cst_197 = arith.constant dense<0.000000e+00> : vector<32x128xf32>
      %188 = tpu.matmul %185, %187, %cst_197 {dimension_numbers = #tpu.dot_dimension_numbers<[1], [0], [0], [1], [0, 0, 1, 1], [], []>} : vector<32x64xf32>, vector<64x128xf32>, vector<32x128xf32> -> vector<32x128xf32>
      %189 = arith.addf %182, %188 : vector<32x128xf32>
      %c0_198 = arith.constant 0 : index
      %c0_199 = arith.constant 0 : index
      %190 = vector.load %arg5[%c0_198, %c0_199] : memref<1x128xf32, #tpu.memory_space<vmem>>, vector<1x128xf32>
      %191 = vector.broadcast %190 : vector<1x128xf32> to vector<32x128xf32>
      %192 = arith.addf %189, %191 : vector<32x128xf32>
      %cst_200 = arith.constant dense<0.000000e+00> : vector<128xf32>
      %193 = vector.multi_reduction <add>, %192, %cst_200 [0] : vector<32x128xf32> to vector<128xf32>
      %194 = vector.shape_cast %193 : vector<128xf32> to vector<1x128xf32>
      %cst_201 = arith.constant 3.200000e+01 : f32
      %195 = vector.broadcast %cst_201 : f32 to vector<1x128xf32>
      %196 = arith.divf %194, %195 : vector<1x128xf32>
      %197 = vector.broadcast %196 : vector<1x128xf32> to vector<32x128xf32>
      %198 = arith.subf %192, %197 : vector<32x128xf32>
      %199 = arith.mulf %198, %198 : vector<32x128xf32>
      %cst_202 = arith.constant dense<0.000000e+00> : vector<128xf32>
      %200 = vector.multi_reduction <add>, %199, %cst_202 [0] : vector<32x128xf32> to vector<128xf32>
      %201 = vector.shape_cast %200 : vector<128xf32> to vector<1x128xf32>
      %cst_203 = arith.constant 3.200000e+01 : f32
      %202 = vector.broadcast %cst_203 : f32 to vector<1x128xf32>
      %203 = arith.divf %201, %202 : vector<1x128xf32>
      %204 = vector.broadcast %196 : vector<1x128xf32> to vector<32x128xf32>
      %205 = arith.subf %192, %204 : vector<32x128xf32>
      %cst_204 = arith.constant 9.99999974E-6 : f32
      %206 = vector.broadcast %cst_204 : f32 to vector<1x128xf32>
      %207 = arith.addf %203, %206 : vector<1x128xf32>
      %208 = math.rsqrt %207 : vector<1x128xf32>
      %209 = vector.broadcast %208 : vector<1x128xf32> to vector<32x128xf32>
      %210 = arith.mulf %205, %209 : vector<32x128xf32>
      %c0_205 = arith.constant 0 : index
      %c0_206 = arith.constant 0 : index
      %211 = vector.load %arg6[%c0_205, %c0_206] : memref<1x128xf32, #tpu.memory_space<vmem>>, vector<1x128xf32>
      %212 = vector.broadcast %211 : vector<1x128xf32> to vector<32x128xf32>
      %213 = arith.mulf %210, %212 : vector<32x128xf32>
      %c0_207 = arith.constant 0 : index
      %c0_208 = arith.constant 0 : index
      %214 = vector.load %arg7[%c0_207, %c0_208] : memref<1x128xf32, #tpu.memory_space<vmem>>, vector<1x128xf32>
      %215 = vector.broadcast %214 : vector<1x128xf32> to vector<32x128xf32>
      %216 = arith.addf %213, %215 : vector<32x128xf32>
      %cst_209 = arith.constant 0.000000e+00 : f32
      %217 = vector.broadcast %cst_209 : f32 to vector<32x128xf32>
      %218 = arith.cmpf ogt, %216, %217 : vector<32x128xf32>
      %cst_210 = arith.constant 2.000000e-01 : f32
      %219 = vector.broadcast %cst_210 : f32 to vector<32x128xf32>
      %220 = arith.mulf %219, %216 : vector<32x128xf32>
      %221 = arith.select %218, %216, %220 : vector<32x128xi1>, vector<32x128xf32>
      %222 = vector.shape_cast %221 : vector<32x128xf32> to vector<16x2x128xf32>
      %c0_211 = arith.constant 0 : index
      %c0_212 = arith.constant 0 : index
      %c0_213 = arith.constant 0 : index
      %223 = vector.load %arg16[%c0_211, %c0_212, %c0_213] : memref<16x2x128xf32, #tpu.memory_space<vmem>>, vector<16x2x128xf32>
      tpu.vector_store %arg16[%c0_211, %c0_212, %c0_213], %222 {strides = array<i32>} : memref<16x2x128xf32, #tpu.memory_space<vmem>>, vector<16x2x128xf32>,
      %cst_214 = arith.constant 0.000000e+00 : f32
      %224 = vector.broadcast %cst_214 : f32 to vector<2x1024xf32>
      %c0_215 = arith.constant 0 : index
      %c0_216 = arith.constant 0 : index
      %225 = vector.load %arg17[%c0_215, %c0_216] : memref<2x1024xf32, #tpu.memory_space<vmem>>, vector<2x1024xf32>
      tpu.vector_store %arg17[%c0_215, %c0_216], %224 {strides = array<i32>} : memref<2x1024xf32, #tpu.memory_space<vmem>>, vector<2x1024xf32>,
    } else {
    }
    %c0 = arith.constant 0 : index
    %c0_1 = arith.constant 0 : index
    %3 = vector.load %arg17[%c0, %c0_1] : memref<2x1024xf32, #tpu.memory_space<vmem>>, vector<2x1024xf32>
    %c4_i32 = arith.constant 4 : i32
    %4 = arith.muli %arg0, %c4_i32 : i32
    %c0_i32_2 = arith.constant 0 : i32
    %5 = arith.addi %4, %c0_i32_2 : i32
    %6 = arith.index_cast %5 : i32 to index
    %c0_3 = arith.constant 0 : index
    %c0_4 = arith.constant 0 : index
    %7 = vector.load %arg16[%6, %c0_3, %c0_4] : memref<16x2x128xf32, #tpu.memory_space<vmem>>, vector<1x2x128xf32>
    %8 = vector.shape_cast %7 : vector<1x2x128xf32> to vector<2x128xf32>
    %c0_5 = arith.constant 0 : index
    %c0_6 = arith.constant 0 : index
    %c0_7 = arith.constant 0 : index
    %9 = vector.load %arg8[%c0_5, %c0_6, %c0_7] : memref<4x128x1024xf32, #tpu.memory_space<vmem>>, vector<1x128x1024xf32>
    %10 = vector.shape_cast %9 : vector<1x128x1024xf32> to vector<128x1024xf32>
    %cst = arith.constant dense<0.000000e+00> : vector<2x1024xf32>
    %11 = tpu.matmul %8, %10, %cst {dimension_numbers = #tpu.dot_dimension_numbers<[1], [0], [0], [1], [0, 0, 1, 1], [], []>} : vector<2x128xf32>, vector<128x1024xf32>, vector<2x1024xf32> -> vector<2x1024xf32>
    %12 = arith.addf %3, %11 : vector<2x1024xf32>
    %c4_i32_8 = arith.constant 4 : i32
    %13 = arith.muli %arg0, %c4_i32_8 : i32
    %c1_i32 = arith.constant 1 : i32
    %14 = arith.addi %13, %c1_i32 : i32
    %15 = arith.index_cast %14 : i32 to index
    %c0_9 = arith.constant 0 : index
    %c0_10 = arith.constant 0 : index
    %16 = vector.load %arg16[%15, %c0_9, %c0_10] : memref<16x2x128xf32, #tpu.memory_space<vmem>>, vector<1x2x128xf32>
    %17 = vector.shape_cast %16 : vector<1x2x128xf32> to vector<2x128xf32>
    %c1 = arith.constant 1 : index
    %c0_11 = arith.constant 0 : index
    %c0_12 = arith.constant 0 : index
    %18 = vector.load %arg8[%c1, %c0_11, %c0_12] : memref<4x128x1024xf32, #tpu.memory_space<vmem>>, vector<1x128x1024xf32>
    %19 = vector.shape_cast %18 : vector<1x128x1024xf32> to vector<128x1024xf32>
    %cst_13 = arith.constant dense<0.000000e+00> : vector<2x1024xf32>
    %20 = tpu.matmul %17, %19, %cst_13 {dimension_numbers = #tpu.dot_dimension_numbers<[1], [0], [0], [1], [0, 0, 1, 1], [], []>} : vector<2x128xf32>, vector<128x1024xf32>, vector<2x1024xf32> -> vector<2x1024xf32>
    %21 = arith.addf %12, %20 : vector<2x1024xf32>
    %c4_i32_14 = arith.constant 4 : i32
    %22 = arith.muli %arg0, %c4_i32_14 : i32
    %c2_i32 = arith.constant 2 : i32
    %23 = arith.addi %22, %c2_i32 : i32
    %24 = arith.index_cast %23 : i32 to index
    %c0_15 = arith.constant 0 : index
    %c0_16 = arith.constant 0 : index
    %25 = vector.load %arg16[%24, %c0_15, %c0_16] : memref<16x2x128xf32, #tpu.memory_space<vmem>>, vector<1x2x128xf32>
    %26 = vector.shape_cast %25 : vector<1x2x128xf32> to vector<2x128xf32>
    %c2 = arith.constant 2 : index
    %c0_17 = arith.constant 0 : index
    %c0_18 = arith.constant 0 : index
    %27 = vector.load %arg8[%c2, %c0_17, %c0_18] : memref<4x128x1024xf32, #tpu.memory_space<vmem>>, vector<1x128x1024xf32>
    %28 = vector.shape_cast %27 : vector<1x128x1024xf32> to vector<128x1024xf32>
    %cst_19 = arith.constant dense<0.000000e+00> : vector<2x1024xf32>
    %29 = tpu.matmul %26, %28, %cst_19 {dimension_numbers = #tpu.dot_dimension_numbers<[1], [0], [0], [1], [0, 0, 1, 1], [], []>} : vector<2x128xf32>, vector<128x1024xf32>, vector<2x1024xf32> -> vector<2x1024xf32>
    %30 = arith.addf %21, %29 : vector<2x1024xf32>
    %c4_i32_20 = arith.constant 4 : i32
    %31 = arith.muli %arg0, %c4_i32_20 : i32
    %c3_i32 = arith.constant 3 : i32
    %32 = arith.addi %31, %c3_i32 : i32
    %33 = arith.index_cast %32 : i32 to index
    %c0_21 = arith.constant 0 : index
    %c0_22 = arith.constant 0 : index
    %34 = vector.load %arg16[%33, %c0_21, %c0_22] : memref<16x2x128xf32, #tpu.memory_space<vmem>>, vector<1x2x128xf32>
    %35 = vector.shape_cast %34 : vector<1x2x128xf32> to vector<2x128xf32>
    %c3 = arith.constant 3 : index
    %c0_23 = arith.constant 0 : index
    %c0_24 = arith.constant 0 : index
    %36 = vector.load %arg8[%c3, %c0_23, %c0_24] : memref<4x128x1024xf32, #tpu.memory_space<vmem>>, vector<1x128x1024xf32>
    %37 = vector.shape_cast %36 : vector<1x128x1024xf32> to vector<128x1024xf32>
    %cst_25 = arith.constant dense<0.000000e+00> : vector<2x1024xf32>
    %38 = tpu.matmul %35, %37, %cst_25 {dimension_numbers = #tpu.dot_dimension_numbers<[1], [0], [0], [1], [0, 0, 1, 1], [], []>} : vector<2x128xf32>, vector<128x1024xf32>, vector<2x1024xf32> -> vector<2x1024xf32>
    %39 = arith.addf %30, %38 : vector<2x1024xf32>
    %c0_26 = arith.constant 0 : index
    %c0_27 = arith.constant 0 : index
    %40 = vector.load %arg17[%c0_26, %c0_27] : memref<2x1024xf32, #tpu.memory_space<vmem>>, vector<2x1024xf32>
    tpu.vector_store %arg17[%c0_26, %c0_27], %39 {strides = array<i32>} : memref<2x1024xf32, #tpu.memory_space<vmem>>, vector<2x1024xf32>,
    %c3_i32_28 = arith.constant 3 : i32
    %41 = arith.cmpi eq, %arg0, %c3_i32_28 : i32
    %42 = arith.extui %41 : i1 to i32
    %c0_i32_29 = arith.constant 0 : i32
    %43 = arith.cmpi ne, %42, %c0_i32_29 : i32
    scf.if %43 {
      %c0_30 = arith.constant 0 : index
      %c0_31 = arith.constant 0 : index
      %44 = vector.load %arg17[%c0_30, %c0_31] : memref<2x1024xf32, #tpu.memory_space<vmem>>, vector<2x1024xf32>
      %c0_32 = arith.constant 0 : index
      %c0_33 = arith.constant 0 : index
      %45 = vector.load %arg9[%c0_32, %c0_33] : memref<1x1024xf32, #tpu.memory_space<vmem>>, vector<1x1024xf32>
      %46 = vector.broadcast %45 : vector<1x1024xf32> to vector<2x1024xf32>
      %47 = arith.addf %44, %46 : vector<2x1024xf32>
      %cst_34 = arith.constant dense<0.000000e+00> : vector<1024xf32>
      %48 = vector.multi_reduction <add>, %47, %cst_34 [0] : vector<2x1024xf32> to vector<1024xf32>
      %49 = vector.shape_cast %48 : vector<1024xf32> to vector<1x1024xf32>
      %cst_35 = arith.constant 2.000000e+00 : f32
      %50 = vector.broadcast %cst_35 : f32 to vector<1x1024xf32>
      %51 = arith.divf %49, %50 : vector<1x1024xf32>
      %52 = vector.broadcast %51 : vector<1x1024xf32> to vector<2x1024xf32>
      %53 = arith.subf %47, %52 : vector<2x1024xf32>
      %54 = arith.mulf %53, %53 : vector<2x1024xf32>
      %cst_36 = arith.constant dense<0.000000e+00> : vector<1024xf32>
      %55 = vector.multi_reduction <add>, %54, %cst_36 [0] : vector<2x1024xf32> to vector<1024xf32>
      %56 = vector.shape_cast %55 : vector<1024xf32> to vector<1x1024xf32>
      %cst_37 = arith.constant 2.000000e+00 : f32
      %57 = vector.broadcast %cst_37 : f32 to vector<1x1024xf32>
      %58 = arith.divf %56, %57 : vector<1x1024xf32>
      %59 = vector.broadcast %51 : vector<1x1024xf32> to vector<2x1024xf32>
      %60 = arith.subf %47, %59 : vector<2x1024xf32>
      %cst_38 = arith.constant 9.99999974E-6 : f32
      %61 = vector.broadcast %cst_38 : f32 to vector<1x1024xf32>
      %62 = arith.addf %58, %61 : vector<1x1024xf32>
      %63 = math.rsqrt %62 : vector<1x1024xf32>
      %64 = vector.broadcast %63 : vector<1x1024xf32> to vector<2x1024xf32>
      %65 = arith.mulf %60, %64 : vector<2x1024xf32>
      %c0_39 = arith.constant 0 : index
      %c0_40 = arith.constant 0 : index
      %66 = vector.load %arg10[%c0_39, %c0_40] : memref<1x1024xf32, #tpu.memory_space<vmem>>, vector<1x1024xf32>
      %67 = vector.broadcast %66 : vector<1x1024xf32> to vector<2x1024xf32>
      %68 = arith.mulf %65, %67 : vector<2x1024xf32>
      %c0_41 = arith.constant 0 : index
      %c0_42 = arith.constant 0 : index
      %69 = vector.load %arg11[%c0_41, %c0_42] : memref<1x1024xf32, #tpu.memory_space<vmem>>, vector<1x1024xf32>
      %70 = vector.broadcast %69 : vector<1x1024xf32> to vector<2x1024xf32>
      %71 = arith.addf %68, %70 : vector<2x1024xf32>
      %cst_43 = arith.constant 0.000000e+00 : f32
      %72 = vector.broadcast %cst_43 : f32 to vector<2x1024xf32>
      %73 = arith.cmpf ogt, %71, %72 : vector<2x1024xf32>
      %cst_44 = arith.constant 2.000000e-01 : f32
      %74 = vector.broadcast %cst_44 : f32 to vector<2x1024xf32>
      %75 = arith.mulf %74, %71 : vector<2x1024xf32>
      %76 = arith.select %73, %71, %75 : vector<2x1024xi1>, vector<2x1024xf32>
      %c0_45 = arith.constant 0 : index
      %c0_46 = arith.constant 0 : index
      %77 = vector.load %arg12[%c0_45, %c0_46] : memref<1024x128xf32, #tpu.memory_space<vmem>>, vector<1024x128xf32>
      %cst_47 = arith.constant dense<0.000000e+00> : vector<2x128xf32>
      %78 = tpu.matmul %76, %77, %cst_47 {dimension_numbers = #tpu.dot_dimension_numbers<[1], [0], [0], [1], [0, 0, 1, 1], [], []>} : vector<2x1024xf32>, vector<1024x128xf32>, vector<2x128xf32> -> vector<2x128xf32>
      %c0_48 = arith.constant 0 : index
      %c0_49 = arith.constant 0 : index
      %79 = vector.load %arg13[%c0_48, %c0_49] : memref<1x128xf32, #tpu.memory_space<vmem>>, vector<1x128xf32>
      %80 = vector.broadcast %79 : vector<1x128xf32> to vector<2x128xf32>
      %81 = arith.addf %78, %80 : vector<2x128xf32>
      %cst_50 = arith.constant 0.000000e+00 : f32
      %82 = vector.broadcast %cst_50 : f32 to vector<2x128xf32>
      %83 = arith.subf %82, %81 : vector<2x128xf32>
      %84 = math.exp %83 : vector<2x128xf32>
      %cst_51 = arith.constant 1.000000e+00 : f32
      %85 = vector.broadcast %cst_51 : f32 to vector<2x128xf32>
      %86 = arith.addf %85, %84 : vector<2x128xf32>
      %87 = tpu.reciprocal %86 : vector<2x128xf32> -> vector<2x128xf32>
      %c0_52 = arith.constant 0 : index
      %c0_53 = arith.constant 0 : index
      %88 = vector.load %arg14[%c0_52, %c0_53] : memref<2x128xf32, #tpu.memory_space<vmem>>, vector<2x128xf32>
      tpu.vector_store %arg14[%c0_52, %c0_53], %87 {strides = array<i32>} : memref<2x128xf32, #tpu.memory_space<vmem>>, vector<2x128xf32>,
    } else {
    }
    return
  }
  func.func @transform_0(%arg0: i32) -> (i32, i32) {
    %c0_i32 = arith.constant 0 : i32
    %c0_i32_0 = arith.constant 0 : i32
    %c0_i32_1 = arith.constant 0 : i32
    return %c0_i32, %c0_i32_0 : i32, i32
  }
  func.func @transform_1(%arg0: i32) -> (i32, i32) {
    %c0_i32 = arith.constant 0 : i32
    %c0_i32_0 = arith.constant 0 : i32
    %c0_i32_1 = arith.constant 0 : i32
    return %c0_i32, %c0_i32_0 : i32, i32
  }
  func.func @transform_2(%arg0: i32) -> (i32, i32) {
    %c0_i32 = arith.constant 0 : i32
    %c0_i32_0 = arith.constant 0 : i32
    %c0_i32_1 = arith.constant 0 : i32
    return %c0_i32, %c0_i32_0 : i32, i32
  }
  func.func @transform_3(%arg0: i32) -> (i32, i32, i32) {
    %c0_i32 = arith.constant 0 : i32
    %c0_i32_0 = arith.constant 0 : i32
    %c0_i32_1 = arith.constant 0 : i32
    %c0_i32_2 = arith.constant 0 : i32
    return %c0_i32, %c0_i32_0, %c0_i32_1 : i32, i32, i32
  }
  func.func @transform_4(%arg0: i32) -> (i32, i32) {
    %c0_i32 = arith.constant 0 : i32
    %c0_i32_0 = arith.constant 0 : i32
    %c0_i32_1 = arith.constant 0 : i32
    return %c0_i32, %c0_i32_0 : i32, i32
  }
  func.func @transform_5(%arg0: i32) -> (i32, i32) {
    %c0_i32 = arith.constant 0 : i32
    %c0_i32_0 = arith.constant 0 : i32
    %c0_i32_1 = arith.constant 0 : i32
    return %c0_i32, %c0_i32_0 : i32, i32
  }
  func.func @transform_6(%arg0: i32) -> (i32, i32) {
    %c0_i32 = arith.constant 0 : i32
    %c0_i32_0 = arith.constant 0 : i32
    %c0_i32_1 = arith.constant 0 : i32
    return %c0_i32, %c0_i32_0 : i32, i32
  }
  func.func @transform_7(%arg0: i32) -> (i32, i32, i32) {
    %c0_i32 = arith.constant 0 : i32
    %c0_i32_0 = arith.constant 0 : i32
    %c0_i32_1 = arith.constant 0 : i32
    return %arg0, %c0_i32, %c0_i32_0 : i32, i32, i32
  }
  func.func @transform_8(%arg0: i32) -> (i32, i32) {
    %c0_i32 = arith.constant 0 : i32
    %c0_i32_0 = arith.constant 0 : i32
    %c0_i32_1 = arith.constant 0 : i32
    return %c0_i32, %c0_i32_0 : i32, i32
  }
  func.func @transform_9(%arg0: i32) -> (i32, i32) {
    %c0_i32 = arith.constant 0 : i32
    %c0_i32_0 = arith.constant 0 : i32
    %c0_i32_1 = arith.constant 0 : i32
    return %c0_i32, %c0_i32_0 : i32, i32
  }
  func.func @transform_10(%arg0: i32) -> (i32, i32) {
    %c0_i32 = arith.constant 0 : i32
    %c0_i32_0 = arith.constant 0 : i32
    %c0_i32_1 = arith.constant 0 : i32
    return %c0_i32, %c0_i32_0 : i32, i32
  }
  func.func @transform_11(%arg0: i32) -> (i32, i32) {
    %c0_i32 = arith.constant 0 : i32
    %c0_i32_0 = arith.constant 0 : i32
    %c0_i32_1 = arith.constant 0 : i32
    return %c0_i32, %c0_i32_0 : i32, i32
  }
  func.func @transform_12(%arg0: i32) -> (i32, i32) {
    %c0_i32 = arith.constant 0 : i32
    %c0_i32_0 = arith.constant 0 : i32
    %c0_i32_1 = arith.constant 0 : i32
    return %c0_i32, %c0_i32_0 : i32, i32
  }
  func.func @transform_13(%arg0: i32) -> (i32, i32) {
    %c0_i32 = arith.constant 0 : i32
    %c0_i32_0 = arith.constant 0 : i32
    %c0_i32_1 = arith.constant 0 : i32
    return %c0_i32, %c0_i32_0 : i32, i32
  }
}

</mosaic_0001>

<llo_original>
// kernel: discriminator_forward.1
$region0: #{discriminator_forward.1}
  #allocation0 [shape = 'u32[]', space=smem, size = 0x4, offset = 0x4, fixed_abs, tag = 'smem constant byte address 0x4 - core index']
  #allocation1 [shape = 'u32[72,128]{1,0:T(1,128)}', space=vmem, size = 0x9000, scoped, tag = 'internal scratch']
  #allocation2 [shape = 'f32[4,5,5,2,64]{4,3,2,1,0:T(2,128)}', space=vmem, size = 0x19000, scoped, tag = 'scratch operand']
  #allocation3 [shape = 'f32[16,2,128]{2,1,0:T(2,128)}', space=vmem, size = 0x4000, scoped, tag = 'scratch operand']
  #allocation4 [shape = 'f32[2,1024]{1,0:T(2,128)}', space=vmem, size = 0x2000, scoped, tag = 'scratch operand']
  %s0 = inlined_call_operand.vmem [shape: f32[128,256], index: 0, kind: input, shape index: {}]
  %s1 = inlined_call_operand.vmem [shape: f32[256,64], index: 1, kind: input, shape index: {}]
  %s2 = inlined_call_operand.vmem [shape: f32[1,64], index: 2, kind: input, shape index: {}]
  %s3 = inlined_call_operand.vmem [shape: f32[16,64,128], index: 3, kind: input, shape index: {}]
  %s4 = inlined_call_operand.vmem [shape: f32[1,128], index: 4, kind: input, shape index: {}]
  %s5 = inlined_call_operand.vmem [shape: f32[1,128], index: 5, kind: input, shape index: {}]
  %s6 = inlined_call_operand.vmem [shape: f32[1,128], index: 6, kind: input, shape index: {}]
  %s7 = inlined_call_operand.vmem [shape: f32[16,128,1024], index: 7, kind: input, shape index: {}]
  %s8 = inlined_call_operand.vmem [shape: f32[1,1024], index: 8, kind: input, shape index: {}]
  %s9 = inlined_call_operand.vmem [shape: f32[1,1024], index: 9, kind: input, shape index: {}]
  %s10 = inlined_call_operand.vmem [shape: f32[1,1024], index: 10, kind: input, shape index: {}]
  %s11 = inlined_call_operand.vmem [shape: f32[1024,128], index: 11, kind: input, shape index: {}]
  %s12 = inlined_call_operand.vmem [shape: f32[1,128], index: 12, kind: input, shape index: {}]
  %s13 = inlined_call_operand.vmem [shape: f32[2,128], index: 13, kind: output, shape index: {}]
  %s14 = sld [smem:[#allocation0]]
  $region93: #{discriminator_forward.1} parent=0
    _
  %s16 = ssub.s32 1, %s14
  %s17 = scalar_select 0, %s16, %s14
  loop: start=0, step=1, limit=6
  $region2: #{discriminator_forward.1} parent=0 // loop_pre_header
    _
  $region3: #{discriminator_forward.1} parent=0 // loop_header
    %s19 = sphi 0, %s23
    %p20 = scmp.ge.s32.totalorder %s19, 6
    %s27 = sphi 0, %s27
    %s29 = sphi 0, %s27
    %s30 = sphi 0, %s29
    %s44 = sphi 0, %s30
    %s48 = sphi 0, %s48
    %s50 = sphi 0, %s48
    %s51 = sphi 0, %s50
    %s65 = sphi 0, %s51
    %s69 = sphi 0, %s69
    %s71 = sphi 0, %s69
    %s72 = sphi 0, %s71
    %s86 = sphi 0, %s72
    %s90 = sphi 0, %s90
    %s92 = sphi 0, %s90
    %s93 = sphi 0, %s92
    %s107 = sphi 0, %s93
    %s111 = sphi 0, %s111
    %s113 = sphi 0, %s111
    %s114 = sphi 0, %s113
    %s128 = sphi 0, %s114
    %s132 = sphi 0, %s132
    %s134 = sphi 0, %s132
    %s135 = sphi 0, %s134
    %s149 = sphi 0, %s135
    %s153 = sphi 0, %s153
    %s155 = sphi 0, %s153
    %s156 = sphi 0, %s155
    %s170 = sphi 0, %s156
    %s176 = sphi 0, %s178
    %s179 = sphi 0, %s176
    %s180 = sphi 0, %s179
    %s196 = sphi 0, %s180
    %s200 = sphi 0, %s200
    %s202 = sphi 0, %s200
    %s203 = sphi 0, %s202
    %s217 = sphi 0, %s203
    %s221 = sphi 0, %s221
    %s223 = sphi 0, %s221
    %s224 = sphi 0, %s223
    %s238 = sphi 0, %s224
    %s242 = sphi 0, %s242
    %s244 = sphi 0, %s242
    %s245 = sphi 0, %s244
    %s259 = sphi 0, %s245
    %s263 = sphi 0, %s263
    %s265 = sphi 0, %s263
    %s266 = sphi 0, %s265
    %s280 = sphi 0, %s266
    %s284 = sphi 0, %s284
    %s286 = sphi 0, %s284
    %s287 = sphi 0, %s286
    %s301 = sphi 0, %s287
    %s305 = sphi 0, %s305
    %s307 = sphi 0, %s305
    %s308 = sphi 0, %s307
    %s322 = sphi 0, %s308
  $region4: #{discriminator_forward.1} parent=0 // loop_header_branch
    %22 = sbr.rel (%p20) target = $region8
  $region5: #{discriminator_forward.1} parent=0 // loop_body
    %s24 = ssub.s32 %s19, 1
    %s25 = ssub.s32 %s19, 2
    %s26 = sadd.s32 %s19, 1
    %s28 = sadd.s32 %s27, 1
    %p31 = scmp.eq.s32.totalorder %s19, 3
    %p32 = scmp.ne.s32.totalorder %s27, %s29
    %p33 = scmp.eq.s32.totalorder %s19, 0
    %p34 = por %p32, %p33
    %p35 = scmp.ne.s32.totalorder %s27, %s29
    %p36 = scmp.eq.s32.totalorder %s24, 3
    %p37 = por %p35, %p36
    %p38 = scmp.ne.s32.totalorder %s29, %s30
    %p39 = scmp.eq.s32.totalorder %s24, 0
    %p40 = por %p38, %p39
    %p41 = scmp.ne.s32.totalorder %s29, %s30
    %p42 = scmp.eq.s32.totalorder %s25, 3
    %p43 = por %p41, %p42
    %p45 = scmp.ne.s32.totalorder %s30, %s44
    %p46 = scmp.eq.s32.totalorder %s25, 0
    %p47 = por %p45, %p46
    %s49 = sadd.s32 %s48, 1
    %p52 = scmp.eq.s32.totalorder %s19, 3
    %p53 = scmp.ne.s32.totalorder %s48, %s50
    %p54 = scmp.eq.s32.totalorder %s19, 0
    %p55 = por %p53, %p54
    %p56 = scmp.ne.s32.totalorder %s48, %s50
    %p57 = scmp.eq.s32.totalorder %s24, 3
    %p58 = por %p56, %p57
    %p59 = scmp.ne.s32.totalorder %s50, %s51
    %p60 = scmp.eq.s32.totalorder %s24, 0
    %p61 = por %p59, %p60
    %p62 = scmp.ne.s32.totalorder %s50, %s51
    %p63 = scmp.eq.s32.totalorder %s25, 3
    %p64 = por %p62, %p63
    %p66 = scmp.ne.s32.totalorder %s51, %s65
    %p67 = scmp.eq.s32.totalorder %s25, 0
    %p68 = por %p66, %p67
    %s70 = sadd.s32 %s69, 1
    %p73 = scmp.eq.s32.totalorder %s19, 3
    %p74 = scmp.ne.s32.totalorder %s69, %s71
    %p75 = scmp.eq.s32.totalorder %s19, 0
    %p76 = por %p74, %p75
    %p77 = scmp.ne.s32.totalorder %s69, %s71
    %p78 = scmp.eq.s32.totalorder %s24, 3
    %p79 = por %p77, %p78
    %p80 = scmp.ne.s32.totalorder %s71, %s72
    %p81 = scmp.eq.s32.totalorder %s24, 0
    %p82 = por %p80, %p81
    %p83 = scmp.ne.s32.totalorder %s71, %s72
    %p84 = scmp.eq.s32.totalorder %s25, 3
    %p85 = por %p83, %p84
    %p87 = scmp.ne.s32.totalorder %s72, %s86
    %p88 = scmp.eq.s32.totalorder %s25, 0
    %p89 = por %p87, %p88
    %s91 = sadd.s32 %s90, 1
    %p94 = scmp.eq.s32.totalorder %s19, 3
    %p95 = scmp.ne.s32.totalorder %s90, %s92
    %p96 = scmp.eq.s32.totalorder %s19, 0
    %p97 = por %p95, %p96
    %p98 = scmp.ne.s32.totalorder %s90, %s92
    %p99 = scmp.eq.s32.totalorder %s24, 3
    %p100 = por %p98, %p99
    %p101 = scmp.ne.s32.totalorder %s92, %s93
    %p102 = scmp.eq.s32.totalorder %s24, 0
    %p103 = por %p101, %p102
    %p104 = scmp.ne.s32.totalorder %s92, %s93
    %p105 = scmp.eq.s32.totalorder %s25, 3
    %p106 = por %p104, %p105
    %p108 = scmp.ne.s32.totalorder %s93, %s107
    %p109 = scmp.eq.s32.totalorder %s25, 0
    %p110 = por %p108, %p109
    %s112 = sadd.s32 %s111, 1
    %p115 = scmp.eq.s32.totalorder %s19, 3
    %p116 = scmp.ne.s32.totalorder %s111, %s113
    %p117 = scmp.eq.s32.totalorder %s19, 0
    %p118 = por %p116, %p117
    %p119 = scmp.ne.s32.totalorder %s111, %s113
    %p120 = scmp.eq.s32.totalorder %s24, 3
    %p121 = por %p119, %p120
    %p122 = scmp.ne.s32.totalorder %s113, %s114
    %p123 = scmp.eq.s32.totalorder %s24, 0
    %p124 = por %p122, %p123
    %p125 = scmp.ne.s32.totalorder %s113, %s114
    %p126 = scmp.eq.s32.totalorder %s25, 3
    %p127 = por %p125, %p126
    %p129 = scmp.ne.s32.totalorder %s114, %s128
    %p130 = scmp.eq.s32.totalorder %s25, 0
    %p131 = por %p129, %p130
    %s133 = sadd.s32 %s132, 1
    %p136 = scmp.eq.s32.totalorder %s19, 3
    %p137 = scmp.ne.s32.totalorder %s132, %s134
    %p138 = scmp.eq.s32.totalorder %s19, 0
    %p139 = por %p137, %p138
    %p140 = scmp.ne.s32.totalorder %s132, %s134
    %p141 = scmp.eq.s32.totalorder %s24, 3
    %p142 = por %p140, %p141
    %p143 = scmp.ne.s32.totalorder %s134, %s135
    %p144 = scmp.eq.s32.totalorder %s24, 0
    %p145 = por %p143, %p144
    %p146 = scmp.ne.s32.totalorder %s134, %s135
    %p147 = scmp.eq.s32.totalorder %s25, 3
    %p148 = por %p146, %p147
    %p150 = scmp.ne.s32.totalorder %s135, %s149
    %p151 = scmp.eq.s32.totalorder %s25, 0
    %p152 = por %p150, %p151
    %s154 = sadd.s32 %s153, 1
    %p157 = scmp.eq.s32.totalorder %s19, 3
    %p158 = scmp.ne.s32.totalorder %s153, %s155
    %p159 = scmp.eq.s32.totalorder %s19, 0
    %p160 = por %p158, %p159
    %p161 = scmp.ne.s32.totalorder %s153, %s155
    %p162 = scmp.eq.s32.totalorder %s24, 3
    %p163 = por %p161, %p162
    %p164 = scmp.ne.s32.totalorder %s155, %s156
    %p165 = scmp.eq.s32.totalorder %s24, 0
    %p166 = por %p164, %p165
    %p167 = scmp.ne.s32.totalorder %s155, %s156
    %p168 = scmp.eq.s32.totalorder %s25, 3
    %p169 = por %p167, %p168
    %p171 = scmp.ne.s32.totalorder %s156, %s170
    %p172 = scmp.eq.s32.totalorder %s25, 0
    %p173 = por %p171, %p172
    %s174 = ssub.s32 %s19, %s26
    %p175 = scmp.eq.s32.totalorder %s174, 0
    %s177 = sadd.s32 %s176, 1
    %s178 = scalar_select %p175, %s176, %s177
    %p181 = pneg %p175
    %p182 = scmp.eq.s32.totalorder %s19, 3
    %p183 = por %p181, %p182
    %p184 = scmp.ne.s32.totalorder %s176, %s179
    %p185 = scmp.eq.s32.totalorder %s19, 0
    %p186 = por %p184, %p185
    %p187 = scmp.ne.s32.totalorder %s176, %s179
    %p188 = scmp.eq.s32.totalorder %s24, 3
    %p189 = por %p187, %p188
    %p190 = scmp.ne.s32.totalorder %s179, %s180
    %p191 = scmp.eq.s32.totalorder %s24, 0
    %p192 = por %p190, %p191
    %p193 = scmp.ne.s32.totalorder %s179, %s180
    %p194 = scmp.eq.s32.totalorder %s25, 3
    %p195 = por %p193, %p194
    %p197 = scmp.ne.s32.totalorder %s180, %s196
    %p198 = scmp.eq.s32.totalorder %s25, 0
    %p199 = por %p197, %p198
    %s201 = sadd.s32 %s200, 1
    %p204 = scmp.eq.s32.totalorder %s19, 3
    %p205 = scmp.ne.s32.totalorder %s200, %s202
    %p206 = scmp.eq.s32.totalorder %s19, 0
    %p207 = por %p205, %p206
    %p208 = scmp.ne.s32.totalorder %s200, %s202
    %p209 = scmp.eq.s32.totalorder %s24, 3
    %p210 = por %p208, %p209
    %p211 = scmp.ne.s32.totalorder %s202, %s203
    %p212 = scmp.eq.s32.totalorder %s24, 0
    %p213 = por %p211, %p212
    %p214 = scmp.ne.s32.totalorder %s202, %s203
    %p215 = scmp.eq.s32.totalorder %s25, 3
    %p216 = por %p214, %p215
    %p218 = scmp.ne.s32.totalorder %s203, %s217
    %p219 = scmp.eq.s32.totalorder %s25, 0
    %p220 = por %p218, %p219
    %s222 = sadd.s32 %s221, 1
    %p225 = scmp.eq.s32.totalorder %s19, 3
    %p226 = scmp.ne.s32.totalorder %s221, %s223
    %p227 = scmp.eq.s32.totalorder %s19, 0
    %p228 = por %p226, %p227
    %p229 = scmp.ne.s32.totalorder %s221, %s223
    %p230 = scmp.eq.s32.totalorder %s24, 3
    %p231 = por %p229, %p230
    %p232 = scmp.ne.s32.totalorder %s223, %s224
    %p233 = scmp.eq.s32.totalorder %s24, 0
    %p234 = por %p232, %p233
    %p235 = scmp.ne.s32.totalorder %s223, %s224
    %p236 = scmp.eq.s32.totalorder %s25, 3
    %p237 = por %p235, %p236
    %p239 = scmp.ne.s32.totalorder %s224, %s238
    %p240 = scmp.eq.s32.totalorder %s25, 0
    %p241 = por %p239, %p240
    %s243 = sadd.s32 %s242, 1
    %p246 = scmp.eq.s32.totalorder %s19, 3
    %p247 = scmp.ne.s32.totalorder %s242, %s244
    %p248 = scmp.eq.s32.totalorder %s19, 0
    %p249 = por %p247, %p248
    %p250 = scmp.ne.s32.totalorder %s242, %s244
    %p251 = scmp.eq.s32.totalorder %s24, 3
    %p252 = por %p250, %p251
    %p253 = scmp.ne.s32.totalorder %s244, %s245
    %p254 = scmp.eq.s32.totalorder %s24, 0
    %p255 = por %p253, %p254
    %p256 = scmp.ne.s32.totalorder %s244, %s245
    %p257 = scmp.eq.s32.totalorder %s25, 3
    %p258 = por %p256, %p257
    %p260 = scmp.ne.s32.totalorder %s245, %s259
    %p261 = scmp.eq.s32.totalorder %s25, 0
    %p262 = por %p260, %p261
    %s264 = sadd.s32 %s263, 1
    %p267 = scmp.eq.s32.totalorder %s19, 3
    %p268 = scmp.ne.s32.totalorder %s263, %s265
    %p269 = scmp.eq.s32.totalorder %s19, 0
    %p270 = por %p268, %p269
    %p271 = scmp.ne.s32.totalorder %s263, %s265
    %p272 = scmp.eq.s32.totalorder %s24, 3
    %p273 = por %p271, %p272
    %p274 = scmp.ne.s32.totalorder %s265, %s266
    %p275 = scmp.eq.s32.totalorder %s24, 0
    %p276 = por %p274, %p275
    %p277 = scmp.ne.s32.totalorder %s265, %s266
    %p278 = scmp.eq.s32.totalorder %s25, 3
    %p279 = por %p277, %p278
    %p281 = scmp.ne.s32.totalorder %s266, %s280
    %p282 = scmp.eq.s32.totalorder %s25, 0
    %p283 = por %p281, %p282
    %s285 = sadd.s32 %s284, 1
    %p288 = scmp.eq.s32.totalorder %s19, 3
    %p289 = scmp.ne.s32.totalorder %s284, %s286
    %p290 = scmp.eq.s32.totalorder %s19, 0
    %p291 = por %p289, %p290
    %p292 = scmp.ne.s32.totalorder %s284, %s286
    %p293 = scmp.eq.s32.totalorder %s24, 3
    %p294 = por %p292, %p293
    %p295 = scmp.ne.s32.totalorder %s286, %s287
    %p296 = scmp.eq.s32.totalorder %s24, 0
    %p297 = por %p295, %p296
    %p298 = scmp.ne.s32.totalorder %s286, %s287
    %p299 = scmp.eq.s32.totalorder %s25, 3
    %p300 = por %p298, %p299
    %p302 = scmp.ne.s32.totalorder %s287, %s301
    %p303 = scmp.eq.s32.totalorder %s25, 0
    %p304 = por %p302, %p303
    %s306 = sadd.s32 %s305, 1
    %p309 = scmp.eq.s32.totalorder %s19, 3
    %p310 = scmp.ne.s32.totalorder %s305, %s307
    %p311 = scmp.eq.s32.totalorder %s19, 0
    %p312 = por %p310, %p311
    %p313 = scmp.ne.s32.totalorder %s305, %s307
    %p314 = scmp.eq.s32.totalorder %s24, 3
    %p315 = por %p313, %p314
    %p316 = scmp.ne.s32.totalorder %s307, %s308
    %p317 = scmp.eq.s32.totalorder %s24, 0
    %p318 = por %p316, %p317
    %p319 = scmp.ne.s32.totalorder %s307, %s308
    %p320 = scmp.eq.s32.totalorder %s25, 3
    %p321 = por %p319, %p320
    %p323 = scmp.ne.s32.totalorder %s308, %s322
    %p324 = scmp.eq.s32.totalorder %s25, 0
    %p325 = por %p323, %p324
    %p326 = scmp.le.s32.totalorder 1, %s19
    %p327 = scmp.lt.s32.totalorder %s19, 5
    %p328 = pnand %p326, %p327
    %p329 = pneg %p328
    // Predicated region
    $region9: #{discriminator_forward.1} parent=5 // pred_check
      _
    $region10: #{discriminator_forward.1} parent=5 // pred_check_branch
      %331 = sbr.rel (%p328) target = $region12
    $region11: #{discriminator_forward.1} parent=5 // pred_region
      %s332 = ssub.s32 %s19, 1
      // Predicated region
      $region13: #{discriminator_forward.1} parent=11 // pred_check
        %p333 = pneg %p40
      $region14: #{discriminator_forward.1} parent=11 // pred_check_branch
        %335 = sbr.rel (%p333) target = $region16
      $region15: #{discriminator_forward.1} parent=11 // pred_region
        _
      $region16: #{discriminator_forward.1} parent=11 // pred_fallthru
        _
      // Predicated region
      $region17: #{discriminator_forward.1} parent=11 // pred_check
        %p336 = pneg %p61
      $region18: #{discriminator_forward.1} parent=11 // pred_check_branch
        %338 = sbr.rel (%p336) target = $region20
      $region19: #{discriminator_forward.1} parent=11 // pred_region
        _
      $region20: #{discriminator_forward.1} parent=11 // pred_fallthru
        _
      // Predicated region
      $region21: #{discriminator_forward.1} parent=11 // pred_check
        %p339 = pneg %p82
      $region22: #{discriminator_forward.1} parent=11 // pred_check_branch
        %341 = sbr.rel (%p339) target = $region24
      $region23: #{discriminator_forward.1} parent=11 // pred_region
        _
      $region24: #{discriminator_forward.1} parent=11 // pred_fallthru
        _
      // Predicated region
      $region25: #{discriminator_forward.1} parent=11 // pred_check
        %p342 = pneg %p103
      $region26: #{discriminator_forward.1} parent=11 // pred_check_branch
        %344 = sbr.rel (%p342) target = $region28
      $region27: #{discriminator_forward.1} parent=11 // pred_region
        _
      $region28: #{discriminator_forward.1} parent=11 // pred_fallthru
        _
      // Predicated region
      $region29: #{discriminator_forward.1} parent=11 // pred_check
        %p345 = pneg %p124
      $region30: #{discriminator_forward.1} parent=11 // pred_check_branch
        %347 = sbr.rel (%p345) target = $region32
      $region31: #{discriminator_forward.1} parent=11 // pred_region
        _
      $region32: #{discriminator_forward.1} parent=11 // pred_fallthru
        _
      // Predicated region
      $region33: #{discriminator_forward.1} parent=11 // pred_check
        %p348 = pneg %p145
      $region34: #{discriminator_forward.1} parent=11 // pred_check_branch
        %350 = sbr.rel (%p348) target = $region36
      $region35: #{discriminator_forward.1} parent=11 // pred_region
        _
      $region36: #{discriminator_forward.1} parent=11 // pred_fallthru
        _
      // Predicated region
      $region37: #{discriminator_forward.1} parent=11 // pred_check
        %p351 = pneg %p166
      $region38: #{discriminator_forward.1} parent=11 // pred_check_branch
        %353 = sbr.rel (%p351) target = $region40
      $region39: #{discriminator_forward.1} parent=11 // pred_region
        _
      $region40: #{discriminator_forward.1} parent=11 // pred_fallthru
        _
      // Predicated region
      $region41: #{discriminator_forward.1} parent=11 // pred_check
        %p354 = pneg %p213
      $region42: #{discriminator_forward.1} parent=11 // pred_check_branch
        %356 = sbr.rel (%p354) target = $region44
      $region43: #{discriminator_forward.1} parent=11 // pred_region
        _
      $region44: #{discriminator_forward.1} parent=11 // pred_fallthru
        _
      // Predicated region
      $region45: #{discriminator_forward.1} parent=11 // pred_check
        %p357 = pneg %p234
      $region46: #{discriminator_forward.1} parent=11 // pred_check_branch
        %359 = sbr.rel (%p357) target = $region48
      $region47: #{discriminator_forward.1} parent=11 // pred_region
        _
      $region48: #{discriminator_forward.1} parent=11 // pred_fallthru
        _
      // Predicated region
      $region49: #{discriminator_forward.1} parent=11 // pred_check
        %p360 = pneg %p255
      $region50: #{discriminator_forward.1} parent=11 // pred_check_branch
        %362 = sbr.rel (%p360) target = $region52
      $region51: #{discriminator_forward.1} parent=11 // pred_region
        _
      $region52: #{discriminator_forward.1} parent=11 // pred_fallthru
        _
      // Predicated region
      $region53: #{discriminator_forward.1} parent=11 // pred_check
        %p363 = pneg %p276
      $region54: #{discriminator_forward.1} parent=11 // pred_check_branch
        %365 = sbr.rel (%p363) target = $region56
      $region55: #{discriminator_forward.1} parent=11 // pred_region
        _
      $region56: #{discriminator_forward.1} parent=11 // pred_fallthru
        _
      // Predicated region
      $region57: #{discriminator_forward.1} parent=11 // pred_check
        %p366 = pneg %p297
      $region58: #{discriminator_forward.1} parent=11 // pred_check_branch
        %368 = sbr.rel (%p366) target = $region60
      $region59: #{discriminator_forward.1} parent=11 // pred_region
        _
      $region60: #{discriminator_forward.1} parent=11 // pred_fallthru
        _
    $region12: #{discriminator_forward.1} parent=5 // pred_fallthru
      _
    %p369 = scmp.lt.s32.totalorder %s19, 4
    // Predicated region
    $region61: #{discriminator_forward.1} parent=5 // pred_check
      %p370 = pneg %p369
    $region62: #{discriminator_forward.1} parent=5 // pred_check_branch
      %372 = sbr.rel (%p370) target = $region64
    $region63: #{discriminator_forward.1} parent=5 // pred_region
      // Predicated region
      $region65: #{discriminator_forward.1} parent=63 // pred_check
        %p373 = pneg %p186
      $region66: #{discriminator_forward.1} parent=63 // pred_check_branch
        %375 = sbr.rel (%p373) target = $region68
      $region67: #{discriminator_forward.1} parent=63 // pred_region
        %s376 = smul.u32 4, %s19
        %p377 = scmp.lt.s32.totalorder %s376, 15
        %s378 = scalar_select %p377, %s376, 15
        %s379 = smul.addr %s378, 128
        %s380 = smul.addr %s379, 8
        %s381 = scalar_lea.vmem %s7, %s380
        %s382 = smul.u32 4, %s19
      $region68: #{discriminator_forward.1} parent=63 // pred_fallthru
        _
    $region64: #{discriminator_forward.1} parent=5 // pred_fallthru
      _
    %p383 = scmp.le.s32.totalorder 1, %s19
    %p384 = scmp.lt.s32.totalorder %s19, 5
    %p385 = pnand %p383, %p384
    %p386 = pneg %p385
    // Predicated region
    $region69: #{discriminator_forward.1} parent=5 // pred_check
      _
    $region70: #{discriminator_forward.1} parent=5 // pred_check_branch
      %388 = sbr.rel (%p385) target = $region72
    $region71: #{discriminator_forward.1} parent=5 // pred_region
      %s389 = ssub.s32 %s19, 1
      %p390 = pneg %p40
      %p391 = pneg %p37
      %p392 = pneg %p61
      %p393 = pneg %p58
      %p394 = pneg %p82
      %p395 = pneg %p79
      %p396 = pneg %p103
      %p397 = pneg %p100
      %p398 = pneg %p124
      %p399 = pneg %p121
      %p400 = pneg %p145
      %p401 = pneg %p142
      %p402 = pneg %p166
      %p403 = pneg %p163
      %s404 = smul.u32 4, %s24
      %p405 = scmp.lt.s32.totalorder %s404, 15
      %s406 = scalar_select %p405, %s404, 15
      %s407 = smul.addr %s406, 128
      %s408 = smul.addr %s407, 8
      %s409 = scalar_lea.vmem %s7, %s408
      %p410 = pneg %p192
      %p411 = pneg %p189
      %p412 = pneg %p213
      %p413 = pneg %p210
      %p414 = pneg %p234
      %p415 = pneg %p231
      %p416 = pneg %p255
      %p417 = pneg %p252
      %p418 = pneg %p276
      %p419 = pneg %p273
      %p420 = pneg %p297
      %p421 = pneg %p294
      %p422 = pneg %p318
      %p423 = pneg %p315
      %s424 = smul.u32 4, %s24
      %p425 = scmp.lt.s32.totalorder %s424, 15
      %s426 = scalar_select %p425, %s424, 15
      %s427 = smul.addr %s426, 128
      %s428 = smul.addr %s427, 8
      %s429 = scalar_lea.vmem %s7, %s428
      %s430 = smul.u32 4, %s24
      %p431 = scmp.eq.s32.totalorder %s24, 0
      // Predicated region
      $region73: #{discriminator_forward.1} parent=71 // pred_check
        %p432 = pneg %p431
      $region74: #{discriminator_forward.1} parent=71 // pred_check_branch
        %434 = sbr.rel (%p432) target = $region76
      $region75: #{discriminator_forward.1} parent=71 // pred_region
        %v435 = vld [vmem:[%s0] sm:$0xff]
        %v436 = vld [vmem:[%s0 + $0x8] sm:$0xff]
        %v437 = vld [vmem:[%s0 + $0x10] sm:$0xff]
        %v438 = vld [vmem:[%s0 + $0x18] sm:$0xff]
        %v439 = vld [vmem:[%s0 + $0x20] sm:$0xff]
        %v440 = vld [vmem:[%s0 + $0x28] sm:$0xff]
        %v441 = vld [vmem:[%s0 + $0x30] sm:$0xff]
        %v442 = vld [vmem:[%s0 + $0x38] sm:$0xff]
        %v443 = vld [vmem:[%s0 + $0x40] sm:$0xff]
        %v444 = vld [vmem:[%s0 + $0x48] sm:$0xff]
        %v445 = vld [vmem:[%s0 + $0x50] sm:$0xff]
        %v446 = vld [vmem:[%s0 + $0x58] sm:$0xff]
        %v447 = vld [vmem:[%s0 + $0x60] sm:$0xff]
        %v448 = vld [vmem:[%s0 + $0x68] sm:$0xff]
        %v449 = vld [vmem:[%s0 + $0x70] sm:$0xff]
        %v450 = vld [vmem:[%s0 + $0x78] sm:$0xff]
        %v451 = vld [vmem:[%s0 + $0x80] sm:$0xff]
        %v452 = vld [vmem:[%s0 + $0x88] sm:$0xff]
        %v453 = vld [vmem:[%s0 + $0x90] sm:$0xff]
        %v454 = vld [vmem:[%s0 + $0x98] sm:$0xff]
        %v455 = vld [vmem:[%s0 + $0xa0] sm:$0xff]
        %v456 = vld [vmem:[%s0 + $0xa8] sm:$0xff]
        %v457 = vld [vmem:[%s0 + $0xb0] sm:$0xff]
        %v458 = vld [vmem:[%s0 + $0xb8] sm:$0xff]
        %v459 = vld [vmem:[%s0 + $0xc0] sm:$0xff]
        %v460 = vld [vmem:[%s0 + $0xc8] sm:$0xff]
        %v461 = vld [vmem:[%s0 + $0xd0] sm:$0xff]
        %v462 = vld [vmem:[%s0 + $0xd8] sm:$0xff]
        %v463 = vld [vmem:[%s0 + $0xe0] sm:$0xff]
        %v464 = vld [vmem:[%s0 + $0xe8] sm:$0xff]
        %v465 = vld [vmem:[%s0 + $0xf0] sm:$0xff]
        %v466 = vld [vmem:[%s0 + $0xf8] sm:$0xff]
        %v467 = vld [vmem:[%s1] sm:$0xff]
        %v468 = vld [vmem:[%s1 + $0x8] sm:$0xff]
        %v469 = vld [vmem:[%s1 + $0x10] sm:$0xff]
        %v470 = vld [vmem:[%s1 + $0x18] sm:$0xff]
        %v471 = vld [vmem:[%s1 + $0x20] sm:$0xff]
        %v472 = vld [vmem:[%s1 + $0x28] sm:$0xff]
        %v473 = vld [vmem:[%s1 + $0x30] sm:$0xff]
        %v474 = vld [vmem:[%s1 + $0x38] sm:$0xff]
        %v475 = vld [vmem:[%s1 + $0x40] sm:$0xff]
        %v476 = vld [vmem:[%s1 + $0x48] sm:$0xff]
        %v477 = vld [vmem:[%s1 + $0x50] sm:$0xff]
        %v478 = vld [vmem:[%s1 + $0x58] sm:$0xff]
        %v479 = vld [vmem:[%s1 + $0x60] sm:$0xff]
        %v480 = vld [vmem:[%s1 + $0x68] sm:$0xff]
        %v481 = vld [vmem:[%s1 + $0x70] sm:$0xff]
        %v482 = vld [vmem:[%s1 + $0x78] sm:$0xff]
        %v483 = vld [vmem:[%s1 + $0x80] sm:$0xff]
        %v484 = vld [vmem:[%s1 + $0x88] sm:$0xff]
        %v485 = vld [vmem:[%s1 + $0x90] sm:$0xff]
        %v486 = vld [vmem:[%s1 + $0x98] sm:$0xff]
        %v487 = vld [vmem:[%s1 + $0xa0] sm:$0xff]
        %v488 = vld [vmem:[%s1 + $0xa8] sm:$0xff]
        %v489 = vld [vmem:[%s1 + $0xb0] sm:$0xff]
        %v490 = vld [vmem:[%s1 + $0xb8] sm:$0xff]
        %v491 = vld [vmem:[%s1 + $0xc0] sm:$0xff]
        %v492 = vld [vmem:[%s1 + $0xc8] sm:$0xff]
        %v493 = vld [vmem:[%s1 + $0xd0] sm:$0xff]
        %v494 = vld [vmem:[%s1 + $0xd8] sm:$0xff]
        %v495 = vld [vmem:[%s1 + $0xe0] sm:$0xff]
        %v496 = vld [vmem:[%s1 + $0xe8] sm:$0xff]
        %v497 = vld [vmem:[%s1 + $0xf0] sm:$0xff]
        %v498 = vld [vmem:[%s1 + $0xf8] sm:$0xff]
        %v499 = vld [vmem:[%s2] sm:$0x1]
        %v501 = vperm.slane %v499, 0
        %503 = vmatpush.msra.mxu0 %v482
        %504 = vmatpush.msra.mxu0 %v481
        %505 = vmatpush.msra.mxu0 %v480
        %506 = vmatpush.msra.mxu0 %v479
        %507 = vmatpush.msra.mxu0 %v478
        %508 = vmatpush.msra.mxu0 %v477
        %509 = vmatpush.msra.mxu0 %v476
        %510 = vmatpush.msra.mxu0 %v475
        %511 = vmatpush.msra.mxu0 %v474
        %512 = vmatpush.msra.mxu0 %v473
        %513 = vmatpush.msra.mxu0 %v472
        %514 = vmatpush.msra.mxu0 %v471
        %515 = vmatpush.msra.mxu0 %v470
        %516 = vmatpush.msra.mxu0 %v469
        %517 = vmatpush.msra.mxu0 %v468
        %518 = vmatpush.msra.mxu0 %v467
        %519 = vmatmul.f32.gmra.mxu0 %v435
        %v520 = vpop.f32.mrf.mxu0
        %v521 = vadd.f32 %v501, %v520
        %522 = vmatmul.f32.gmra.mxu0 %v437
        %v523 = vpop.f32.mrf.mxu0
        %v524 = vadd.f32 %v501, %v523
        %525 = vmatmul.f32.gmra.mxu0 %v439
        %v526 = vpop.f32.mrf.mxu0
        %v527 = vadd.f32 %v501, %v526
        %528 = vmatmul.f32.gmra.mxu0 %v441
        %v529 = vpop.f32.mrf.mxu0
        %v530 = vadd.f32 %v501, %v529
        %531 = vmatmul.f32.gmra.mxu0 %v443
        %v532 = vpop.f32.mrf.mxu0
        %v533 = vadd.f32 %v501, %v532
        %534 = vmatmul.f32.gmra.mxu0 %v445
        %v535 = vpop.f32.mrf.mxu0
        %v536 = vadd.f32 %v501, %v535
        %537 = vmatmul.f32.gmra.mxu0 %v447
        %v538 = vpop.f32.mrf.mxu0
        %v539 = vadd.f32 %v501, %v538
        %540 = vmatmul.f32.gmra.mxu0 %v449
        %v541 = vpop.f32.mrf.mxu0
        %v542 = vadd.f32 %v501, %v541
        %543 = vmatmul.f32.gmra.mxu0 %v451
        %v544 = vpop.f32.mrf.mxu0
        %v545 = vadd.f32 %v501, %v544
        %546 = vmatmul.f32.gmra.mxu0 %v453
        %v547 = vpop.f32.mrf.mxu0
        %v548 = vadd.f32 %v501, %v547
        %549 = vmatmul.f32.gmra.mxu0 %v455
        %v550 = vpop.f32.mrf.mxu0
        %v551 = vadd.f32 %v501, %v550
        %552 = vmatmul.f32.gmra.mxu0 %v457
        %v553 = vpop.f32.mrf.mxu0
        %v554 = vadd.f32 %v501, %v553
        %555 = vmatmul.f32.gmra.mxu0 %v459
        %v556 = vpop.f32.mrf.mxu0
        %v557 = vadd.f32 %v501, %v556
        %558 = vmatmul.f32.gmra.mxu0 %v461
        %v559 = vpop.f32.mrf.mxu0
        %v560 = vadd.f32 %v501, %v559
        %561 = vmatmul.f32.gmra.mxu0 %v463
        %v562 = vpop.f32.mrf.mxu0
        %v563 = vadd.f32 %v501, %v562
        %564 = vmatmul.f32.gmra.mxu0 %v465
        %v565 = vpop.f32.mrf.mxu0
        %v566 = vadd.f32 %v501, %v565
        %567 = vdwg.mxu0
        %568 = vmatpush.msra.mxu0 %v498
        %569 = vmatpush.msra.mxu0 %v497
        %570 = vmatpush.msra.mxu0 %v496
        %571 = vmatpush.msra.mxu0 %v495
        %572 = vmatpush.msra.mxu0 %v494
        %573 = vmatpush.msra.mxu0 %v493
        %574 = vmatpush.msra.mxu0 %v492
        %575 = vmatpush.msra.mxu0 %v491
        %576 = vmatpush.msra.mxu0 %v490
        %577 = vmatpush.msra.mxu0 %v489
        %578 = vmatpush.msra.mxu0 %v488
        %579 = vmatpush.msra.mxu0 %v487
        %580 = vmatpush.msra.mxu0 %v486
        %581 = vmatpush.msra.mxu0 %v485
        %582 = vmatpush.msra.mxu0 %v484
        %583 = vmatpush.msra.mxu0 %v483
        %584 = vmatmul.f32.gmra.mxu0 %v436
        %v585 = vpop.f32.mrf.mxu0
        %v586 = vadd.f32 %v521, %v585
        %587 = vmatmul.f32.gmra.mxu0 %v438
        %v588 = vpop.f32.mrf.mxu0
        %v589 = vadd.f32 %v524, %v588
        %590 = vmatmul.f32.gmra.mxu0 %v440
        %v591 = vpop.f32.mrf.mxu0
        %v592 = vadd.f32 %v527, %v591
        %593 = vmatmul.f32.gmra.mxu0 %v442
        %v594 = vpop.f32.mrf.mxu0
        %v595 = vadd.f32 %v530, %v594
        %596 = vmatmul.f32.gmra.mxu0 %v444
        %v597 = vpop.f32.mrf.mxu0
        %v598 = vadd.f32 %v533, %v597
        %599 = vmatmul.f32.gmra.mxu0 %v446
        %v600 = vpop.f32.mrf.mxu0
        %v601 = vadd.f32 %v536, %v600
        %602 = vmatmul.f32.gmra.mxu0 %v448
        %v603 = vpop.f32.mrf.mxu0
        %v604 = vadd.f32 %v539, %v603
        %605 = vmatmul.f32.gmra.mxu0 %v450
        %v606 = vpop.f32.mrf.mxu0
        %v607 = vadd.f32 %v542, %v606
        %608 = vmatmul.f32.gmra.mxu0 %v452
        %v609 = vpop.f32.mrf.mxu0
        %v610 = vadd.f32 %v545, %v609
        %611 = vmatmul.f32.gmra.mxu0 %v454
        %v612 = vpop.f32.mrf.mxu0
        %v613 = vadd.f32 %v548, %v612
        %614 = vmatmul.f32.gmra.mxu0 %v456
        %v615 = vpop.f32.mrf.mxu0
        %v616 = vadd.f32 %v551, %v615
        %617 = vmatmul.f32.gmra.mxu0 %v458
        %v618 = vpop.f32.mrf.mxu0
        %v619 = vadd.f32 %v554, %v618
        %620 = vmatmul.f32.gmra.mxu0 %v460
        %v621 = vpop.f32.mrf.mxu0
        %v622 = vadd.f32 %v557, %v621
        %623 = vmatmul.f32.gmra.mxu0 %v462
        %v624 = vpop.f32.mrf.mxu0
        %v625 = vadd.f32 %v560, %v624
        %626 = vmatmul.f32.gmra.mxu0 %v464
        %v627 = vpop.f32.mrf.mxu0
        %v628 = vadd.f32 %v563, %v627
        %629 = vmatmul.f32.gmra.mxu0 %v466
        %v630 = vpop.f32.mrf.mxu0
        %v631 = vadd.f32 %v566, %v630
        %632 = vdwg.mxu0
        %vm633 = vcmp.gt.f32.partialorder %v586, 0.0
        %vm634 = vcmp.gt.f32.partialorder %v589, 0.0
        %vm635 = vcmp.gt.f32.partialorder %v592, 0.0
        %vm636 = vcmp.gt.f32.partialorder %v595, 0.0
        %vm637 = vcmp.gt.f32.partialorder %v598, 0.0
        %vm638 = vcmp.gt.f32.partialorder %v601, 0.0
        %vm639 = vcmp.gt.f32.partialorder %v604, 0.0
        %vm640 = vcmp.gt.f32.partialorder %v607, 0.0
        %vm641 = vcmp.gt.f32.partialorder %v610, 0.0
        %vm642 = vcmp.gt.f32.partialorder %v613, 0.0
        %vm643 = vcmp.gt.f32.partialorder %v616, 0.0
        %vm644 = vcmp.gt.f32.partialorder %v619, 0.0
        %vm645 = vcmp.gt.f32.partialorder %v622, 0.0
        %vm646 = vcmp.gt.f32.partialorder %v625, 0.0
        %vm647 = vcmp.gt.f32.partialorder %v628, 0.0
        %vm648 = vcmp.gt.f32.partialorder %v631, 0.0
        %v649 = vmul.f32 %v586, 0.2
        %v650 = vmul.f32 %v589, 0.2
        %v651 = vmul.f32 %v592, 0.2
        %v652 = vmul.f32 %v595, 0.2
        %v653 = vmul.f32 %v598, 0.2
        %v654 = vmul.f32 %v601, 0.2
        %v655 = vmul.f32 %v604, 0.2
        %v656 = vmul.f32 %v607, 0.2
        %v657 = vmul.f32 %v610, 0.2
        %v658 = vmul.f32 %v613, 0.2
        %v659 = vmul.f32 %v616, 0.2
        %v660 = vmul.f32 %v619, 0.2
        %v661 = vmul.f32 %v622, 0.2
        %v662 = vmul.f32 %v625, 0.2
        %v663 = vmul.f32 %v628, 0.2
        %v664 = vmul.f32 %v631, 0.2
        %v665 = vsel %vm633, %v586, %v649
        %v666 = vsel %vm634, %v589, %v650
        %v667 = vsel %vm635, %v592, %v651
        %v668 = vsel %vm636, %v595, %v652
        %v669 = vsel %vm637, %v598, %v653
        %v670 = vsel %vm638, %v601, %v654
        %v671 = vsel %vm639, %v604, %v655
        %v672 = vsel %vm640, %v607, %v656
        %v673 = vsel %vm641, %v610, %v657
        %v674 = vsel %vm642, %v613, %v658
        %v675 = vsel %vm643, %v616, %v659
        %v676 = vsel %vm644, %v619, %v660
        %v677 = vsel %vm645, %v622, %v661
        %v678 = vsel %vm646, %v625, %v662
        %v679 = vsel %vm647, %v628, %v663
        %v680 = vsel %vm648, %v631, %v664
        %vm681 = vcmask 517120
        %682 = vst.msk [vmem:[#allocation2] sm:$0x3] %vm681, 0.0
        %683 = vst.msk [vmem:[#allocation2 + $0x2] sm:$0x3] %vm681, 0.0
        %684 = vst.msk [vmem:[#allocation2 + $0x4] sm:$0x3] %vm681, 0.0
        %685 = vst.msk [vmem:[#allocation2 + $0x6] sm:$0x3] %vm681, 0.0
        %686 = vst.msk [vmem:[#allocation2 + $0x8] sm:$0x3] %vm681, 0.0
        %687 = vst.msk [vmem:[#allocation2 + $0xa] sm:$0x3] %vm681, 0.0
        %688 = vst.msk [vmem:[#allocation2 + $0xc] sm:$0x3] %vm681, 0.0
        %689 = vst.msk [vmem:[#allocation2 + $0xe] sm:$0x3] %vm681, 0.0
        %690 = vst.msk [vmem:[#allocation2 + $0x10] sm:$0x3] %vm681, 0.0
        %691 = vst.msk [vmem:[#allocation2 + $0x12] sm:$0x3] %vm681, 0.0
        %692 = vst.msk [vmem:[#allocation2 + $0x14] sm:$0x3] %vm681, 0.0
        %693 = vst.msk [vmem:[#allocation2 + $0x16] sm:$0x3] %vm681, 0.0
        %694 = vst.msk [vmem:[#allocation2 + $0x18] sm:$0x3] %vm681, 0.0
        %695 = vst.msk [vmem:[#allocation2 + $0x1a] sm:$0x3] %vm681, 0.0
        %696 = vst.msk [vmem:[#allocation2 + $0x1c] sm:$0x3] %vm681, 0.0
        %697 = vst.msk [vmem:[#allocation2 + $0x1e] sm:$0x3] %vm681, 0.0
        %698 = vst.msk [vmem:[#allocation2 + $0x20] sm:$0x3] %vm681, 0.0
        %699 = vst.msk [vmem:[#allocation2 + $0x22] sm:$0x3] %vm681, 0.0
        %700 = vst.msk [vmem:[#allocation2 + $0x24] sm:$0x3] %vm681, 0.0
        %701 = vst.msk [vmem:[#allocation2 + $0x26] sm:$0x3] %vm681, 0.0
        %702 = vst.msk [vmem:[#allocation2 + $0x28] sm:$0x3] %vm681, 0.0
        %703 = vst.msk [vmem:[#allocation2 + $0x2a] sm:$0x3] %vm681, 0.0
        %704 = vst.msk [vmem:[#allocation2 + $0x2c] sm:$0x3] %vm681, 0.0
        %705 = vst.msk [vmem:[#allocation2 + $0x2e] sm:$0x3] %vm681, 0.0
        %706 = vst.msk [vmem:[#allocation2 + $0x30] sm:$0x3] %vm681, 0.0
        %707 = vst.msk [vmem:[#allocation2 + $0x32] sm:$0x3] %vm681, 0.0
        %708 = vst.msk [vmem:[#allocation2 + $0x34] sm:$0x3] %vm681, 0.0
        %709 = vst.msk [vmem:[#allocation2 + $0x36] sm:$0x3] %vm681, 0.0
        %710 = vst.msk [vmem:[#allocation2 + $0x38] sm:$0x3] %vm681, 0.0
        %711 = vst.msk [vmem:[#allocation2 + $0x3a] sm:$0x3] %vm681, 0.0
        %712 = vst.msk [vmem:[#allocation2 + $0x3c] sm:$0x3] %vm681, 0.0
        %713 = vst.msk [vmem:[#allocation2 + $0x3e] sm:$0x3] %vm681, 0.0
        %714 = vst.msk [vmem:[#allocation2 + $0x40] sm:$0x3] %vm681, 0.0
        %715 = vst.msk [vmem:[#allocation2 + $0x42] sm:$0x3] %vm681, 0.0
        %716 = vst.msk [vmem:[#allocation2 + $0x44] sm:$0x3] %vm681, 0.0
        %717 = vst.msk [vmem:[#allocation2 + $0x46] sm:$0x3] %vm681, 0.0
        %718 = vst.msk [vmem:[#allocation2 + $0x48] sm:$0x3] %vm681, 0.0
        %719 = vst.msk [vmem:[#allocation2 + $0x4a] sm:$0x3] %vm681, 0.0
        %720 = vst.msk [vmem:[#allocation2 + $0x4c] sm:$0x3] %vm681, 0.0
        %721 = vst.msk [vmem:[#allocation2 + $0x4e] sm:$0x3] %vm681, 0.0
        %722 = vst.msk [vmem:[#allocation2 + $0x50] sm:$0x3] %vm681, 0.0
        %723 = vst.msk [vmem:[#allocation2 + $0x52] sm:$0x3] %vm681, 0.0
        %724 = vst.msk [vmem:[#allocation2 + $0x54] sm:$0x3] %vm681, 0.0
        %725 = vst.msk [vmem:[#allocation2 + $0x56] sm:$0x3] %vm681, 0.0
        %726 = vst.msk [vmem:[#allocation2 + $0x58] sm:$0x3] %vm681, 0.0
        %727 = vst.msk [vmem:[#allocation2 + $0x5a] sm:$0x3] %vm681, 0.0
        %728 = vst.msk [vmem:[#allocation2 + $0x5c] sm:$0x3] %vm681, 0.0
        %729 = vst.msk [vmem:[#allocation2 + $0x5e] sm:$0x3] %vm681, 0.0
        %730 = vst.msk [vmem:[#allocation2 + $0x60] sm:$0x3] %vm681, 0.0
        %731 = vst.msk [vmem:[#allocation2 + $0x62] sm:$0x3] %vm681, 0.0
        %732 = vst.msk [vmem:[#allocation2 + $0x64] sm:$0x3] %vm681, 0.0
        %733 = vst.msk [vmem:[#allocation2 + $0x66] sm:$0x3] %vm681, 0.0
        %734 = vst.msk [vmem:[#allocation2 + $0x68] sm:$0x3] %vm681, 0.0
        %735 = vst.msk [vmem:[#allocation2 + $0x6a] sm:$0x3] %vm681, 0.0
        %736 = vst.msk [vmem:[#allocation2 + $0x6c] sm:$0x3] %vm681, 0.0
        %737 = vst.msk [vmem:[#allocation2 + $0x6e] sm:$0x3] %vm681, 0.0
        %738 = vst.msk [vmem:[#allocation2 + $0x70] sm:$0x3] %vm681, 0.0
        %739 = vst.msk [vmem:[#allocation2 + $0x72] sm:$0x3] %vm681, 0.0
        %740 = vst.msk [vmem:[#allocation2 + $0x74] sm:$0x3] %vm681, 0.0
        %741 = vst.msk [vmem:[#allocation2 + $0x76] sm:$0x3] %vm681, 0.0
        %742 = vst.msk [vmem:[#allocation2 + $0x78] sm:$0x3] %vm681, 0.0
        %743 = vst.msk [vmem:[#allocation2 + $0x7a] sm:$0x3] %vm681, 0.0
        %744 = vst.msk [vmem:[#allocation2 + $0x7c] sm:$0x3] %vm681, 0.0
        %745 = vst.msk [vmem:[#allocation2 + $0x7e] sm:$0x3] %vm681, 0.0
        %746 = vst.msk [vmem:[#allocation2 + $0x80] sm:$0x3] %vm681, 0.0
        %747 = vst.msk [vmem:[#allocation2 + $0x82] sm:$0x3] %vm681, 0.0
        %748 = vst.msk [vmem:[#allocation2 + $0x84] sm:$0x3] %vm681, 0.0
        %749 = vst.msk [vmem:[#allocation2 + $0x86] sm:$0x3] %vm681, 0.0
        %750 = vst.msk [vmem:[#allocation2 + $0x88] sm:$0x3] %vm681, 0.0
        %751 = vst.msk [vmem:[#allocation2 + $0x8a] sm:$0x3] %vm681, 0.0
        %752 = vst.msk [vmem:[#allocation2 + $0x8c] sm:$0x3] %vm681, 0.0
        %753 = vst.msk [vmem:[#allocation2 + $0x8e] sm:$0x3] %vm681, 0.0
        %754 = vst.msk [vmem:[#allocation2 + $0x90] sm:$0x3] %vm681, 0.0
        %755 = vst.msk [vmem:[#allocation2 + $0x92] sm:$0x3] %vm681, 0.0
        %756 = vst.msk [vmem:[#allocation2 + $0x94] sm:$0x3] %vm681, 0.0
        %757 = vst.msk [vmem:[#allocation2 + $0x96] sm:$0x3] %vm681, 0.0
        %758 = vst.msk [vmem:[#allocation2 + $0x98] sm:$0x3] %vm681, 0.0
        %759 = vst.msk [vmem:[#allocation2 + $0x9a] sm:$0x3] %vm681, 0.0
        %760 = vst.msk [vmem:[#allocation2 + $0x9c] sm:$0x3] %vm681, 0.0
        %761 = vst.msk [vmem:[#allocation2 + $0x9e] sm:$0x3] %vm681, 0.0
        %762 = vst.msk [vmem:[#allocation2 + $0xa0] sm:$0x3] %vm681, 0.0
        %763 = vst.msk [vmem:[#allocation2 + $0xa2] sm:$0x3] %vm681, 0.0
        %764 = vst.msk [vmem:[#allocation2 + $0xa4] sm:$0x3] %vm681, 0.0
        %765 = vst.msk [vmem:[#allocation2 + $0xa6] sm:$0x3] %vm681, 0.0
        %766 = vst.msk [vmem:[#allocation2 + $0xa8] sm:$0x3] %vm681, 0.0
        %767 = vst.msk [vmem:[#allocation2 + $0xaa] sm:$0x3] %vm681, 0.0
        %768 = vst.msk [vmem:[#allocation2 + $0xac] sm:$0x3] %vm681, 0.0
        %769 = vst.msk [vmem:[#allocation2 + $0xae] sm:$0x3] %vm681, 0.0
        %770 = vst.msk [vmem:[#allocation2 + $0xb0] sm:$0x3] %vm681, 0.0
        %771 = vst.msk [vmem:[#allocation2 + $0xb2] sm:$0x3] %vm681, 0.0
        %772 = vst.msk [vmem:[#allocation2 + $0xb4] sm:$0x3] %vm681, 0.0
        %773 = vst.msk [vmem:[#allocation2 + $0xb6] sm:$0x3] %vm681, 0.0
        %774 = vst.msk [vmem:[#allocation2 + $0xb8] sm:$0x3] %vm681, 0.0
        %775 = vst.msk [vmem:[#allocation2 + $0xba] sm:$0x3] %vm681, 0.0
        %776 = vst.msk [vmem:[#allocation2 + $0xbc] sm:$0x3] %vm681, 0.0
        %777 = vst.msk [vmem:[#allocation2 + $0xbe] sm:$0x3] %vm681, 0.0
        %778 = vst.msk [vmem:[#allocation2 + $0xc0] sm:$0x3] %vm681, 0.0
        %779 = vst.msk [vmem:[#allocation2 + $0xc2] sm:$0x3] %vm681, 0.0
        %780 = vst.msk [vmem:[#allocation2 + $0xc4] sm:$0x3] %vm681, 0.0
        %781 = vst.msk [vmem:[#allocation2 + $0xc6] sm:$0x3] %vm681, 0.0
        %v786 = vrot.slane %v665, 2
        %v787 = vrot.slane %v665, 4
        %v788 = vrot.slane %v665, 6
        %v789 = vrot.slane %v666, 2
        %v790 = vrot.slane %v666, 4
        %v791 = vrot.slane %v666, 6
        %v792 = vrot.slane %v667, 2
        %v793 = vrot.slane %v667, 4
        %v794 = vrot.slane %v667, 6
        %v795 = vrot.slane %v668, 2
        %v796 = vrot.slane %v668, 4
        %v797 = vrot.slane %v668, 6
        %s810 = scalar_lea.vmem [#allocation2], 150
        %811 = vst.msk [vmem:[%s810] sm:$0x3] %vm681, %v665
        %812 = vst.msk [vmem:[%s810 + $0x2] sm:$0x3] %vm681, %v786
        %813 = vst.msk [vmem:[%s810 + $0x4] sm:$0x3] %vm681, %v787
        %814 = vst.msk [vmem:[%s810 + $0x6] sm:$0x3] %vm681, %v788
        %815 = vst.msk [vmem:[%s810 + $0xa] sm:$0x3] %vm681, %v666
        %816 = vst.msk [vmem:[%s810 + $0xc] sm:$0x3] %vm681, %v789
        %817 = vst.msk [vmem:[%s810 + $0xe] sm:$0x3] %vm681, %v790
        %818 = vst.msk [vmem:[%s810 + $0x10] sm:$0x3] %vm681, %v791
        %819 = vst.msk [vmem:[%s810 + $0x14] sm:$0x3] %vm681, %v667
        %820 = vst.msk [vmem:[%s810 + $0x16] sm:$0x3] %vm681, %v792
        %821 = vst.msk [vmem:[%s810 + $0x18] sm:$0x3] %vm681, %v793
        %822 = vst.msk [vmem:[%s810 + $0x1a] sm:$0x3] %vm681, %v794
        %823 = vst.msk [vmem:[%s810 + $0x1e] sm:$0x3] %vm681, %v668
        %824 = vst.msk [vmem:[%s810 + $0x20] sm:$0x3] %vm681, %v795
        %825 = vst.msk [vmem:[%s810 + $0x22] sm:$0x3] %vm681, %v796
        %826 = vst.msk [vmem:[%s810 + $0x24] sm:$0x3] %vm681, %v797
        %v831 = vrot.slane %v669, 2
        %v832 = vrot.slane %v669, 4
        %v833 = vrot.slane %v669, 6
        %v834 = vrot.slane %v670, 2
        %v835 = vrot.slane %v670, 4
        %v836 = vrot.slane %v670, 6
        %v837 = vrot.slane %v671, 2
        %v838 = vrot.slane %v671, 4
        %v839 = vrot.slane %v671, 6
        %v840 = vrot.slane %v672, 2
        %v841 = vrot.slane %v672, 4
        %v842 = vrot.slane %v672, 6
        %s855 = scalar_lea.vmem [#allocation2], 102
        %856 = vst.msk [vmem:[%s855] sm:$0x3] %vm681, %v669
        %857 = vst.msk [vmem:[%s855 + $0x2] sm:$0x3] %vm681, %v831
        %858 = vst.msk [vmem:[%s855 + $0x4] sm:$0x3] %vm681, %v832
        %859 = vst.msk [vmem:[%s855 + $0x6] sm:$0x3] %vm681, %v833
        %860 = vst.msk [vmem:[%s855 + $0xa] sm:$0x3] %vm681, %v670
        %861 = vst.msk [vmem:[%s855 + $0xc] sm:$0x3] %vm681, %v834
        %862 = vst.msk [vmem:[%s855 + $0xe] sm:$0x3] %vm681, %v835
        %863 = vst.msk [vmem:[%s855 + $0x10] sm:$0x3] %vm681, %v836
        %864 = vst.msk [vmem:[%s855 + $0x14] sm:$0x3] %vm681, %v671
        %865 = vst.msk [vmem:[%s855 + $0x16] sm:$0x3] %vm681, %v837
        %866 = vst.msk [vmem:[%s855 + $0x18] sm:$0x3] %vm681, %v838
        %867 = vst.msk [vmem:[%s855 + $0x1a] sm:$0x3] %vm681, %v839
        %868 = vst.msk [vmem:[%s855 + $0x1e] sm:$0x3] %vm681, %v672
        %869 = vst.msk [vmem:[%s855 + $0x20] sm:$0x3] %vm681, %v840
        %870 = vst.msk [vmem:[%s855 + $0x22] sm:$0x3] %vm681, %v841
        %871 = vst.msk [vmem:[%s855 + $0x24] sm:$0x3] %vm681, %v842
        %v876 = vrot.slane %v673, 2
        %v877 = vrot.slane %v673, 4
        %v878 = vrot.slane %v673, 6
        %v879 = vrot.slane %v674, 2
        %v880 = vrot.slane %v674, 4
        %v881 = vrot.slane %v674, 6
        %v882 = vrot.slane %v675, 2
        %v883 = vrot.slane %v675, 4
        %v884 = vrot.slane %v675, 6
        %v885 = vrot.slane %v676, 2
        %v886 = vrot.slane %v676, 4
        %v887 = vrot.slane %v676, 6
        %s900 = scalar_lea.vmem [#allocation2], 60
        %901 = vst.msk [vmem:[%s900] sm:$0x3] %vm681, %v673
        %902 = vst.msk [vmem:[%s900 + $0x2] sm:$0x3] %vm681, %v876
        %903 = vst.msk [vmem:[%s900 + $0x4] sm:$0x3] %vm681, %v877
        %904 = vst.msk [vmem:[%s900 + $0x6] sm:$0x3] %vm681, %v878
        %905 = vst.msk [vmem:[%s900 + $0xa] sm:$0x3] %vm681, %v674
        %906 = vst.msk [vmem:[%s900 + $0xc] sm:$0x3] %vm681, %v879
        %907 = vst.msk [vmem:[%s900 + $0xe] sm:$0x3] %vm681, %v880
        %908 = vst.msk [vmem:[%s900 + $0x10] sm:$0x3] %vm681, %v881
        %909 = vst.msk [vmem:[%s900 + $0x14] sm:$0x3] %vm681, %v675
        %910 = vst.msk [vmem:[%s900 + $0x16] sm:$0x3] %vm681, %v882
        %911 = vst.msk [vmem:[%s900 + $0x18] sm:$0x3] %vm681, %v883
        %912 = vst.msk [vmem:[%s900 + $0x1a] sm:$0x3] %vm681, %v884
        %913 = vst.msk [vmem:[%s900 + $0x1e] sm:$0x3] %vm681, %v676
        %914 = vst.msk [vmem:[%s900 + $0x20] sm:$0x3] %vm681, %v885
        %915 = vst.msk [vmem:[%s900 + $0x22] sm:$0x3] %vm681, %v886
        %916 = vst.msk [vmem:[%s900 + $0x24] sm:$0x3] %vm681, %v887
        %v921 = vrot.slane %v677, 2
        %v922 = vrot.slane %v677, 4
        %v923 = vrot.slane %v677, 6
        %v924 = vrot.slane %v678, 2
        %v925 = vrot.slane %v678, 4
        %v926 = vrot.slane %v678, 6
        %v927 = vrot.slane %v679, 2
        %v928 = vrot.slane %v679, 4
        %v929 = vrot.slane %v679, 6
        %v930 = vrot.slane %v680, 2
        %v931 = vrot.slane %v680, 4
        %v932 = vrot.slane %v680, 6
        %s945 = scalar_lea.vmem [#allocation2], 12
        %946 = vst.msk [vmem:[%s945] sm:$0x3] %vm681, %v677
        %947 = vst.msk [vmem:[%s945 + $0x2] sm:$0x3] %vm681, %v921
        %948 = vst.msk [vmem:[%s945 + $0x4] sm:$0x3] %vm681, %v922
        %949 = vst.msk [vmem:[%s945 + $0x6] sm:$0x3] %vm681, %v923
        %950 = vst.msk [vmem:[%s945 + $0xa] sm:$0x3] %vm681, %v678
        %951 = vst.msk [vmem:[%s945 + $0xc] sm:$0x3] %vm681, %v924
        %952 = vst.msk [vmem:[%s945 + $0xe] sm:$0x3] %vm681, %v925
        %953 = vst.msk [vmem:[%s945 + $0x10] sm:$0x3] %vm681, %v926
        %954 = vst.msk [vmem:[%s945 + $0x14] sm:$0x3] %vm681, %v679
        %955 = vst.msk [vmem:[%s945 + $0x16] sm:$0x3] %vm681, %v927
        %956 = vst.msk [vmem:[%s945 + $0x18] sm:$0x3] %vm681, %v928
        %957 = vst.msk [vmem:[%s945 + $0x1a] sm:$0x3] %vm681, %v929
        %958 = vst.msk [vmem:[%s945 + $0x1e] sm:$0x3] %vm681, %v680
        %959 = vst.msk [vmem:[%s945 + $0x20] sm:$0x3] %vm681, %v930
        %960 = vst.msk [vmem:[%s945 + $0x22] sm:$0x3] %vm681, %v931
        %961 = vst.msk [vmem:[%s945 + $0x24] sm:$0x3] %vm681, %v932
        %v962 = vld [vmem:[#allocation2] sm:$0x3]
        %v963 = vld [vmem:[#allocation2 + $0x2] sm:$0x3]
        %v964 = vld [vmem:[#allocation2 + $0x4] sm:$0x3]
        %v965 = vld [vmem:[#allocation2 + $0x6] sm:$0x3]
        %v966 = vld [vmem:[#allocation2 + $0xa] sm:$0x3]
        %v967 = vld [vmem:[#allocation2 + $0xc] sm:$0x3]
        %v968 = vld [vmem:[#allocation2 + $0xe] sm:$0x3]
        %v969 = vld [vmem:[#allocation2 + $0x10] sm:$0x3]
        %v970 = vld [vmem:[#allocation2 + $0x14] sm:$0x3]
        %v971 = vld [vmem:[#allocation2 + $0x16] sm:$0x3]
        %v972 = vld [vmem:[#allocation2 + $0x18] sm:$0x3]
        %v973 = vld [vmem:[#allocation2 + $0x1a] sm:$0x3]
        %v974 = vld [vmem:[#allocation2 + $0x1e] sm:$0x3]
        %v975 = vld [vmem:[#allocation2 + $0x20] sm:$0x3]
        %v976 = vld [vmem:[#allocation2 + $0x22] sm:$0x3]
        %v977 = vld [vmem:[#allocation2 + $0x24] sm:$0x3]
        %v978 = vld [vmem:[%s3] sm:$0xff]
        %v979 = vld [vmem:[%s3 + $0x8] sm:$0xff]
        %v980 = vld [vmem:[%s3 + $0x10] sm:$0xff]
        %v981 = vld [vmem:[%s3 + $0x18] sm:$0xff]
        %v982 = vld [vmem:[%s3 + $0x20] sm:$0xff]
        %v983 = vld [vmem:[%s3 + $0x28] sm:$0xff]
        %v984 = vld [vmem:[%s3 + $0x30] sm:$0xff]
        %v985 = vld [vmem:[%s3 + $0x38] sm:$0xff]
        %s986 = scalar_lea.vmem [#allocation2], 50
        %v987 = vld [vmem:[%s986] sm:$0x3]
        %v988 = vld [vmem:[%s986 + $0x2] sm:$0x3]
        %v989 = vld [vmem:[%s986 + $0x4] sm:$0x3]
        %v990 = vld [vmem:[%s986 + $0x6] sm:$0x3]
        %v991 = vld [vmem:[%s986 + $0xa] sm:$0x3]
        %v992 = vld [vmem:[%s986 + $0xc] sm:$0x3]
        %v993 = vld [vmem:[%s986 + $0xe] sm:$0x3]
        %v994 = vld [vmem:[%s986 + $0x10] sm:$0x3]
        %v995 = vld [vmem:[%s986 + $0x14] sm:$0x3]
        %v996 = vld [vmem:[%s986 + $0x16] sm:$0x3]
        %v997 = vld [vmem:[%s986 + $0x18] sm:$0x3]
        %v998 = vld [vmem:[%s986 + $0x1a] sm:$0x3]
        %v999 = vld [vmem:[%s986 + $0x1e] sm:$0x3]
        %v1000 = vld [vmem:[%s986 + $0x20] sm:$0x3]
        %v1001 = vld [vmem:[%s986 + $0x22] sm:$0x3]
        %v1002 = vld [vmem:[%s986 + $0x24] sm:$0x3]
        %s1003 = scalar_lea.vmem %s3, 64
        %v1004 = vld [vmem:[%s1003] sm:$0xff]
        %v1005 = vld [vmem:[%s1003 + $0x8] sm:$0xff]
        %v1006 = vld [vmem:[%s1003 + $0x10] sm:$0xff]
        %v1007 = vld [vmem:[%s1003 + $0x18] sm:$0xff]
        %v1008 = vld [vmem:[%s1003 + $0x20] sm:$0xff]
        %v1009 = vld [vmem:[%s1003 + $0x28] sm:$0xff]
        %v1010 = vld [vmem:[%s1003 + $0x30] sm:$0xff]
        %v1011 = vld [vmem:[%s1003 + $0x38] sm:$0xff]
        %1028 = vst [vmem:[#allocation1] ss:$4 sm:$0xff] %v987
        %s1029 = scalar_lea.vmem [#allocation1], 1
        %1030 = vst [vmem:[%s1029] ss:$4 sm:$0xff] %v988
        %s1031 = scalar_lea.vmem [#allocation1], 2
        %1032 = vst [vmem:[%s1031] ss:$4 sm:$0xff] %v989
        %s1033 = scalar_lea.vmem [#allocation1], 3
        %1034 = vst [vmem:[%s1033] ss:$4 sm:$0xff] %v990
        %s1035 = scalar_lea.vmem [#allocation1], 32
        %1036 = vst [vmem:[%s1035] ss:$4 sm:$0xff] %v991
        %s1037 = scalar_lea.vmem [#allocation1], 33
        %1038 = vst [vmem:[%s1037] ss:$4 sm:$0xff] %v992
        %s1039 = scalar_lea.vmem [#allocation1], 34
        %1040 = vst [vmem:[%s1039] ss:$4 sm:$0xff] %v993
        %s1041 = scalar_lea.vmem [#allocation1], 35
        %1042 = vst [vmem:[%s1041] ss:$4 sm:$0xff] %v994
        %v1043 = vld.sshfl [vmem:[#allocation1] sm:$0xff pattern:$0x73625140]
        %v1044 = vld.sshfl [vmem:[#allocation1 + $0x20] sm:$0xff pattern:$0x73625140]
        %1045 = vst [vmem:[#allocation1] ss:$4 sm:$0xff] %v995
        %1046 = vst [vmem:[%s1029] ss:$4 sm:$0xff] %v996
        %1047 = vst [vmem:[%s1031] ss:$4 sm:$0xff] %v997
        %1048 = vst [vmem:[%s1033] ss:$4 sm:$0xff] %v998
        %1049 = vst [vmem:[%s1035] ss:$4 sm:$0xff] %v999
        %1050 = vst [vmem:[%s1037] ss:$4 sm:$0xff] %v1000
        %1051 = vst [vmem:[%s1039] ss:$4 sm:$0xff] %v1001
        %1052 = vst [vmem:[%s1041] ss:$4 sm:$0xff] %v1002
        %v1053 = vld.sshfl [vmem:[#allocation1] sm:$0xff pattern:$0x73625140]
        %v1054 = vld.sshfl [vmem:[#allocation1 + $0x20] sm:$0xff pattern:$0x73625140]
        %vm1055 = vcmask 523264
        %v1056 = vsel %vm1055, %v1043, 0
        %v1058 = vsel %vm1055, %v1044, 0
        %v1060 = vsel %vm1055, %v1053, 0
        %v1062 = vsel %vm1055, %v1054, 0
        %1064 = vmatpush.msra.mxu0 0.0
        %1065 = vmatpush.msra.mxu0 0.0
        %1066 = vmatpush.msra.mxu0 0.0
        %1067 = vmatpush.msra.mxu0 0.0
        %1068 = vmatpush.msra.mxu0 0.0
        %1069 = vmatpush.msra.mxu0 0.0
        %1070 = vmatpush.msra.mxu0 0.0
        %1071 = vmatpush.msra.mxu0 0.0
        %1072 = vmatpush.msra.mxu0 %v1011
        %1073 = vmatpush.msra.mxu0 %v1010
        %1074 = vmatpush.msra.mxu0 %v1009
        %1075 = vmatpush.msra.mxu0 %v1008
        %1076 = vmatpush.msra.mxu0 %v1007
        %1077 = vmatpush.msra.mxu0 %v1006
        %1078 = vmatpush.msra.mxu0 %v1005
        %1079 = vmatpush.msra.mxu0 %v1004
        %1080 = vmatmul.f32.gmra.mxu0 %v1056
        %v1081 = vpop.f32.mrf.mxu0
        %v1082 = vadd.f32 0.0, %v1081
        %1083 = vmatmul.f32.gmra.mxu0 %v1058
        %v1084 = vpop.f32.mrf.mxu0
        %v1085 = vadd.f32 0.0, %v1084
        %1086 = vmatmul.f32.gmra.mxu0 %v1060
        %v1087 = vpop.f32.mrf.mxu0
        %v1088 = vadd.f32 0.0, %v1087
        %1089 = vmatmul.f32.gmra.mxu0 %v1062
        %v1090 = vpop.f32.mrf.mxu0
        %v1091 = vadd.f32 0.0, %v1090
        %1092 = vdwg.mxu0
        %1109 = vst [vmem:[#allocation1] ss:$4 sm:$0xff] %v962
        %s1110 = scalar_lea.vmem [#allocation1], 1
        %1111 = vst [vmem:[%s1110] ss:$4 sm:$0xff] %v963
        %s1112 = scalar_lea.vmem [#allocation1], 2
        %1113 = vst [vmem:[%s1112] ss:$4 sm:$0xff] %v964
        %s1114 = scalar_lea.vmem [#allocation1], 3
        %1115 = vst [vmem:[%s1114] ss:$4 sm:$0xff] %v965
        %s1116 = scalar_lea.vmem [#allocation1], 32
        %1117 = vst [vmem:[%s1116] ss:$4 sm:$0xff] %v966
        %s1118 = scalar_lea.vmem [#allocation1], 33
        %1119 = vst [vmem:[%s1118] ss:$4 sm:$0xff] %v967
        %s1120 = scalar_lea.vmem [#allocation1], 34
        %1121 = vst [vmem:[%s1120] ss:$4 sm:$0xff] %v968
        %s1122 = scalar_lea.vmem [#allocation1], 35
        %1123 = vst [vmem:[%s1122] ss:$4 sm:$0xff] %v969
        %v1124 = vld.sshfl [vmem:[#allocation1] sm:$0xff pattern:$0x73625140]
        %v1125 = vld.sshfl [vmem:[#allocation1 + $0x20] sm:$0xff pattern:$0x73625140]
        %1126 = vst [vmem:[#allocation1] ss:$4 sm:$0xff] %v970
        %1127 = vst [vmem:[%s1110] ss:$4 sm:$0xff] %v971
        %1128 = vst [vmem:[%s1112] ss:$4 sm:$0xff] %v972
        %1129 = vst [vmem:[%s1114] ss:$4 sm:$0xff] %v973
        %1130 = vst [vmem:[%s1116] ss:$4 sm:$0xff] %v974
        %1131 = vst [vmem:[%s1118] ss:$4 sm:$0xff] %v975
        %1132 = vst [vmem:[%s1120] ss:$4 sm:$0xff] %v976
        %1133 = vst [vmem:[%s1122] ss:$4 sm:$0xff] %v977
        %v1134 = vld.sshfl [vmem:[#allocation1] sm:$0xff pattern:$0x73625140]
        %v1135 = vld.sshfl [vmem:[#allocation1 + $0x20] sm:$0xff pattern:$0x73625140]
        %v1136 = vsel %vm1055, %v1124, 0
        %v1138 = vsel %vm1055, %v1125, 0
        %v1140 = vsel %vm1055, %v1134, 0
        %v1142 = vsel %vm1055, %v1135, 0
        %1144 = vmatpush.msra.mxu0 0.0
        %1145 = vmatpush.msra.mxu0 0.0
        %1146 = vmatpush.msra.mxu0 0.0
        %1147 = vmatpush.msra.mxu0 0.0
        %1148 = vmatpush.msra.mxu0 0.0
        %1149 = vmatpush.msra.mxu0 0.0
        %1150 = vmatpush.msra.mxu0 0.0
        %1151 = vmatpush.msra.mxu0 0.0
        %1152 = vmatpush.msra.mxu0 %v985
        %1153 = vmatpush.msra.mxu0 %v984
        %1154 = vmatpush.msra.mxu0 %v983
        %1155 = vmatpush.msra.mxu0 %v982
        %1156 = vmatpush.msra.mxu0 %v981
        %1157 = vmatpush.msra.mxu0 %v980
        %1158 = vmatpush.msra.mxu0 %v979
        %1159 = vmatpush.msra.mxu0 %v978
        %1160 = vmatmul.f32.gmra.mxu0 %v1136
        %v1161 = vpop.f32.mrf.mxu0
        %v1162 = vadd.f32 %v1082, %v1161
        %1163 = vmatmul.f32.gmra.mxu0 %v1138
        %v1164 = vpop.f32.mrf.mxu0
        %v1165 = vadd.f32 %v1085, %v1164
        %1166 = vmatmul.f32.gmra.mxu0 %v1140
        %v1167 = vpop.f32.mrf.mxu0
        %v1168 = vadd.f32 %v1088, %v1167
        %1169 = vmatmul.f32.gmra.mxu0 %v1142
        %v1170 = vpop.f32.mrf.mxu0
        %v1171 = vadd.f32 %v1091, %v1170
        %1172 = vdwg.mxu0
        %s1173 = scalar_lea.vmem [#allocation2], 2
        %v1174 = vld [vmem:[%s1173] sm:$0x3]
        %v1175 = vld [vmem:[%s1173 + $0x2] sm:$0x3]
        %v1176 = vld [vmem:[%s1173 + $0x4] sm:$0x3]
        %v1177 = vld [vmem:[%s1173 + $0x6] sm:$0x3]
        %v1178 = vld [vmem:[%s1173 + $0xa] sm:$0x3]
        %v1179 = vld [vmem:[%s1173 + $0xc] sm:$0x3]
        %v1180 = vld [vmem:[%s1173 + $0xe] sm:$0x3]
        %v1181 = vld [vmem:[%s1173 + $0x10] sm:$0x3]
        %v1182 = vld [vmem:[%s1173 + $0x14] sm:$0x3]
        %v1183 = vld [vmem:[%s1173 + $0x16] sm:$0x3]
        %v1184 = vld [vmem:[%s1173 + $0x18] sm:$0x3]
        %v1185 = vld [vmem:[%s1173 + $0x1a] sm:$0x3]
        %v1186 = vld [vmem:[%s1173 + $0x1e] sm:$0x3]
        %v1187 = vld [vmem:[%s1173 + $0x20] sm:$0x3]
        %v1188 = vld [vmem:[%s1173 + $0x22] sm:$0x3]
        %v1189 = vld [vmem:[%s1173 + $0x24] sm:$0x3]
        %s1190 = scalar_lea.vmem %s3, 128
        %v1191 = vld [vmem:[%s1190] sm:$0xff]
        %v1192 = vld [vmem:[%s1190 + $0x8] sm:$0xff]
        %v1193 = vld [vmem:[%s1190 + $0x10] sm:$0xff]
        %v1194 = vld [vmem:[%s1190 + $0x18] sm:$0xff]
        %v1195 = vld [vmem:[%s1190 + $0x20] sm:$0xff]
        %v1196 = vld [vmem:[%s1190 + $0x28] sm:$0xff]
        %v1197 = vld [vmem:[%s1190 + $0x30] sm:$0xff]
        %v1198 = vld [vmem:[%s1190 + $0x38] sm:$0xff]
        %1215 = vst [vmem:[#allocation1] ss:$4 sm:$0xff] %v1174
        %s1216 = scalar_lea.vmem [#allocation1], 1
        %1217 = vst [vmem:[%s1216] ss:$4 sm:$0xff] %v1175
        %s1218 = scalar_lea.vmem [#allocation1], 2
        %1219 = vst [vmem:[%s1218] ss:$4 sm:$0xff] %v1176
        %s1220 = scalar_lea.vmem [#allocation1], 3
        %1221 = vst [vmem:[%s1220] ss:$4 sm:$0xff] %v1177
        %s1222 = scalar_lea.vmem [#allocation1], 32
        %1223 = vst [vmem:[%s1222] ss:$4 sm:$0xff] %v1178
        %s1224 = scalar_lea.vmem [#allocation1], 33
        %1225 = vst [vmem:[%s1224] ss:$4 sm:$0xff] %v1179
        %s1226 = scalar_lea.vmem [#allocation1], 34
        %1227 = vst [vmem:[%s1226] ss:$4 sm:$0xff] %v1180
        %s1228 = scalar_lea.vmem [#allocation1], 35
        %1229 = vst [vmem:[%s1228] ss:$4 sm:$0xff] %v1181
        %v1230 = vld.sshfl [vmem:[#allocation1] sm:$0xff pattern:$0x73625140]
        %v1231 = vld.sshfl [vmem:[#allocation1 + $0x20] sm:$0xff pattern:$0x73625140]
        %1232 = vst [vmem:[#allocation1] ss:$4 sm:$0xff] %v1182
        %1233 = vst [vmem:[%s1216] ss:$4 sm:$0xff] %v1183
        %1234 = vst [vmem:[%s1218] ss:$4 sm:$0xff] %v1184
        %1235 = vst [vmem:[%s1220] ss:$4 sm:$0xff] %v1185
        %1236 = vst [vmem:[%s1222] ss:$4 sm:$0xff] %v1186
        %1237 = vst [vmem:[%s1224] ss:$4 sm:$0xff] %v1187
        %1238 = vst [vmem:[%s1226] ss:$4 sm:$0xff] %v1188
        %1239 = vst [vmem:[%s1228] ss:$4 sm:$0xff] %v1189
        %v1240 = vld.sshfl [vmem:[#allocation1] sm:$0xff pattern:$0x73625140]
        %v1241 = vld.sshfl [vmem:[#allocation1 + $0x20] sm:$0xff pattern:$0x73625140]
        %v1242 = vsel %vm1055, %v1230, 0
        %v1244 = vsel %vm1055, %v1231, 0
        %v1246 = vsel %vm1055, %v1240, 0
        %v1248 = vsel %vm1055, %v1241, 0
        %1250 = vmatpush.msra.mxu0 0.0
        %1251 = vmatpush.msra.mxu0 0.0
        %1252 = vmatpush.msra.mxu0 0.0
        %1253 = vmatpush.msra.mxu0 0.0
        %1254 = vmatpush.msra.mxu0 0.0
        %1255 = vmatpush.msra.mxu0 0.0
        %1256 = vmatpush.msra.mxu0 0.0
        %1257 = vmatpush.msra.mxu0 0.0
        %1258 = vmatpush.msra.mxu0 %v1198
        %1259 = vmatpush.msra.mxu0 %v1197
        %1260 = vmatpush.msra.mxu0 %v1196
        %1261 = vmatpush.msra.mxu0 %v1195
        %1262 = vmatpush.msra.mxu0 %v1194
        %1263 = vmatpush.msra.mxu0 %v1193
        %1264 = vmatpush.msra.mxu0 %v1192
        %1265 = vmatpush.msra.mxu0 %v1191
        %1266 = vmatmul.f32.gmra.mxu0 %v1242
        %v1267 = vpop.f32.mrf.mxu0
        %v1268 = vadd.f32 0.0, %v1267
        %1269 = vmatmul.f32.gmra.mxu0 %v1244
        %v1270 = vpop.f32.mrf.mxu0
        %v1271 = vadd.f32 0.0, %v1270
        %1272 = vmatmul.f32.gmra.mxu0 %v1246
        %v1273 = vpop.f32.mrf.mxu0
        %v1274 = vadd.f32 0.0, %v1273
        %1275 = vmatmul.f32.gmra.mxu0 %v1248
        %v1276 = vpop.f32.mrf.mxu0
        %v1277 = vadd.f32 0.0, %v1276
        %1278 = vdwg.mxu0
        %v1279 = vadd.f32 %v1162, %v1268
        %v1280 = vadd.f32 %v1165, %v1271
        %v1281 = vadd.f32 %v1168, %v1274
        %v1282 = vadd.f32 %v1171, %v1277
        %s1283 = scalar_lea.vmem [#allocation2], 52
        %v1284 = vld [vmem:[%s1283] sm:$0x3]
        %v1285 = vld [vmem:[%s1283 + $0x2] sm:$0x3]
        %v1286 = vld [vmem:[%s1283 + $0x4] sm:$0x3]
        %v1287 = vld [vmem:[%s1283 + $0x6] sm:$0x3]
        %v1288 = vld [vmem:[%s1283 + $0xa] sm:$0x3]
        %v1289 = vld [vmem:[%s1283 + $0xc] sm:$0x3]
        %v1290 = vld [vmem:[%s1283 + $0xe] sm:$0x3]
        %v1291 = vld [vmem:[%s1283 + $0x10] sm:$0x3]
        %v1292 = vld [vmem:[%s1283 + $0x14] sm:$0x3]
        %v1293 = vld [vmem:[%s1283 + $0x16] sm:$0x3]
        %v1294 = vld [vmem:[%s1283 + $0x18] sm:$0x3]
        %v1295 = vld [vmem:[%s1283 + $0x1a] sm:$0x3]
        %v1296 = vld [vmem:[%s1283 + $0x1e] sm:$0x3]
        %v1297 = vld [vmem:[%s1283 + $0x20] sm:$0x3]
        %v1298 = vld [vmem:[%s1283 + $0x22] sm:$0x3]
        %v1299 = vld [vmem:[%s1283 + $0x24] sm:$0x3]
        %s1300 = scalar_lea.vmem %s3, 192
        %v1301 = vld [vmem:[%s1300] sm:$0xff]
        %v1302 = vld [vmem:[%s1300 + $0x8] sm:$0xff]
        %v1303 = vld [vmem:[%s1300 + $0x10] sm:$0xff]
        %v1304 = vld [vmem:[%s1300 + $0x18] sm:$0xff]
        %v1305 = vld [vmem:[%s1300 + $0x20] sm:$0xff]
        %v1306 = vld [vmem:[%s1300 + $0x28] sm:$0xff]
        %v1307 = vld [vmem:[%s1300 + $0x30] sm:$0xff]
        %v1308 = vld [vmem:[%s1300 + $0x38] sm:$0xff]
        %1325 = vst [vmem:[#allocation1] ss:$4 sm:$0xff] %v1284
        %s1326 = scalar_lea.vmem [#allocation1], 1
        %1327 = vst [vmem:[%s1326] ss:$4 sm:$0xff] %v1285
        %s1328 = scalar_lea.vmem [#allocation1], 2
        %1329 = vst [vmem:[%s1328] ss:$4 sm:$0xff] %v1286
        %s1330 = scalar_lea.vmem [#allocation1], 3
        %1331 = vst [vmem:[%s1330] ss:$4 sm:$0xff] %v1287
        %s1332 = scalar_lea.vmem [#allocation1], 32
        %1333 = vst [vmem:[%s1332] ss:$4 sm:$0xff] %v1288
        %s1334 = scalar_lea.vmem [#allocation1], 33
        %1335 = vst [vmem:[%s1334] ss:$4 sm:$0xff] %v1289
        %s1336 = scalar_lea.vmem [#allocation1], 34
        %1337 = vst [vmem:[%s1336] ss:$4 sm:$0xff] %v1290
        %s1338 = scalar_lea.vmem [#allocation1], 35
        %1339 = vst [vmem:[%s1338] ss:$4 sm:$0xff] %v1291
        %v1340 = vld.sshfl [vmem:[#allocation1] sm:$0xff pattern:$0x73625140]
        %v1341 = vld.sshfl [vmem:[#allocation1 + $0x20] sm:$0xff pattern:$0x73625140]
        %1342 = vst [vmem:[#allocation1] ss:$4 sm:$0xff] %v1292
        %1343 = vst [vmem:[%s1326] ss:$4 sm:$0xff] %v1293
        %1344 = vst [vmem:[%s1328] ss:$4 sm:$0xff] %v1294
        %1345 = vst [vmem:[%s1330] ss:$4 sm:$0xff] %v1295
        %1346 = vst [vmem:[%s1332] ss:$4 sm:$0xff] %v1296
        %1347 = vst [vmem:[%s1334] ss:$4 sm:$0xff] %v1297
        %1348 = vst [vmem:[%s1336] ss:$4 sm:$0xff] %v1298
        %1349 = vst [vmem:[%s1338] ss:$4 sm:$0xff] %v1299
        %v1350 = vld.sshfl [vmem:[#allocation1] sm:$0xff pattern:$0x73625140]
        %v1351 = vld.sshfl [vmem:[#allocation1 + $0x20] sm:$0xff pattern:$0x73625140]
        %v1352 = vsel %vm1055, %v1340, 0
        %v1354 = vsel %vm1055, %v1341, 0
        %v1356 = vsel %vm1055, %v1350, 0
        %v1358 = vsel %vm1055, %v1351, 0
        %1360 = vmatpush.msra.mxu0 0.0
        %1361 = vmatpush.msra.mxu0 0.0
        %1362 = vmatpush.msra.mxu0 0.0
        %1363 = vmatpush.msra.mxu0 0.0
        %1364 = vmatpush.msra.mxu0 0.0
        %1365 = vmatpush.msra.mxu0 0.0
        %1366 = vmatpush.msra.mxu0 0.0
        %1367 = vmatpush.msra.mxu0 0.0
        %1368 = vmatpush.msra.mxu0 %v1308
        %1369 = vmatpush.msra.mxu0 %v1307
        %1370 = vmatpush.msra.mxu0 %v1306
        %1371 = vmatpush.msra.mxu0 %v1305
        %1372 = vmatpush.msra.mxu0 %v1304
        %1373 = vmatpush.msra.mxu0 %v1303
        %1374 = vmatpush.msra.mxu0 %v1302
        %1375 = vmatpush.msra.mxu0 %v1301
        %1376 = vmatmul.f32.gmra.mxu0 %v1352
        %v1377 = vpop.f32.mrf.mxu0
        %v1378 = vadd.f32 0.0, %v1377
        %1379 = vmatmul.f32.gmra.mxu0 %v1354
        %v1380 = vpop.f32.mrf.mxu0
        %v1381 = vadd.f32 0.0, %v1380
        %1382 = vmatmul.f32.gmra.mxu0 %v1356
        %v1383 = vpop.f32.mrf.mxu0
        %v1384 = vadd.f32 0.0, %v1383
        %1385 = vmatmul.f32.gmra.mxu0 %v1358
        %v1386 = vpop.f32.mrf.mxu0
        %v1387 = vadd.f32 0.0, %v1386
        %1388 = vdwg.mxu0
        %v1389 = vadd.f32 %v1279, %v1378
        %v1390 = vadd.f32 %v1280, %v1381
        %v1391 = vadd.f32 %v1281, %v1384
        %v1392 = vadd.f32 %v1282, %v1387
        %s1393 = scalar_lea.vmem [#allocation2], 100
        %v1394 = vld [vmem:[%s1393] sm:$0x3]
        %v1395 = vld [vmem:[%s1393 + $0x2] sm:$0x3]
        %v1396 = vld [vmem:[%s1393 + $0x4] sm:$0x3]
        %v1397 = vld [vmem:[%s1393 + $0x6] sm:$0x3]
        %v1398 = vld [vmem:[%s1393 + $0xa] sm:$0x3]
        %v1399 = vld [vmem:[%s1393 + $0xc] sm:$0x3]
        %v1400 = vld [vmem:[%s1393 + $0xe] sm:$0x3]
        %v1401 = vld [vmem:[%s1393 + $0x10] sm:$0x3]
        %v1402 = vld [vmem:[%s1393 + $0x14] sm:$0x3]
        %v1403 = vld [vmem:[%s1393 + $0x16] sm:$0x3]
        %v1404 = vld [vmem:[%s1393 + $0x18] sm:$0x3]
        %v1405 = vld [vmem:[%s1393 + $0x1a] sm:$0x3]
        %v1406 = vld [vmem:[%s1393 + $0x1e] sm:$0x3]
        %v1407 = vld [vmem:[%s1393 + $0x20] sm:$0x3]
        %v1408 = vld [vmem:[%s1393 + $0x22] sm:$0x3]
        %v1409 = vld [vmem:[%s1393 + $0x24] sm:$0x3]
        %s1410 = scalar_lea.vmem %s3, 256
        %v1411 = vld [vmem:[%s1410] sm:$0xff]
        %v1412 = vld [vmem:[%s1410 + $0x8] sm:$0xff]
        %v1413 = vld [vmem:[%s1410 + $0x10] sm:$0xff]
        %v1414 = vld [vmem:[%s1410 + $0x18] sm:$0xff]
        %v1415 = vld [vmem:[%s1410 + $0x20] sm:$0xff]
        %v1416 = vld [vmem:[%s1410 + $0x28] sm:$0xff]
        %v1417 = vld [vmem:[%s1410 + $0x30] sm:$0xff]
        %v1418 = vld [vmem:[%s1410 + $0x38] sm:$0xff]
        %1435 = vst [vmem:[#allocation1] ss:$4 sm:$0xff] %v1394
        %s1436 = scalar_lea.vmem [#allocation1], 1
        %1437 = vst [vmem:[%s1436] ss:$4 sm:$0xff] %v1395
        %s1438 = scalar_lea.vmem [#allocation1], 2
        %1439 = vst [vmem:[%s1438] ss:$4 sm:$0xff] %v1396
        %s1440 = scalar_lea.vmem [#allocation1], 3
        %1441 = vst [vmem:[%s1440] ss:$4 sm:$0xff] %v1397
        %s1442 = scalar_lea.vmem [#allocation1], 32
        %1443 = vst [vmem:[%s1442] ss:$4 sm:$0xff] %v1398
        %s1444 = scalar_lea.vmem [#allocation1], 33
        %1445 = vst [vmem:[%s1444] ss:$4 sm:$0xff] %v1399
        %s1446 = scalar_lea.vmem [#allocation1], 34
        %1447 = vst [vmem:[%s1446] ss:$4 sm:$0xff] %v1400
        %s1448 = scalar_lea.vmem [#allocation1], 35
        %1449 = vst [vmem:[%s1448] ss:$4 sm:$0xff] %v1401
        %v1450 = vld.sshfl [vmem:[#allocation1] sm:$0xff pattern:$0x73625140]
        %v1451 = vld.sshfl [vmem:[#allocation1 + $0x20] sm:$0xff pattern:$0x73625140]
        %1452 = vst [vmem:[#allocation1] ss:$4 sm:$0xff] %v1402
        %1453 = vst [vmem:[%s1436] ss:$4 sm:$0xff] %v1403
        %1454 = vst [vmem:[%s1438] ss:$4 sm:$0xff] %v1404
        %1455 = vst [vmem:[%s1440] ss:$4 sm:$0xff] %v1405
        %1456 = vst [vmem:[%s1442] ss:$4 sm:$0xff] %v1406
        %1457 = vst [vmem:[%s1444] ss:$4 sm:$0xff] %v1407
        %1458 = vst [vmem:[%s1446] ss:$4 sm:$0xff] %v1408
        %1459 = vst [vmem:[%s1448] ss:$4 sm:$0xff] %v1409
        %v1460 = vld.sshfl [vmem:[#allocation1] sm:$0xff pattern:$0x73625140]
        %v1461 = vld.sshfl [vmem:[#allocation1 + $0x20] sm:$0xff pattern:$0x73625140]
        %v1462 = vsel %vm1055, %v1450, 0
        %v1464 = vsel %vm1055, %v1451, 0
        %v1466 = vsel %vm1055, %v1460, 0
        %v1468 = vsel %vm1055, %v1461, 0
        %1470 = vmatpush.msra.mxu0 0.0
        %1471 = vmatpush.msra.mxu0 0.0
        %1472 = vmatpush.msra.mxu0 0.0
        %1473 = vmatpush.msra.mxu0 0.0
        %1474 = vmatpush.msra.mxu0 0.0
        %1475 = vmatpush.msra.mxu0 0.0
        %1476 = vmatpush.msra.mxu0 0.0
        %1477 = vmatpush.msra.mxu0 0.0
        %1478 = vmatpush.msra.mxu0 %v1418
        %1479 = vmatpush.msra.mxu0 %v1417
        %1480 = vmatpush.msra.mxu0 %v1416
        %1481 = vmatpush.msra.mxu0 %v1415
        %1482 = vmatpush.msra.mxu0 %v1414
        %1483 = vmatpush.msra.mxu0 %v1413
        %1484 = vmatpush.msra.mxu0 %v1412
        %1485 = vmatpush.msra.mxu0 %v1411
        %1486 = vmatmul.f32.gmra.mxu0 %v1462
        %v1487 = vpop.f32.mrf.mxu0
        %v1488 = vadd.f32 0.0, %v1487
        %1489 = vmatmul.f32.gmra.mxu0 %v1464
        %v1490 = vpop.f32.mrf.mxu0
        %v1491 = vadd.f32 0.0, %v1490
        %1492 = vmatmul.f32.gmra.mxu0 %v1466
        %v1493 = vpop.f32.mrf.mxu0
        %v1494 = vadd.f32 0.0, %v1493
        %1495 = vmatmul.f32.gmra.mxu0 %v1468
        %v1496 = vpop.f32.mrf.mxu0
        %v1497 = vadd.f32 0.0, %v1496
        %1498 = vdwg.mxu0
        %v1499 = vadd.f32 %v1389, %v1488
        %v1500 = vadd.f32 %v1390, %v1491
        %v1501 = vadd.f32 %v1391, %v1494
        %v1502 = vadd.f32 %v1392, %v1497
        %v1503 = vld [vmem:[%s810] sm:$0x3]
        %v1504 = vld [vmem:[%s810 + $0x2] sm:$0x3]
        %v1505 = vld [vmem:[%s810 + $0x4] sm:$0x3]
        %v1506 = vld [vmem:[%s810 + $0x6] sm:$0x3]
        %v1507 = vld [vmem:[%s810 + $0xa] sm:$0x3]
        %v1508 = vld [vmem:[%s810 + $0xc] sm:$0x3]
        %v1509 = vld [vmem:[%s810 + $0xe] sm:$0x3]
        %v1510 = vld [vmem:[%s810 + $0x10] sm:$0x3]
        %v1511 = vld [vmem:[%s810 + $0x14] sm:$0x3]
        %v1512 = vld [vmem:[%s810 + $0x16] sm:$0x3]
        %v1513 = vld [vmem:[%s810 + $0x18] sm:$0x3]
        %v1514 = vld [vmem:[%s810 + $0x1a] sm:$0x3]
        %v1515 = vld [vmem:[%s810 + $0x1e] sm:$0x3]
        %v1516 = vld [vmem:[%s810 + $0x20] sm:$0x3]
        %v1517 = vld [vmem:[%s810 + $0x22] sm:$0x3]
        %v1518 = vld [vmem:[%s810 + $0x24] sm:$0x3]
        %s1519 = scalar_lea.vmem %s3, 320
        %v1520 = vld [vmem:[%s1519] sm:$0xff]
        %v1521 = vld [vmem:[%s1519 + $0x8] sm:$0xff]
        %v1522 = vld [vmem:[%s1519 + $0x10] sm:$0xff]
        %v1523 = vld [vmem:[%s1519 + $0x18] sm:$0xff]
        %v1524 = vld [vmem:[%s1519 + $0x20] sm:$0xff]
        %v1525 = vld [vmem:[%s1519 + $0x28] sm:$0xff]
        %v1526 = vld [vmem:[%s1519 + $0x30] sm:$0xff]
        %v1527 = vld [vmem:[%s1519 + $0x38] sm:$0xff]
        %1544 = vst [vmem:[#allocation1] ss:$4 sm:$0xff] %v1503
        %s1545 = scalar_lea.vmem [#allocation1], 1
        %1546 = vst [vmem:[%s1545] ss:$4 sm:$0xff] %v1504
        %s1547 = scalar_lea.vmem [#allocation1], 2
        %1548 = vst [vmem:[%s1547] ss:$4 sm:$0xff] %v1505
        %s1549 = scalar_lea.vmem [#allocation1], 3
        %1550 = vst [vmem:[%s1549] ss:$4 sm:$0xff] %v1506
        %s1551 = scalar_lea.vmem [#allocation1], 32
        %1552 = vst [vmem:[%s1551] ss:$4 sm:$0xff] %v1507
        %s1553 = scalar_lea.vmem [#allocation1], 33
        %1554 = vst [vmem:[%s1553] ss:$4 sm:$0xff] %v1508
        %s1555 = scalar_lea.vmem [#allocation1], 34
        %1556 = vst [vmem:[%s1555] ss:$4 sm:$0xff] %v1509
        %s1557 = scalar_lea.vmem [#allocation1], 35
        %1558 = vst [vmem:[%s1557] ss:$4 sm:$0xff] %v1510
        %v1559 = vld.sshfl [vmem:[#allocation1] sm:$0xff pattern:$0x73625140]
        %v1560 = vld.sshfl [vmem:[#allocation1 + $0x20] sm:$0xff pattern:$0x73625140]
        %1561 = vst [vmem:[#allocation1] ss:$4 sm:$0xff] %v1511
        %1562 = vst [vmem:[%s1545] ss:$4 sm:$0xff] %v1512
        %1563 = vst [vmem:[%s1547] ss:$4 sm:$0xff] %v1513
        %1564 = vst [vmem:[%s1549] ss:$4 sm:$0xff] %v1514
        %1565 = vst [vmem:[%s1551] ss:$4 sm:$0xff] %v1515
        %1566 = vst [vmem:[%s1553] ss:$4 sm:$0xff] %v1516
        %1567 = vst [vmem:[%s1555] ss:$4 sm:$0xff] %v1517
        %1568 = vst [vmem:[%s1557] ss:$4 sm:$0xff] %v1518
        %v1569 = vld.sshfl [vmem:[#allocation1] sm:$0xff pattern:$0x73625140]
        %v1570 = vld.sshfl [vmem:[#allocation1 + $0x20] sm:$0xff pattern:$0x73625140]
        %v1571 = vsel %vm1055, %v1559, 0
        %v1573 = vsel %vm1055, %v1560, 0
        %v1575 = vsel %vm1055, %v1569, 0
        %v1577 = vsel %vm1055, %v1570, 0
        %1579 = vmatpush.msra.mxu0 0.0
        %1580 = vmatpush.msra.mxu0 0.0
        %1581 = vmatpush.msra.mxu0 0.0
        %1582 = vmatpush.msra.mxu0 0.0
        %1583 = vmatpush.msra.mxu0 0.0
        %1584 = vmatpush.msra.mxu0 0.0
        %1585 = vmatpush.msra.mxu0 0.0
        %1586 = vmatpush.msra.mxu0 0.0
        %1587 = vmatpush.msra.mxu0 %v1527
        %1588 = vmatpush.msra.mxu0 %v1526
        %1589 = vmatpush.msra.mxu0 %v1525
        %1590 = vmatpush.msra.mxu0 %v1524
        %1591 = vmatpush.msra.mxu0 %v1523
        %1592 = vmatpush.msra.mxu0 %v1522
        %1593 = vmatpush.msra.mxu0 %v1521
        %1594 = vmatpush.msra.mxu0 %v1520
        %1595 = vmatmul.f32.gmra.mxu0 %v1571
        %v1596 = vpop.f32.mrf.mxu0
        %v1597 = vadd.f32 0.0, %v1596
        %1598 = vmatmul.f32.gmra.mxu0 %v1573
        %v1599 = vpop.f32.mrf.mxu0
        %v1600 = vadd.f32 0.0, %v1599
        %1601 = vmatmul.f32.gmra.mxu0 %v1575
        %v1602 = vpop.f32.mrf.mxu0
        %v1603 = vadd.f32 0.0, %v1602
        %1604 = vmatmul.f32.gmra.mxu0 %v1577
        %v1605 = vpop.f32.mrf.mxu0
        %v1606 = vadd.f32 0.0, %v1605
        %1607 = vdwg.mxu0
        %v1608 = vadd.f32 %v1499, %v1597
        %v1609 = vadd.f32 %v1500, %v1600
        %v1610 = vadd.f32 %v1501, %v1603
        %v1611 = vadd.f32 %v1502, %v1606
        %v1612 = vld [vmem:[%s855] sm:$0x3]
        %v1613 = vld [vmem:[%s855 + $0x2] sm:$0x3]
        %v1614 = vld [vmem:[%s855 + $0x4] sm:$0x3]
        %v1615 = vld [vmem:[%s855 + $0x6] sm:$0x3]
        %v1616 = vld [vmem:[%s855 + $0xa] sm:$0x3]
        %v1617 = vld [vmem:[%s855 + $0xc] sm:$0x3]
        %v1618 = vld [vmem:[%s855 + $0xe] sm:$0x3]
        %v1619 = vld [vmem:[%s855 + $0x10] sm:$0x3]
        %v1620 = vld [vmem:[%s855 + $0x14] sm:$0x3]
        %v1621 = vld [vmem:[%s855 + $0x16] sm:$0x3]
        %v1622 = vld [vmem:[%s855 + $0x18] sm:$0x3]
        %v1623 = vld [vmem:[%s855 + $0x1a] sm:$0x3]
        %v1624 = vld [vmem:[%s855 + $0x1e] sm:$0x3]
        %v1625 = vld [vmem:[%s855 + $0x20] sm:$0x3]
        %v1626 = vld [vmem:[%s855 + $0x22] sm:$0x3]
        %v1627 = vld [vmem:[%s855 + $0x24] sm:$0x3]
        %s1628 = scalar_lea.vmem %s3, 384
        %v1629 = vld [vmem:[%s1628] sm:$0xff]
        %v1630 = vld [vmem:[%s1628 + $0x8] sm:$0xff]
        %v1631 = vld [vmem:[%s1628 + $0x10] sm:$0xff]
        %v1632 = vld [vmem:[%s1628 + $0x18] sm:$0xff]
        %v1633 = vld [vmem:[%s1628 + $0x20] sm:$0xff]
        %v1634 = vld [vmem:[%s1628 + $0x28] sm:$0xff]
        %v1635 = vld [vmem:[%s1628 + $0x30] sm:$0xff]
        %v1636 = vld [vmem:[%s1628 + $0x38] sm:$0xff]
        %1653 = vst [vmem:[#allocation1] ss:$4 sm:$0xff] %v1612
        %s1654 = scalar_lea.vmem [#allocation1], 1
        %1655 = vst [vmem:[%s1654] ss:$4 sm:$0xff] %v1613
        %s1656 = scalar_lea.vmem [#allocation1], 2
        %1657 = vst [vmem:[%s1656] ss:$4 sm:$0xff] %v1614
        %s1658 = scalar_lea.vmem [#allocation1], 3
        %1659 = vst [vmem:[%s1658] ss:$4 sm:$0xff] %v1615
        %s1660 = scalar_lea.vmem [#allocation1], 32
        %1661 = vst [vmem:[%s1660] ss:$4 sm:$0xff] %v1616
        %s1662 = scalar_lea.vmem [#allocation1], 33
        %1663 = vst [vmem:[%s1662] ss:$4 sm:$0xff] %v1617
        %s1664 = scalar_lea.vmem [#allocation1], 34
        %1665 = vst [vmem:[%s1664] ss:$4 sm:$0xff] %v1618
        %s1666 = scalar_lea.vmem [#allocation1], 35
        %1667 = vst [vmem:[%s1666] ss:$4 sm:$0xff] %v1619
        %v1668 = vld.sshfl [vmem:[#allocation1] sm:$0xff pattern:$0x73625140]
        %v1669 = vld.sshfl [vmem:[#allocation1 + $0x20] sm:$0xff pattern:$0x73625140]
        %1670 = vst [vmem:[#allocation1] ss:$4 sm:$0xff] %v1620
        %1671 = vst [vmem:[%s1654] ss:$4 sm:$0xff] %v1621
        %1672 = vst [vmem:[%s1656] ss:$4 sm:$0xff] %v1622
        %1673 = vst [vmem:[%s1658] ss:$4 sm:$0xff] %v1623
        %1674 = vst [vmem:[%s1660] ss:$4 sm:$0xff] %v1624
        %1675 = vst [vmem:[%s1662] ss:$4 sm:$0xff] %v1625
        %1676 = vst [vmem:[%s1664] ss:$4 sm:$0xff] %v1626
        %1677 = vst [vmem:[%s1666] ss:$4 sm:$0xff] %v1627
        %v1678 = vld.sshfl [vmem:[#allocation1] sm:$0xff pattern:$0x73625140]
        %v1679 = vld.sshfl [vmem:[#allocation1 + $0x20] sm:$0xff pattern:$0x73625140]
        %v1680 = vsel %vm1055, %v1668, 0
        %v1682 = vsel %vm1055, %v1669, 0
        %v1684 = vsel %vm1055, %v1678, 0
        %v1686 = vsel %vm1055, %v1679, 0
        %1688 = vmatpush.msra.mxu0 0.0
        %1689 = vmatpush.msra.mxu0 0.0
        %1690 = vmatpush.msra.mxu0 0.0
        %1691 = vmatpush.msra.mxu0 0.0
        %1692 = vmatpush.msra.mxu0 0.0
        %1693 = vmatpush.msra.mxu0 0.0
        %1694 = vmatpush.msra.mxu0 0.0
        %1695 = vmatpush.msra.mxu0 0.0
        %1696 = vmatpush.msra.mxu0 %v1636
        %1697 = vmatpush.msra.mxu0 %v1635
        %1698 = vmatpush.msra.mxu0 %v1634
        %1699 = vmatpush.msra.mxu0 %v1633
        %1700 = vmatpush.msra.mxu0 %v1632
        %1701 = vmatpush.msra.mxu0 %v1631
        %1702 = vmatpush.msra.mxu0 %v1630
        %1703 = vmatpush.msra.mxu0 %v1629
        %1704 = vmatmul.f32.gmra.mxu0 %v1680
        %v1705 = vpop.f32.mrf.mxu0
        %v1706 = vadd.f32 0.0, %v1705
        %1707 = vmatmul.f32.gmra.mxu0 %v1682
        %v1708 = vpop.f32.mrf.mxu0
        %v1709 = vadd.f32 0.0, %v1708
        %1710 = vmatmul.f32.gmra.mxu0 %v1684
        %v1711 = vpop.f32.mrf.mxu0
        %v1712 = vadd.f32 0.0, %v1711
        %1713 = vmatmul.f32.gmra.mxu0 %v1686
        %v1714 = vpop.f32.mrf.mxu0
        %v1715 = vadd.f32 0.0, %v1714
        %1716 = vdwg.mxu0
        %v1717 = vadd.f32 %v1608, %v1706
        %v1718 = vadd.f32 %v1609, %v1709
        %v1719 = vadd.f32 %v1610, %v1712
        %v1720 = vadd.f32 %v1611, %v1715
        %s1721 = scalar_lea.vmem [#allocation2], 152
        %v1722 = vld [vmem:[%s1721] sm:$0x3]
        %v1723 = vld [vmem:[%s1721 + $0x2] sm:$0x3]
        %v1724 = vld [vmem:[%s1721 + $0x4] sm:$0x3]
        %v1725 = vld [vmem:[%s1721 + $0x6] sm:$0x3]
        %v1726 = vld [vmem:[%s1721 + $0xa] sm:$0x3]
        %v1727 = vld [vmem:[%s1721 + $0xc] sm:$0x3]
        %v1728 = vld [vmem:[%s1721 + $0xe] sm:$0x3]
        %v1729 = vld [vmem:[%s1721 + $0x10] sm:$0x3]
        %v1730 = vld [vmem:[%s1721 + $0x14] sm:$0x3]
        %v1731 = vld [vmem:[%s1721 + $0x16] sm:$0x3]
        %v1732 = vld [vmem:[%s1721 + $0x18] sm:$0x3]
        %v1733 = vld [vmem:[%s1721 + $0x1a] sm:$0x3]
        %v1734 = vld [vmem:[%s1721 + $0x1e] sm:$0x3]
        %v1735 = vld [vmem:[%s1721 + $0x20] sm:$0x3]
        %v1736 = vld [vmem:[%s1721 + $0x22] sm:$0x3]
        %v1737 = vld [vmem:[%s1721 + $0x24] sm:$0x3]
        %s1738 = scalar_lea.vmem %s3, 448
        %v1739 = vld [vmem:[%s1738] sm:$0xff]
        %v1740 = vld [vmem:[%s1738 + $0x8] sm:$0xff]
        %v1741 = vld [vmem:[%s1738 + $0x10] sm:$0xff]
        %v1742 = vld [vmem:[%s1738 + $0x18] sm:$0xff]
        %v1743 = vld [vmem:[%s1738 + $0x20] sm:$0xff]
        %v1744 = vld [vmem:[%s1738 + $0x28] sm:$0xff]
        %v1745 = vld [vmem:[%s1738 + $0x30] sm:$0xff]
        %v1746 = vld [vmem:[%s1738 + $0x38] sm:$0xff]
        %1763 = vst [vmem:[#allocation1] ss:$4 sm:$0xff] %v1722
        %s1764 = scalar_lea.vmem [#allocation1], 1
        %1765 = vst [vmem:[%s1764] ss:$4 sm:$0xff] %v1723
        %s1766 = scalar_lea.vmem [#allocation1], 2
        %1767 = vst [vmem:[%s1766] ss:$4 sm:$0xff] %v1724
        %s1768 = scalar_lea.vmem [#allocation1], 3
        %1769 = vst [vmem:[%s1768] ss:$4 sm:$0xff] %v1725
        %s1770 = scalar_lea.vmem [#allocation1], 32
        %1771 = vst [vmem:[%s1770] ss:$4 sm:$0xff] %v1726
        %s1772 = scalar_lea.vmem [#allocation1], 33
        %1773 = vst [vmem:[%s1772] ss:$4 sm:$0xff] %v1727
        %s1774 = scalar_lea.vmem [#allocation1], 34
        %1775 = vst [vmem:[%s1774] ss:$4 sm:$0xff] %v1728
        %s1776 = scalar_lea.vmem [#allocation1], 35
        %1777 = vst [vmem:[%s1776] ss:$4 sm:$0xff] %v1729
        %v1778 = vld.sshfl [vmem:[#allocation1] sm:$0xff pattern:$0x73625140]
        %v1779 = vld.sshfl [vmem:[#allocation1 + $0x20] sm:$0xff pattern:$0x73625140]
        %1780 = vst [vmem:[#allocation1] ss:$4 sm:$0xff] %v1730
        %1781 = vst [vmem:[%s1764] ss:$4 sm:$0xff] %v1731
        %1782 = vst [vmem:[%s1766] ss:$4 sm:$0xff] %v1732
        %1783 = vst [vmem:[%s1768] ss:$4 sm:$0xff] %v1733
        %1784 = vst [vmem:[%s1770] ss:$4 sm:$0xff] %v1734
        %1785 = vst [vmem:[%s1772] ss:$4 sm:$0xff] %v1735
        %1786 = vst [vmem:[%s1774] ss:$4 sm:$0xff] %v1736
        %1787 = vst [vmem:[%s1776] ss:$4 sm:$0xff] %v1737
        %v1788 = vld.sshfl [vmem:[#allocation1] sm:$0xff pattern:$0x73625140]
        %v1789 = vld.sshfl [vmem:[#allocation1 + $0x20] sm:$0xff pattern:$0x73625140]
        %v1790 = vsel %vm1055, %v1778, 0
        %v1792 = vsel %vm1055, %v1779, 0
        %v1794 = vsel %vm1055, %v1788, 0
        %v1796 = vsel %vm1055, %v1789, 0
        %1798 = vmatpush.msra.mxu0 0.0
        %1799 = vmatpush.msra.mxu0 0.0
        %1800 = vmatpush.msra.mxu0 0.0
        %1801 = vmatpush.msra.mxu0 0.0
        %1802 = vmatpush.msra.mxu0 0.0
        %1803 = vmatpush.msra.mxu0 0.0
        %1804 = vmatpush.msra.mxu0 0.0
        %1805 = vmatpush.msra.mxu0 0.0
        %1806 = vmatpush.msra.mxu0 %v1746
        %1807 = vmatpush.msra.mxu0 %v1745
        %1808 = vmatpush.msra.mxu0 %v1744
        %1809 = vmatpush.msra.mxu0 %v1743
        %1810 = vmatpush.msra.mxu0 %v1742
        %1811 = vmatpush.msra.mxu0 %v1741
        %1812 = vmatpush.msra.mxu0 %v1740
        %1813 = vmatpush.msra.mxu0 %v1739
        %1814 = vmatmul.f32.gmra.mxu0 %v1790
        %v1815 = vpop.f32.mrf.mxu0
        %v1816 = vadd.f32 0.0, %v1815
        %1817 = vmatmul.f32.gmra.mxu0 %v1792
        %v1818 = vpop.f32.mrf.mxu0
        %v1819 = vadd.f32 0.0, %v1818
        %1820 = vmatmul.f32.gmra.mxu0 %v1794
        %v1821 = vpop.f32.mrf.mxu0
        %v1822 = vadd.f32 0.0, %v1821
        %1823 = vmatmul.f32.gmra.mxu0 %v1796
        %v1824 = vpop.f32.mrf.mxu0
        %v1825 = vadd.f32 0.0, %v1824
        %1826 = vdwg.mxu0
        %v1827 = vadd.f32 %v1717, %v1816
        %v1828 = vadd.f32 %v1718, %v1819
        %v1829 = vadd.f32 %v1719, %v1822
        %v1830 = vadd.f32 %v1720, %v1825
        %s1831 = scalar_lea.vmem [#allocation2], 10
        %v1832 = vld [vmem:[%s1831] sm:$0x3]
        %v1833 = vld [vmem:[%s1831 + $0x2] sm:$0x3]
        %v1834 = vld [vmem:[%s1831 + $0x4] sm:$0x3]
        %v1835 = vld [vmem:[%s1831 + $0x6] sm:$0x3]
        %v1836 = vld [vmem:[%s1831 + $0xa] sm:$0x3]
        %v1837 = vld [vmem:[%s1831 + $0xc] sm:$0x3]
        %v1838 = vld [vmem:[%s1831 + $0xe] sm:$0x3]
        %v1839 = vld [vmem:[%s1831 + $0x10] sm:$0x3]
        %v1840 = vld [vmem:[%s1831 + $0x14] sm:$0x3]
        %v1841 = vld [vmem:[%s1831 + $0x16] sm:$0x3]
        %v1842 = vld [vmem:[%s1831 + $0x18] sm:$0x3]
        %v1843 = vld [vmem:[%s1831 + $0x1a] sm:$0x3]
        %v1844 = vld [vmem:[%s1831 + $0x1e] sm:$0x3]
        %v1845 = vld [vmem:[%s1831 + $0x20] sm:$0x3]
        %v1846 = vld [vmem:[%s1831 + $0x22] sm:$0x3]
        %v1847 = vld [vmem:[%s1831 + $0x24] sm:$0x3]
        %s1848 = scalar_lea.vmem %s3, 512
        %v1849 = vld [vmem:[%s1848] sm:$0xff]
        %v1850 = vld [vmem:[%s1848 + $0x8] sm:$0xff]
        %v1851 = vld [vmem:[%s1848 + $0x10] sm:$0xff]
        %v1852 = vld [vmem:[%s1848 + $0x18] sm:$0xff]
        %v1853 = vld [vmem:[%s1848 + $0x20] sm:$0xff]
        %v1854 = vld [vmem:[%s1848 + $0x28] sm:$0xff]
        %v1855 = vld [vmem:[%s1848 + $0x30] sm:$0xff]
        %v1856 = vld [vmem:[%s1848 + $0x38] sm:$0xff]
        %1873 = vst [vmem:[#allocation1] ss:$4 sm:$0xff] %v1832
        %s1874 = scalar_lea.vmem [#allocation1], 1
        %1875 = vst [vmem:[%s1874] ss:$4 sm:$0xff] %v1833
        %s1876 = scalar_lea.vmem [#allocation1], 2
        %1877 = vst [vmem:[%s1876] ss:$4 sm:$0xff] %v1834
        %s1878 = scalar_lea.vmem [#allocation1], 3
        %1879 = vst [vmem:[%s1878] ss:$4 sm:$0xff] %v1835
        %s1880 = scalar_lea.vmem [#allocation1], 32
        %1881 = vst [vmem:[%s1880] ss:$4 sm:$0xff] %v1836
        %s1882 = scalar_lea.vmem [#allocation1], 33
        %1883 = vst [vmem:[%s1882] ss:$4 sm:$0xff] %v1837
        %s1884 = scalar_lea.vmem [#allocation1], 34
        %1885 = vst [vmem:[%s1884] ss:$4 sm:$0xff] %v1838
        %s1886 = scalar_lea.vmem [#allocation1], 35
        %1887 = vst [vmem:[%s1886] ss:$4 sm:$0xff] %v1839
        %v1888 = vld.sshfl [vmem:[#allocation1] sm:$0xff pattern:$0x73625140]
        %v1889 = vld.sshfl [vmem:[#allocation1 + $0x20] sm:$0xff pattern:$0x73625140]
        %1890 = vst [vmem:[#allocation1] ss:$4 sm:$0xff] %v1840
        %1891 = vst [vmem:[%s1874] ss:$4 sm:$0xff] %v1841
        %1892 = vst [vmem:[%s1876] ss:$4 sm:$0xff] %v1842
        %1893 = vst [vmem:[%s1878] ss:$4 sm:$0xff] %v1843
        %1894 = vst [vmem:[%s1880] ss:$4 sm:$0xff] %v1844
        %1895 = vst [vmem:[%s1882] ss:$4 sm:$0xff] %v1845
        %1896 = vst [vmem:[%s1884] ss:$4 sm:$0xff] %v1846
        %1897 = vst [vmem:[%s1886] ss:$4 sm:$0xff] %v1847
        %v1898 = vld.sshfl [vmem:[#allocation1] sm:$0xff pattern:$0x73625140]
        %v1899 = vld.sshfl [vmem:[#allocation1 + $0x20] sm:$0xff pattern:$0x73625140]
        %v1900 = vsel %vm1055, %v1888, 0
        %v1902 = vsel %vm1055, %v1889, 0
        %v1904 = vsel %vm1055, %v1898, 0
        %v1906 = vsel %vm1055, %v1899, 0
        %1908 = vmatpush.msra.mxu0 0.0
        %1909 = vmatpush.msra.mxu0 0.0
        %1910 = vmatpush.msra.mxu0 0.0
        %1911 = vmatpush.msra.mxu0 0.0
        %1912 = vmatpush.msra.mxu0 0.0
        %1913 = vmatpush.msra.mxu0 0.0
        %1914 = vmatpush.msra.mxu0 0.0
        %1915 = vmatpush.msra.mxu0 0.0
        %1916 = vmatpush.msra.mxu0 %v1856
        %1917 = vmatpush.msra.mxu0 %v1855
        %1918 = vmatpush.msra.mxu0 %v1854
        %1919 = vmatpush.msra.mxu0 %v1853
        %1920 = vmatpush.msra.mxu0 %v1852
        %1921 = vmatpush.msra.mxu0 %v1851
        %1922 = vmatpush.msra.mxu0 %v1850
        %1923 = vmatpush.msra.mxu0 %v1849
        %1924 = vmatmul.f32.gmra.mxu0 %v1900
        %v1925 = vpop.f32.mrf.mxu0
        %v1926 = vadd.f32 0.0, %v1925
        %1927 = vmatmul.f32.gmra.mxu0 %v1902
        %v1928 = vpop.f32.mrf.mxu0
        %v1929 = vadd.f32 0.0, %v1928
        %1930 = vmatmul.f32.gmra.mxu0 %v1904
        %v1931 = vpop.f32.mrf.mxu0
        %v1932 = vadd.f32 0.0, %v1931
        %1933 = vmatmul.f32.gmra.mxu0 %v1906
        %v1934 = vpop.f32.mrf.mxu0
        %v1935 = vadd.f32 0.0, %v1934
        %1936 = vdwg.mxu0
        %v1937 = vadd.f32 %v1827, %v1926
        %v1938 = vadd.f32 %v1828, %v1929
        %v1939 = vadd.f32 %v1829, %v1932
        %v1940 = vadd.f32 %v1830, %v1935
        %v1941 = vld [vmem:[%s900] sm:$0x3]
        %v1942 = vld [vmem:[%s900 + $0x2] sm:$0x3]
        %v1943 = vld [vmem:[%s900 + $0x4] sm:$0x3]
        %v1944 = vld [vmem:[%s900 + $0x6] sm:$0x3]
        %v1945 = vld [vmem:[%s900 + $0xa] sm:$0x3]
        %v1946 = vld [vmem:[%s900 + $0xc] sm:$0x3]
        %v1947 = vld [vmem:[%s900 + $0xe] sm:$0x3]
        %v1948 = vld [vmem:[%s900 + $0x10] sm:$0x3]
        %v1949 = vld [vmem:[%s900 + $0x14] sm:$0x3]
        %v1950 = vld [vmem:[%s900 + $0x16] sm:$0x3]
        %v1951 = vld [vmem:[%s900 + $0x18] sm:$0x3]
        %v1952 = vld [vmem:[%s900 + $0x1a] sm:$0x3]
        %v1953 = vld [vmem:[%s900 + $0x1e] sm:$0x3]
        %v1954 = vld [vmem:[%s900 + $0x20] sm:$0x3]
        %v1955 = vld [vmem:[%s900 + $0x22] sm:$0x3]
        %v1956 = vld [vmem:[%s900 + $0x24] sm:$0x3]
        %s1957 = scalar_lea.vmem %s3, 576
        %v1958 = vld [vmem:[%s1957] sm:$0xff]
        %v1959 = vld [vmem:[%s1957 + $0x8] sm:$0xff]
        %v1960 = vld [vmem:[%s1957 + $0x10] sm:$0xff]
        %v1961 = vld [vmem:[%s1957 + $0x18] sm:$0xff]
        %v1962 = vld [vmem:[%s1957 + $0x20] sm:$0xff]
        %v1963 = vld [vmem:[%s1957 + $0x28] sm:$0xff]
        %v1964 = vld [vmem:[%s1957 + $0x30] sm:$0xff]
        %v1965 = vld [vmem:[%s1957 + $0x38] sm:$0xff]
        %1982 = vst [vmem:[#allocation1] ss:$4 sm:$0xff] %v1941
        %s1983 = scalar_lea.vmem [#allocation1], 1
        %1984 = vst [vmem:[%s1983] ss:$4 sm:$0xff] %v1942
        %s1985 = scalar_lea.vmem [#allocation1], 2
        %1986 = vst [vmem:[%s1985] ss:$4 sm:$0xff] %v1943
        %s1987 = scalar_lea.vmem [#allocation1], 3
        %1988 = vst [vmem:[%s1987] ss:$4 sm:$0xff] %v1944
        %s1989 = scalar_lea.vmem [#allocation1], 32
        %1990 = vst [vmem:[%s1989] ss:$4 sm:$0xff] %v1945
        %s1991 = scalar_lea.vmem [#allocation1], 33
        %1992 = vst [vmem:[%s1991] ss:$4 sm:$0xff] %v1946
        %s1993 = scalar_lea.vmem [#allocation1], 34
        %1994 = vst [vmem:[%s1993] ss:$4 sm:$0xff] %v1947
        %s1995 = scalar_lea.vmem [#allocation1], 35
        %1996 = vst [vmem:[%s1995] ss:$4 sm:$0xff] %v1948
        %v1997 = vld.sshfl [vmem:[#allocation1] sm:$0xff pattern:$0x73625140]
        %v1998 = vld.sshfl [vmem:[#allocation1 + $0x20] sm:$0xff pattern:$0x73625140]
        %1999 = vst [vmem:[#allocation1] ss:$4 sm:$0xff] %v1949
        %2000 = vst [vmem:[%s1983] ss:$4 sm:$0xff] %v1950
        %2001 = vst [vmem:[%s1985] ss:$4 sm:$0xff] %v1951
        %2002 = vst [vmem:[%s1987] ss:$4 sm:$0xff] %v1952
        %2003 = vst [vmem:[%s1989] ss:$4 sm:$0xff] %v1953
        %2004 = vst [vmem:[%s1991] ss:$4 sm:$0xff] %v1954
        %2005 = vst [vmem:[%s1993] ss:$4 sm:$0xff] %v1955
        %2006 = vst [vmem:[%s1995] ss:$4 sm:$0xff] %v1956
        %v2007 = vld.sshfl [vmem:[#allocation1] sm:$0xff pattern:$0x73625140]
        %v2008 = vld.sshfl [vmem:[#allocation1 + $0x20] sm:$0xff pattern:$0x73625140]
        %v2009 = vsel %vm1055, %v1997, 0
        %v2011 = vsel %vm1055, %v1998, 0
        %v2013 = vsel %vm1055, %v2007, 0
        %v2015 = vsel %vm1055, %v2008, 0
        %2017 = vmatpush.msra.mxu0 0.0
        %2018 = vmatpush.msra.mxu0 0.0
        %2019 = vmatpush.msra.mxu0 0.0
        %2020 = vmatpush.msra.mxu0 0.0
        %2021 = vmatpush.msra.mxu0 0.0
        %2022 = vmatpush.msra.mxu0 0.0
        %2023 = vmatpush.msra.mxu0 0.0
        %2024 = vmatpush.msra.mxu0 0.0
        %2025 = vmatpush.msra.mxu0 %v1965
        %2026 = vmatpush.msra.mxu0 %v1964
        %2027 = vmatpush.msra.mxu0 %v1963
        %2028 = vmatpush.msra.mxu0 %v1962
        %2029 = vmatpush.msra.mxu0 %v1961
        %2030 = vmatpush.msra.mxu0 %v1960
        %2031 = vmatpush.msra.mxu0 %v1959
        %2032 = vmatpush.msra.mxu0 %v1958
        %2033 = vmatmul.f32.gmra.mxu0 %v2009
        %v2034 = vpop.f32.mrf.mxu0
        %v2035 = vadd.f32 0.0, %v2034
        %2036 = vmatmul.f32.gmra.mxu0 %v2011
        %v2037 = vpop.f32.mrf.mxu0
        %v2038 = vadd.f32 0.0, %v2037
        %2039 = vmatmul.f32.gmra.mxu0 %v2013
        %v2040 = vpop.f32.mrf.mxu0
        %v2041 = vadd.f32 0.0, %v2040
        %2042 = vmatmul.f32.gmra.mxu0 %v2015
        %v2043 = vpop.f32.mrf.mxu0
        %v2044 = vadd.f32 0.0, %v2043
        %2045 = vdwg.mxu0
        %v2046 = vadd.f32 %v1937, %v2035
        %v2047 = vadd.f32 %v1938, %v2038
        %v2048 = vadd.f32 %v1939, %v2041
        %v2049 = vadd.f32 %v1940, %v2044
        %v2050 = vld [vmem:[%s945] sm:$0x3]
        %v2051 = vld [vmem:[%s945 + $0x2] sm:$0x3]
        %v2052 = vld [vmem:[%s945 + $0x4] sm:$0x3]
        %v2053 = vld [vmem:[%s945 + $0x6] sm:$0x3]
        %v2054 = vld [vmem:[%s945 + $0xa] sm:$0x3]
        %v2055 = vld [vmem:[%s945 + $0xc] sm:$0x3]
        %v2056 = vld [vmem:[%s945 + $0xe] sm:$0x3]
        %v2057 = vld [vmem:[%s945 + $0x10] sm:$0x3]
        %v2058 = vld [vmem:[%s945 + $0x14] sm:$0x3]
        %v2059 = vld [vmem:[%s945 + $0x16] sm:$0x3]
        %v2060 = vld [vmem:[%s945 + $0x18] sm:$0x3]
        %v2061 = vld [vmem:[%s945 + $0x1a] sm:$0x3]
        %v2062 = vld [vmem:[%s945 + $0x1e] sm:$0x3]
        %v2063 = vld [vmem:[%s945 + $0x20] sm:$0x3]
        %v2064 = vld [vmem:[%s945 + $0x22] sm:$0x3]
        %v2065 = vld [vmem:[%s945 + $0x24] sm:$0x3]
        %s2066 = scalar_lea.vmem %s3, 640
        %v2067 = vld [vmem:[%s2066] sm:$0xff]
        %v2068 = vld [vmem:[%s2066 + $0x8] sm:$0xff]
        %v2069 = vld [vmem:[%s2066 + $0x10] sm:$0xff]
        %v2070 = vld [vmem:[%s2066 + $0x18] sm:$0xff]
        %v2071 = vld [vmem:[%s2066 + $0x20] sm:$0xff]
        %v2072 = vld [vmem:[%s2066 + $0x28] sm:$0xff]
        %v2073 = vld [vmem:[%s2066 + $0x30] sm:$0xff]
        %v2074 = vld [vmem:[%s2066 + $0x38] sm:$0xff]
        %2091 = vst [vmem:[#allocation1] ss:$4 sm:$0xff] %v2050
        %s2092 = scalar_lea.vmem [#allocation1], 1
        %2093 = vst [vmem:[%s2092] ss:$4 sm:$0xff] %v2051
        %s2094 = scalar_lea.vmem [#allocation1], 2
        %2095 = vst [vmem:[%s2094] ss:$4 sm:$0xff] %v2052
        %s2096 = scalar_lea.vmem [#allocation1], 3
        %2097 = vst [vmem:[%s2096] ss:$4 sm:$0xff] %v2053
        %s2098 = scalar_lea.vmem [#allocation1], 32
        %2099 = vst [vmem:[%s2098] ss:$4 sm:$0xff] %v2054
        %s2100 = scalar_lea.vmem [#allocation1], 33
        %2101 = vst [vmem:[%s2100] ss:$4 sm:$0xff] %v2055
        %s2102 = scalar_lea.vmem [#allocation1], 34
        %2103 = vst [vmem:[%s2102] ss:$4 sm:$0xff] %v2056
        %s2104 = scalar_lea.vmem [#allocation1], 35
        %2105 = vst [vmem:[%s2104] ss:$4 sm:$0xff] %v2057
        %v2106 = vld.sshfl [vmem:[#allocation1] sm:$0xff pattern:$0x73625140]
        %v2107 = vld.sshfl [vmem:[#allocation1 + $0x20] sm:$0xff pattern:$0x73625140]
        %2108 = vst [vmem:[#allocation1] ss:$4 sm:$0xff] %v2058
        %2109 = vst [vmem:[%s2092] ss:$4 sm:$0xff] %v2059
        %2110 = vst [vmem:[%s2094] ss:$4 sm:$0xff] %v2060
        %2111 = vst [vmem:[%s2096] ss:$4 sm:$0xff] %v2061
        %2112 = vst [vmem:[%s2098] ss:$4 sm:$0xff] %v2062
        %2113 = vst [vmem:[%s2100] ss:$4 sm:$0xff] %v2063
        %2114 = vst [vmem:[%s2102] ss:$4 sm:$0xff] %v2064
        %2115 = vst [vmem:[%s2104] ss:$4 sm:$0xff] %v2065
        %v2116 = vld.sshfl [vmem:[#allocation1] sm:$0xff pattern:$0x73625140]
        %v2117 = vld.sshfl [vmem:[#allocation1 + $0x20] sm:$0xff pattern:$0x73625140]
        %v2118 = vsel %vm1055, %v2106, 0
        %v2120 = vsel %vm1055, %v2107, 0
        %v2122 = vsel %vm1055, %v2116, 0
        %v2124 = vsel %vm1055, %v2117, 0
        %2126 = vmatpush.msra.mxu0 0.0
        %2127 = vmatpush.msra.mxu0 0.0
        %2128 = vmatpush.msra.mxu0 0.0
        %2129 = vmatpush.msra.mxu0 0.0
        %2130 = vmatpush.msra.mxu0 0.0
        %2131 = vmatpush.msra.mxu0 0.0
        %2132 = vmatpush.msra.mxu0 0.0
        %2133 = vmatpush.msra.mxu0 0.0
        %2134 = vmatpush.msra.mxu0 %v2074
        %2135 = vmatpush.msra.mxu0 %v2073
        %2136 = vmatpush.msra.mxu0 %v2072
        %2137 = vmatpush.msra.mxu0 %v2071
        %2138 = vmatpush.msra.mxu0 %v2070
        %2139 = vmatpush.msra.mxu0 %v2069
        %2140 = vmatpush.msra.mxu0 %v2068
        %2141 = vmatpush.msra.mxu0 %v2067
        %2142 = vmatmul.f32.gmra.mxu0 %v2118
        %v2143 = vpop.f32.mrf.mxu0
        %v2144 = vadd.f32 0.0, %v2143
        %2145 = vmatmul.f32.gmra.mxu0 %v2120
        %v2146 = vpop.f32.mrf.mxu0
        %v2147 = vadd.f32 0.0, %v2146
        %2148 = vmatmul.f32.gmra.mxu0 %v2122
        %v2149 = vpop.f32.mrf.mxu0
        %v2150 = vadd.f32 0.0, %v2149
        %2151 = vmatmul.f32.gmra.mxu0 %v2124
        %v2152 = vpop.f32.mrf.mxu0
        %v2153 = vadd.f32 0.0, %v2152
        %2154 = vdwg.mxu0
        %v2155 = vadd.f32 %v2046, %v2144
        %v2156 = vadd.f32 %v2047, %v2147
        %v2157 = vadd.f32 %v2048, %v2150
        %v2158 = vadd.f32 %v2049, %v2153
        %s2159 = scalar_lea.vmem [#allocation2], 62
        %v2160 = vld [vmem:[%s2159] sm:$0x3]
        %v2161 = vld [vmem:[%s2159 + $0x2] sm:$0x3]
        %v2162 = vld [vmem:[%s2159 + $0x4] sm:$0x3]
        %v2163 = vld [vmem:[%s2159 + $0x6] sm:$0x3]
        %v2164 = vld [vmem:[%s2159 + $0xa] sm:$0x3]
        %v2165 = vld [vmem:[%s2159 + $0xc] sm:$0x3]
        %v2166 = vld [vmem:[%s2159 + $0xe] sm:$0x3]
        %v2167 = vld [vmem:[%s2159 + $0x10] sm:$0x3]
        %v2168 = vld [vmem:[%s2159 + $0x14] sm:$0x3]
        %v2169 = vld [vmem:[%s2159 + $0x16] sm:$0x3]
        %v2170 = vld [vmem:[%s2159 + $0x18] sm:$0x3]
        %v2171 = vld [vmem:[%s2159 + $0x1a] sm:$0x3]
        %v2172 = vld [vmem:[%s2159 + $0x1e] sm:$0x3]
        %v2173 = vld [vmem:[%s2159 + $0x20] sm:$0x3]
        %v2174 = vld [vmem:[%s2159 + $0x22] sm:$0x3]
        %v2175 = vld [vmem:[%s2159 + $0x24] sm:$0x3]
        %s2176 = scalar_lea.vmem %s3, 704
        %v2177 = vld [vmem:[%s2176] sm:$0xff]
        %v2178 = vld [vmem:[%s2176 + $0x8] sm:$0xff]
        %v2179 = vld [vmem:[%s2176 + $0x10] sm:$0xff]
        %v2180 = vld [vmem:[%s2176 + $0x18] sm:$0xff]
        %v2181 = vld [vmem:[%s2176 + $0x20] sm:$0xff]
        %v2182 = vld [vmem:[%s2176 + $0x28] sm:$0xff]
        %v2183 = vld [vmem:[%s2176 + $0x30] sm:$0xff]
        %v2184 = vld [vmem:[%s2176 + $0x38] sm:$0xff]
        %2201 = vst [vmem:[#allocation1] ss:$4 sm:$0xff] %v2160
        %s2202 = scalar_lea.vmem [#allocation1], 1
        %2203 = vst [vmem:[%s2202] ss:$4 sm:$0xff] %v2161
        %s2204 = scalar_lea.vmem [#allocation1], 2
        %2205 = vst [vmem:[%s2204] ss:$4 sm:$0xff] %v2162
        %s2206 = scalar_lea.vmem [#allocation1], 3
        %2207 = vst [vmem:[%s2206] ss:$4 sm:$0xff] %v2163
        %s2208 = scalar_lea.vmem [#allocation1], 32
        %2209 = vst [vmem:[%s2208] ss:$4 sm:$0xff] %v2164
        %s2210 = scalar_lea.vmem [#allocation1], 33
        %2211 = vst [vmem:[%s2210] ss:$4 sm:$0xff] %v2165
        %s2212 = scalar_lea.vmem [#allocation1], 34
        %2213 = vst [vmem:[%s2212] ss:$4 sm:$0xff] %v2166
        %s2214 = scalar_lea.vmem [#allocation1], 35
        %2215 = vst [vmem:[%s2214] ss:$4 sm:$0xff] %v2167
        %v2216 = vld.sshfl [vmem:[#allocation1] sm:$0xff pattern:$0x73625140]
        %v2217 = vld.sshfl [vmem:[#allocation1 + $0x20] sm:$0xff pattern:$0x73625140]
        %2218 = vst [vmem:[#allocation1] ss:$4 sm:$0xff] %v2168
        %2219 = vst [vmem:[%s2202] ss:$4 sm:$0xff] %v2169
        %2220 = vst [vmem:[%s2204] ss:$4 sm:$0xff] %v2170
        %2221 = vst [vmem:[%s2206] ss:$4 sm:$0xff] %v2171
        %2222 = vst [vmem:[%s2208] ss:$4 sm:$0xff] %v2172
        %2223 = vst [vmem:[%s2210] ss:$4 sm:$0xff] %v2173
        %2224 = vst [vmem:[%s2212] ss:$4 sm:$0xff] %v2174
        %2225 = vst [vmem:[%s2214] ss:$4 sm:$0xff] %v2175
        %v2226 = vld.sshfl [vmem:[#allocation1] sm:$0xff pattern:$0x73625140]
        %v2227 = vld.sshfl [vmem:[#allocation1 + $0x20] sm:$0xff pattern:$0x73625140]
        %v2228 = vsel %vm1055, %v2216, 0
        %v2230 = vsel %vm1055, %v2217, 0
        %v2232 = vsel %vm1055, %v2226, 0
        %v2234 = vsel %vm1055, %v2227, 0
        %2236 = vmatpush.msra.mxu0 0.0
        %2237 = vmatpush.msra.mxu0 0.0
        %2238 = vmatpush.msra.mxu0 0.0
        %2239 = vmatpush.msra.mxu0 0.0
        %2240 = vmatpush.msra.mxu0 0.0
        %2241 = vmatpush.msra.mxu0 0.0
        %2242 = vmatpush.msra.mxu0 0.0
        %2243 = vmatpush.msra.mxu0 0.0
        %2244 = vmatpush.msra.mxu0 %v2184
        %2245 = vmatpush.msra.mxu0 %v2183
        %2246 = vmatpush.msra.mxu0 %v2182
        %2247 = vmatpush.msra.mxu0 %v2181
        %2248 = vmatpush.msra.mxu0 %v2180
        %2249 = vmatpush.msra.mxu0 %v2179
        %2250 = vmatpush.msra.mxu0 %v2178
        %2251 = vmatpush.msra.mxu0 %v2177
        %2252 = vmatmul.f32.gmra.mxu0 %v2228
        %v2253 = vpop.f32.mrf.mxu0
        %v2254 = vadd.f32 0.0, %v2253
        %2255 = vmatmul.f32.gmra.mxu0 %v2230
        %v2256 = vpop.f32.mrf.mxu0
        %v2257 = vadd.f32 0.0, %v2256
        %2258 = vmatmul.f32.gmra.mxu0 %v2232
        %v2259 = vpop.f32.mrf.mxu0
        %v2260 = vadd.f32 0.0, %v2259
        %2261 = vmatmul.f32.gmra.mxu0 %v2234
        %v2262 = vpop.f32.mrf.mxu0
        %v2263 = vadd.f32 0.0, %v2262
        %2264 = vdwg.mxu0
        %v2265 = vadd.f32 %v2155, %v2254
        %v2266 = vadd.f32 %v2156, %v2257
        %v2267 = vadd.f32 %v2157, %v2260
        %v2268 = vadd.f32 %v2158, %v2263
        %s2269 = scalar_lea.vmem [#allocation2], 110
        %v2270 = vld [vmem:[%s2269] sm:$0x3]
        %v2271 = vld [vmem:[%s2269 + $0x2] sm:$0x3]
        %v2272 = vld [vmem:[%s2269 + $0x4] sm:$0x3]
        %v2273 = vld [vmem:[%s2269 + $0x6] sm:$0x3]
        %v2274 = vld [vmem:[%s2269 + $0xa] sm:$0x3]
        %v2275 = vld [vmem:[%s2269 + $0xc] sm:$0x3]
        %v2276 = vld [vmem:[%s2269 + $0xe] sm:$0x3]
        %v2277 = vld [vmem:[%s2269 + $0x10] sm:$0x3]
        %v2278 = vld [vmem:[%s2269 + $0x14] sm:$0x3]
        %v2279 = vld [vmem:[%s2269 + $0x16] sm:$0x3]
        %v2280 = vld [vmem:[%s2269 + $0x18] sm:$0x3]
        %v2281 = vld [vmem:[%s2269 + $0x1a] sm:$0x3]
        %v2282 = vld [vmem:[%s2269 + $0x1e] sm:$0x3]
        %v2283 = vld [vmem:[%s2269 + $0x20] sm:$0x3]
        %v2284 = vld [vmem:[%s2269 + $0x22] sm:$0x3]
        %v2285 = vld [vmem:[%s2269 + $0x24] sm:$0x3]
        %s2286 = scalar_lea.vmem %s3, 768
        %v2287 = vld [vmem:[%s2286] sm:$0xff]
        %v2288 = vld [vmem:[%s2286 + $0x8] sm:$0xff]
        %v2289 = vld [vmem:[%s2286 + $0x10] sm:$0xff]
        %v2290 = vld [vmem:[%s2286 + $0x18] sm:$0xff]
        %v2291 = vld [vmem:[%s2286 + $0x20] sm:$0xff]
        %v2292 = vld [vmem:[%s2286 + $0x28] sm:$0xff]
        %v2293 = vld [vmem:[%s2286 + $0x30] sm:$0xff]
        %v2294 = vld [vmem:[%s2286 + $0x38] sm:$0xff]
        %2311 = vst [vmem:[#allocation1] ss:$4 sm:$0xff] %v2270
        %s2312 = scalar_lea.vmem [#allocation1], 1
        %2313 = vst [vmem:[%s2312] ss:$4 sm:$0xff] %v2271
        %s2314 = scalar_lea.vmem [#allocation1], 2
        %2315 = vst [vmem:[%s2314] ss:$4 sm:$0xff] %v2272
        %s2316 = scalar_lea.vmem [#allocation1], 3
        %2317 = vst [vmem:[%s2316] ss:$4 sm:$0xff] %v2273
        %s2318 = scalar_lea.vmem [#allocation1], 32
        %2319 = vst [vmem:[%s2318] ss:$4 sm:$0xff] %v2274
        %s2320 = scalar_lea.vmem [#allocation1], 33
        %2321 = vst [vmem:[%s2320] ss:$4 sm:$0xff] %v2275
        %s2322 = scalar_lea.vmem [#allocation1], 34
        %2323 = vst [vmem:[%s2322] ss:$4 sm:$0xff] %v2276
        %s2324 = scalar_lea.vmem [#allocation1], 35
        %2325 = vst [vmem:[%s2324] ss:$4 sm:$0xff] %v2277
        %v2326 = vld.sshfl [vmem:[#allocation1] sm:$0xff pattern:$0x73625140]
        %v2327 = vld.sshfl [vmem:[#allocation1 + $0x20] sm:$0xff pattern:$0x73625140]
        %2328 = vst [vmem:[#allocation1] ss:$4 sm:$0xff] %v2278
        %2329 = vst [vmem:[%s2312] ss:$4 sm:$0xff] %v2279
        %2330 = vst [vmem:[%s2314] ss:$4 sm:$0xff] %v2280
        %2331 = vst [vmem:[%s2316] ss:$4 sm:$0xff] %v2281
        %2332 = vst [vmem:[%s2318] ss:$4 sm:$0xff] %v2282
        %2333 = vst [vmem:[%s2320] ss:$4 sm:$0xff] %v2283
        %2334 = vst [vmem:[%s2322] ss:$4 sm:$0xff] %v2284
        %2335 = vst [vmem:[%s2324] ss:$4 sm:$0xff] %v2285
        %v2336 = vld.sshfl [vmem:[#allocation1] sm:$0xff pattern:$0x73625140]
        %v2337 = vld.sshfl [vmem:[#allocation1 + $0x20] sm:$0xff pattern:$0x73625140]
        %v2338 = vsel %vm1055, %v2326, 0
        %v2340 = vsel %vm1055, %v2327, 0
        %v2342 = vsel %vm1055, %v2336, 0
        %v2344 = vsel %vm1055, %v2337, 0
        %2346 = vmatpush.msra.mxu0 0.0
        %2347 = vmatpush.msra.mxu0 0.0
        %2348 = vmatpush.msra.mxu0 0.0
        %2349 = vmatpush.msra.mxu0 0.0
        %2350 = vmatpush.msra.mxu0 0.0
        %2351 = vmatpush.msra.mxu0 0.0
        %2352 = vmatpush.msra.mxu0 0.0
        %2353 = vmatpush.msra.mxu0 0.0
        %2354 = vmatpush.msra.mxu0 %v2294
        %2355 = vmatpush.msra.mxu0 %v2293
        %2356 = vmatpush.msra.mxu0 %v2292
        %2357 = vmatpush.msra.mxu0 %v2291
        %2358 = vmatpush.msra.mxu0 %v2290
        %2359 = vmatpush.msra.mxu0 %v2289
        %2360 = vmatpush.msra.mxu0 %v2288
        %2361 = vmatpush.msra.mxu0 %v2287
        %2362 = vmatmul.f32.gmra.mxu0 %v2338
        %v2363 = vpop.f32.mrf.mxu0
        %v2364 = vadd.f32 0.0, %v2363
        %2365 = vmatmul.f32.gmra.mxu0 %v2340
        %v2366 = vpop.f32.mrf.mxu0
        %v2367 = vadd.f32 0.0, %v2366
        %2368 = vmatmul.f32.gmra.mxu0 %v2342
        %v2369 = vpop.f32.mrf.mxu0
        %v2370 = vadd.f32 0.0, %v2369
        %2371 = vmatmul.f32.gmra.mxu0 %v2344
        %v2372 = vpop.f32.mrf.mxu0
        %v2373 = vadd.f32 0.0, %v2372
        %2374 = vdwg.mxu0
        %v2375 = vadd.f32 %v2265, %v2364
        %v2376 = vadd.f32 %v2266, %v2367
        %v2377 = vadd.f32 %v2267, %v2370
        %v2378 = vadd.f32 %v2268, %v2373
        %s2379 = scalar_lea.vmem [#allocation2], 160
        %v2380 = vld [vmem:[%s2379] sm:$0x3]
        %v2381 = vld [vmem:[%s2379 + $0x2] sm:$0x3]
        %v2382 = vld [vmem:[%s2379 + $0x4] sm:$0x3]
        %v2383 = vld [vmem:[%s2379 + $0x6] sm:$0x3]
        %v2384 = vld [vmem:[%s2379 + $0xa] sm:$0x3]
        %v2385 = vld [vmem:[%s2379 + $0xc] sm:$0x3]
        %v2386 = vld [vmem:[%s2379 + $0xe] sm:$0x3]
        %v2387 = vld [vmem:[%s2379 + $0x10] sm:$0x3]
        %v2388 = vld [vmem:[%s2379 + $0x14] sm:$0x3]
        %v2389 = vld [vmem:[%s2379 + $0x16] sm:$0x3]
        %v2390 = vld [vmem:[%s2379 + $0x18] sm:$0x3]
        %v2391 = vld [vmem:[%s2379 + $0x1a] sm:$0x3]
        %v2392 = vld [vmem:[%s2379 + $0x1e] sm:$0x3]
        %v2393 = vld [vmem:[%s2379 + $0x20] sm:$0x3]
        %v2394 = vld [vmem:[%s2379 + $0x22] sm:$0x3]
        %v2395 = vld [vmem:[%s2379 + $0x24] sm:$0x3]
        %s2396 = scalar_lea.vmem %s3, 832
        %v2397 = vld [vmem:[%s2396] sm:$0xff]
        %v2398 = vld [vmem:[%s2396 + $0x8] sm:$0xff]
        %v2399 = vld [vmem:[%s2396 + $0x10] sm:$0xff]
        %v2400 = vld [vmem:[%s2396 + $0x18] sm:$0xff]
        %v2401 = vld [vmem:[%s2396 + $0x20] sm:$0xff]
        %v2402 = vld [vmem:[%s2396 + $0x28] sm:$0xff]
        %v2403 = vld [vmem:[%s2396 + $0x30] sm:$0xff]
        %v2404 = vld [vmem:[%s2396 + $0x38] sm:$0xff]
        %2421 = vst [vmem:[#allocation1] ss:$4 sm:$0xff] %v2380
        %s2422 = scalar_lea.vmem [#allocation1], 1
        %2423 = vst [vmem:[%s2422] ss:$4 sm:$0xff] %v2381
        %s2424 = scalar_lea.vmem [#allocation1], 2
        %2425 = vst [vmem:[%s2424] ss:$4 sm:$0xff] %v2382
        %s2426 = scalar_lea.vmem [#allocation1], 3
        %2427 = vst [vmem:[%s2426] ss:$4 sm:$0xff] %v2383
        %s2428 = scalar_lea.vmem [#allocation1], 32
        %2429 = vst [vmem:[%s2428] ss:$4 sm:$0xff] %v2384
        %s2430 = scalar_lea.vmem [#allocation1], 33
        %2431 = vst [vmem:[%s2430] ss:$4 sm:$0xff] %v2385
        %s2432 = scalar_lea.vmem [#allocation1], 34
        %2433 = vst [vmem:[%s2432] ss:$4 sm:$0xff] %v2386
        %s2434 = scalar_lea.vmem [#allocation1], 35
        %2435 = vst [vmem:[%s2434] ss:$4 sm:$0xff] %v2387
        %v2436 = vld.sshfl [vmem:[#allocation1] sm:$0xff pattern:$0x73625140]
        %v2437 = vld.sshfl [vmem:[#allocation1 + $0x20] sm:$0xff pattern:$0x73625140]
        %2438 = vst [vmem:[#allocation1] ss:$4 sm:$0xff] %v2388
        %2439 = vst [vmem:[%s2422] ss:$4 sm:$0xff] %v2389
        %2440 = vst [vmem:[%s2424] ss:$4 sm:$0xff] %v2390
        %2441 = vst [vmem:[%s2426] ss:$4 sm:$0xff] %v2391
        %2442 = vst [vmem:[%s2428] ss:$4 sm:$0xff] %v2392
        %2443 = vst [vmem:[%s2430] ss:$4 sm:$0xff] %v2393
        %2444 = vst [vmem:[%s2432] ss:$4 sm:$0xff] %v2394
        %2445 = vst [vmem:[%s2434] ss:$4 sm:$0xff] %v2395
        %v2446 = vld.sshfl [vmem:[#allocation1] sm:$0xff pattern:$0x73625140]
        %v2447 = vld.sshfl [vmem:[#allocation1 + $0x20] sm:$0xff pattern:$0x73625140]
        %v2448 = vsel %vm1055, %v2436, 0
        %v2450 = vsel %vm1055, %v2437, 0
        %v2452 = vsel %vm1055, %v2446, 0
        %v2454 = vsel %vm1055, %v2447, 0
        %2456 = vmatpush.msra.mxu0 0.0
        %2457 = vmatpush.msra.mxu0 0.0
        %2458 = vmatpush.msra.mxu0 0.0
        %2459 = vmatpush.msra.mxu0 0.0
        %2460 = vmatpush.msra.mxu0 0.0
        %2461 = vmatpush.msra.mxu0 0.0
        %2462 = vmatpush.msra.mxu0 0.0
        %2463 = vmatpush.msra.mxu0 0.0
        %2464 = vmatpush.msra.mxu0 %v2404
        %2465 = vmatpush.msra.mxu0 %v2403
        %2466 = vmatpush.msra.mxu0 %v2402
        %2467 = vmatpush.msra.mxu0 %v2401
        %2468 = vmatpush.msra.mxu0 %v2400
        %2469 = vmatpush.msra.mxu0 %v2399
        %2470 = vmatpush.msra.mxu0 %v2398
        %2471 = vmatpush.msra.mxu0 %v2397
        %2472 = vmatmul.f32.gmra.mxu0 %v2448
        %v2473 = vpop.f32.mrf.mxu0
        %v2474 = vadd.f32 0.0, %v2473
        %2475 = vmatmul.f32.gmra.mxu0 %v2450
        %v2476 = vpop.f32.mrf.mxu0
        %v2477 = vadd.f32 0.0, %v2476
        %2478 = vmatmul.f32.gmra.mxu0 %v2452
        %v2479 = vpop.f32.mrf.mxu0
        %v2480 = vadd.f32 0.0, %v2479
        %2481 = vmatmul.f32.gmra.mxu0 %v2454
        %v2482 = vpop.f32.mrf.mxu0
        %v2483 = vadd.f32 0.0, %v2482
        %2484 = vdwg.mxu0
        %v2485 = vadd.f32 %v2375, %v2474
        %v2486 = vadd.f32 %v2376, %v2477
        %v2487 = vadd.f32 %v2377, %v2480
        %v2488 = vadd.f32 %v2378, %v2483
        %s2489 = scalar_lea.vmem [#allocation2], 112
        %v2490 = vld [vmem:[%s2489] sm:$0x3]
        %v2491 = vld [vmem:[%s2489 + $0x2] sm:$0x3]
        %v2492 = vld [vmem:[%s2489 + $0x4] sm:$0x3]
        %v2493 = vld [vmem:[%s2489 + $0x6] sm:$0x3]
        %v2494 = vld [vmem:[%s2489 + $0xa] sm:$0x3]
        %v2495 = vld [vmem:[%s2489 + $0xc] sm:$0x3]
        %v2496 = vld [vmem:[%s2489 + $0xe] sm:$0x3]
        %v2497 = vld [vmem:[%s2489 + $0x10] sm:$0x3]
        %v2498 = vld [vmem:[%s2489 + $0x14] sm:$0x3]
        %v2499 = vld [vmem:[%s2489 + $0x16] sm:$0x3]
        %v2500 = vld [vmem:[%s2489 + $0x18] sm:$0x3]
        %v2501 = vld [vmem:[%s2489 + $0x1a] sm:$0x3]
        %v2502 = vld [vmem:[%s2489 + $0x1e] sm:$0x3]
        %v2503 = vld [vmem:[%s2489 + $0x20] sm:$0x3]
        %v2504 = vld [vmem:[%s2489 + $0x22] sm:$0x3]
        %v2505 = vld [vmem:[%s2489 + $0x24] sm:$0x3]
        %s2506 = scalar_lea.vmem %s3, 896
        %v2507 = vld [vmem:[%s2506] sm:$0xff]
        %v2508 = vld [vmem:[%s2506 + $0x8] sm:$0xff]
        %v2509 = vld [vmem:[%s2506 + $0x10] sm:$0xff]
        %v2510 = vld [vmem:[%s2506 + $0x18] sm:$0xff]
        %v2511 = vld [vmem:[%s2506 + $0x20] sm:$0xff]
        %v2512 = vld [vmem:[%s2506 + $0x28] sm:$0xff]
        %v2513 = vld [vmem:[%s2506 + $0x30] sm:$0xff]
        %v2514 = vld [vmem:[%s2506 + $0x38] sm:$0xff]
        %2531 = vst [vmem:[#allocation1] ss:$4 sm:$0xff] %v2490
        %s2532 = scalar_lea.vmem [#allocation1], 1
        %2533 = vst [vmem:[%s2532] ss:$4 sm:$0xff] %v2491
        %s2534 = scalar_lea.vmem [#allocation1], 2
        %2535 = vst [vmem:[%s2534] ss:$4 sm:$0xff] %v2492
        %s2536 = scalar_lea.vmem [#allocation1], 3
        %2537 = vst [vmem:[%s2536] ss:$4 sm:$0xff] %v2493
        %s2538 = scalar_lea.vmem [#allocation1], 32
        %2539 = vst [vmem:[%s2538] ss:$4 sm:$0xff] %v2494
        %s2540 = scalar_lea.vmem [#allocation1], 33
        %2541 = vst [vmem:[%s2540] ss:$4 sm:$0xff] %v2495
        %s2542 = scalar_lea.vmem [#allocation1], 34
        %2543 = vst [vmem:[%s2542] ss:$4 sm:$0xff] %v2496
        %s2544 = scalar_lea.vmem [#allocation1], 35
        %2545 = vst [vmem:[%s2544] ss:$4 sm:$0xff] %v2497
        %v2546 = vld.sshfl [vmem:[#allocation1] sm:$0xff pattern:$0x73625140]
        %v2547 = vld.sshfl [vmem:[#allocation1 + $0x20] sm:$0xff pattern:$0x73625140]
        %2548 = vst [vmem:[#allocation1] ss:$4 sm:$0xff] %v2498
        %2549 = vst [vmem:[%s2532] ss:$4 sm:$0xff] %v2499
        %2550 = vst [vmem:[%s2534] ss:$4 sm:$0xff] %v2500
        %2551 = vst [vmem:[%s2536] ss:$4 sm:$0xff] %v2501
        %2552 = vst [vmem:[%s2538] ss:$4 sm:$0xff] %v2502
        %2553 = vst [vmem:[%s2540] ss:$4 sm:$0xff] %v2503
        %2554 = vst [vmem:[%s2542] ss:$4 sm:$0xff] %v2504
        %2555 = vst [vmem:[%s2544] ss:$4 sm:$0xff] %v2505
        %v2556 = vld.sshfl [vmem:[#allocation1] sm:$0xff pattern:$0x73625140]
        %v2557 = vld.sshfl [vmem:[#allocation1 + $0x20] sm:$0xff pattern:$0x73625140]
        %v2558 = vsel %vm1055, %v2546, 0
        %v2560 = vsel %vm1055, %v2547, 0
        %v2562 = vsel %vm1055, %v2556, 0
        %v2564 = vsel %vm1055, %v2557, 0
        %2566 = vmatpush.msra.mxu0 0.0
        %2567 = vmatpush.msra.mxu0 0.0
        %2568 = vmatpush.msra.mxu0 0.0
        %2569 = vmatpush.msra.mxu0 0.0
        %2570 = vmatpush.msra.mxu0 0.0
        %2571 = vmatpush.msra.mxu0 0.0
        %2572 = vmatpush.msra.mxu0 0.0
        %2573 = vmatpush.msra.mxu0 0.0
        %2574 = vmatpush.msra.mxu0 %v2514
        %2575 = vmatpush.msra.mxu0 %v2513
        %2576 = vmatpush.msra.mxu0 %v2512
        %2577 = vmatpush.msra.mxu0 %v2511
        %2578 = vmatpush.msra.mxu0 %v2510
        %2579 = vmatpush.msra.mxu0 %v2509
        %2580 = vmatpush.msra.mxu0 %v2508
        %2581 = vmatpush.msra.mxu0 %v2507
        %2582 = vmatmul.f32.gmra.mxu0 %v2558
        %v2583 = vpop.f32.mrf.mxu0
        %v2584 = vadd.f32 0.0, %v2583
        %2585 = vmatmul.f32.gmra.mxu0 %v2560
        %v2586 = vpop.f32.mrf.mxu0
        %v2587 = vadd.f32 0.0, %v2586
        %2588 = vmatmul.f32.gmra.mxu0 %v2562
        %v2589 = vpop.f32.mrf.mxu0
        %v2590 = vadd.f32 0.0, %v2589
        %2591 = vmatmul.f32.gmra.mxu0 %v2564
        %v2592 = vpop.f32.mrf.mxu0
        %v2593 = vadd.f32 0.0, %v2592
        %2594 = vdwg.mxu0
        %v2595 = vadd.f32 %v2485, %v2584
        %v2596 = vadd.f32 %v2486, %v2587
        %v2597 = vadd.f32 %v2487, %v2590
        %v2598 = vadd.f32 %v2488, %v2593
        %s2599 = scalar_lea.vmem [#allocation2], 162
        %v2600 = vld [vmem:[%s2599] sm:$0x3]
        %v2601 = vld [vmem:[%s2599 + $0x2] sm:$0x3]
        %v2602 = vld [vmem:[%s2599 + $0x4] sm:$0x3]
        %v2603 = vld [vmem:[%s2599 + $0x6] sm:$0x3]
        %v2604 = vld [vmem:[%s2599 + $0xa] sm:$0x3]
        %v2605 = vld [vmem:[%s2599 + $0xc] sm:$0x3]
        %v2606 = vld [vmem:[%s2599 + $0xe] sm:$0x3]
        %v2607 = vld [vmem:[%s2599 + $0x10] sm:$0x3]
        %v2608 = vld [vmem:[%s2599 + $0x14] sm:$0x3]
        %v2609 = vld [vmem:[%s2599 + $0x16] sm:$0x3]
        %v2610 = vld [vmem:[%s2599 + $0x18] sm:$0x3]
        %v2611 = vld [vmem:[%s2599 + $0x1a] sm:$0x3]
        %v2612 = vld [vmem:[%s2599 + $0x1e] sm:$0x3]
        %v2613 = vld [vmem:[%s2599 + $0x20] sm:$0x3]
        %v2614 = vld [vmem:[%s2599 + $0x22] sm:$0x3]
        %v2615 = vld [vmem:[%s2599 + $0x24] sm:$0x3]
        %s2616 = scalar_lea.vmem %s3, 960
        %v2617 = vld [vmem:[%s2616] sm:$0xff]
        %v2618 = vld [vmem:[%s2616 + $0x8] sm:$0xff]
        %v2619 = vld [vmem:[%s2616 + $0x10] sm:$0xff]
        %v2620 = vld [vmem:[%s2616 + $0x18] sm:$0xff]
        %v2621 = vld [vmem:[%s2616 + $0x20] sm:$0xff]
        %v2622 = vld [vmem:[%s2616 + $0x28] sm:$0xff]
        %v2623 = vld [vmem:[%s2616 + $0x30] sm:$0xff]
        %v2624 = vld [vmem:[%s2616 + $0x38] sm:$0xff]
        %2641 = vst [vmem:[#allocation1] ss:$4 sm:$0xff] %v2600
        %s2642 = scalar_lea.vmem [#allocation1], 1
        %2643 = vst [vmem:[%s2642] ss:$4 sm:$0xff] %v2601
        %s2644 = scalar_lea.vmem [#allocation1], 2
        %2645 = vst [vmem:[%s2644] ss:$4 sm:$0xff] %v2602
        %s2646 = scalar_lea.vmem [#allocation1], 3
        %2647 = vst [vmem:[%s2646] ss:$4 sm:$0xff] %v2603
        %s2648 = scalar_lea.vmem [#allocation1], 32
        %2649 = vst [vmem:[%s2648] ss:$4 sm:$0xff] %v2604
        %s2650 = scalar_lea.vmem [#allocation1], 33
        %2651 = vst [vmem:[%s2650] ss:$4 sm:$0xff] %v2605
        %s2652 = scalar_lea.vmem [#allocation1], 34
        %2653 = vst [vmem:[%s2652] ss:$4 sm:$0xff] %v2606
        %s2654 = scalar_lea.vmem [#allocation1], 35
        %2655 = vst [vmem:[%s2654] ss:$4 sm:$0xff] %v2607
        %v2656 = vld.sshfl [vmem:[#allocation1] sm:$0xff pattern:$0x73625140]
        %v2657 = vld.sshfl [vmem:[#allocation1 + $0x20] sm:$0xff pattern:$0x73625140]
        %2658 = vst [vmem:[#allocation1] ss:$4 sm:$0xff] %v2608
        %2659 = vst [vmem:[%s2642] ss:$4 sm:$0xff] %v2609
        %2660 = vst [vmem:[%s2644] ss:$4 sm:$0xff] %v2610
        %2661 = vst [vmem:[%s2646] ss:$4 sm:$0xff] %v2611
        %2662 = vst [vmem:[%s2648] ss:$4 sm:$0xff] %v2612
        %2663 = vst [vmem:[%s2650] ss:$4 sm:$0xff] %v2613
        %2664 = vst [vmem:[%s2652] ss:$4 sm:$0xff] %v2614
        %2665 = vst [vmem:[%s2654] ss:$4 sm:$0xff] %v2615
        %v2666 = vld.sshfl [vmem:[#allocation1] sm:$0xff pattern:$0x73625140]
        %v2667 = vld.sshfl [vmem:[#allocation1 + $0x20] sm:$0xff pattern:$0x73625140]
        %v2668 = vsel %vm1055, %v2656, 0
        %v2670 = vsel %vm1055, %v2657, 0
        %v2672 = vsel %vm1055, %v2666, 0
        %v2674 = vsel %vm1055, %v2667, 0
        %2676 = vmatpush.msra.mxu0 0.0
        %2677 = vmatpush.msra.mxu0 0.0
        %2678 = vmatpush.msra.mxu0 0.0
        %2679 = vmatpush.msra.mxu0 0.0
        %2680 = vmatpush.msra.mxu0 0.0
        %2681 = vmatpush.msra.mxu0 0.0
        %2682 = vmatpush.msra.mxu0 0.0
        %2683 = vmatpush.msra.mxu0 0.0
        %2684 = vmatpush.msra.mxu0 %v2624
        %2685 = vmatpush.msra.mxu0 %v2623
        %2686 = vmatpush.msra.mxu0 %v2622
        %2687 = vmatpush.msra.mxu0 %v2621
        %2688 = vmatpush.msra.mxu0 %v2620
        %2689 = vmatpush.msra.mxu0 %v2619
        %2690 = vmatpush.msra.mxu0 %v2618
        %2691 = vmatpush.msra.mxu0 %v2617
        %2692 = vmatmul.f32.gmra.mxu0 %v2668
        %v2693 = vpop.f32.mrf.mxu0
        %v2694 = vadd.f32 0.0, %v2693
        %2695 = vmatmul.f32.gmra.mxu0 %v2670
        %v2696 = vpop.f32.mrf.mxu0
        %v2697 = vadd.f32 0.0, %v2696
        %2698 = vmatmul.f32.gmra.mxu0 %v2672
        %v2699 = vpop.f32.mrf.mxu0
        %v2700 = vadd.f32 0.0, %v2699
        %2701 = vmatmul.f32.gmra.mxu0 %v2674
        %v2702 = vpop.f32.mrf.mxu0
        %v2703 = vadd.f32 0.0, %v2702
        %2704 = vdwg.mxu0
        %v2705 = vadd.f32 %v2595, %v2694
        %v2706 = vadd.f32 %v2596, %v2697
        %v2707 = vadd.f32 %v2597, %v2700
        %v2708 = vadd.f32 %v2598, %v2703
        %v2709 = vld [vmem:[%s4] sm:$0x1]
        %v2711 = vperm.slane %v2709, 0
        %v2713 = vadd.f32 %v2705, %v2711
        %v2714 = vadd.f32 %v2706, %v2711
        %v2715 = vadd.f32 %v2707, %v2711
        %v2716 = vadd.f32 %v2708, %v2711
        %v2717 = vadd.f32 %v2713, %v2714
        %v2718 = vadd.f32 %v2717, %v2715
        %v2719 = vadd.f32 %v2718, %v2716
        %v2720 = vrot.slane %v2719, 4
        %v2721 = vadd.f32 %v2719, %v2720
        %v2722 = vrot.slane %v2721, 2
        %v2723 = vadd.f32 %v2721, %v2722
        %v2724 = vrot.slane %v2723, 1
        %v2725 = vadd.f32 %v2723, %v2724
        %v2726 = vrcp.pop 32.0
        %v2727 = vmul.f32 32.0, %v2726
        %v2728 = vsub.f32 1.0, %v2727
        %v2729 = vmul.f32 %v2726, %v2728
        %v2730 = vadd.f32 %v2726, %v2729
        %vm2731 = vweird.f32 %v2726
        %v2732 = vsel %vm2731, %v2726, %v2730
        %v2733 = vmul.f32 %v2725, %v2732
        %v2734 = vsub.f32 %v2713, %v2733
        %v2735 = vsub.f32 %v2714, %v2733
        %v2736 = vsub.f32 %v2715, %v2733
        %v2737 = vsub.f32 %v2716, %v2733
        %v2738 = vmul.f32 %v2734, %v2734
        %v2739 = vmul.f32 %v2735, %v2735
        %v2740 = vmul.f32 %v2736, %v2736
        %v2741 = vmul.f32 %v2737, %v2737
        %v2742 = vadd.f32 %v2738, %v2739
        %v2743 = vadd.f32 %v2742, %v2740
        %v2744 = vadd.f32 %v2743, %v2741
        %v2745 = vrot.slane %v2744, 4
        %v2746 = vadd.f32 %v2744, %v2745
        %v2747 = vrot.slane %v2746, 2
        %v2748 = vadd.f32 %v2746, %v2747
        %v2749 = vrot.slane %v2748, 1
        %v2750 = vadd.f32 %v2748, %v2749
        %v2751 = vmul.f32 %v2750, %v2732
        %v2752 = vadd.f32 %v2751, 1e-05
        %v2753 = vrsqrt.pop %v2752
        %v2754 = vmul.f32 %v2753, %v2752
        %v2755 = vmul.f32 %v2754, %v2753
        %v2756 = vmul.f32 0.5, %v2755
        %v2757 = vsub.f32 1.5, %v2756
        %v2758 = vmul.f32 %v2753, %v2757
        %vm2759 = vweird.f32 %v2752
        %vm2760 = vweird.f32 %v2753
        %vm2761 = vmor %vm2759, %vm2760
        %v2762 = vsel %vm2761, %v2753, %v2758
        %v2763 = vmul.f32 %v2734, %v2762
        %v2764 = vmul.f32 %v2735, %v2762
        %v2765 = vmul.f32 %v2736, %v2762
        %v2766 = vmul.f32 %v2737, %v2762
        %v2767 = vld [vmem:[%s5] sm:$0x1]
        %v2769 = vperm.slane %v2767, 0
        %v2771 = vmul.f32 %v2763, %v2769
        %v2772 = vmul.f32 %v2764, %v2769
        %v2773 = vmul.f32 %v2765, %v2769
        %v2774 = vmul.f32 %v2766, %v2769
        %v2775 = vld [vmem:[%s6] sm:$0x1]
        %v2777 = vperm.slane %v2775, 0
        %v2779 = vadd.f32 %v2771, %v2777
        %v2780 = vadd.f32 %v2772, %v2777
        %v2781 = vadd.f32 %v2773, %v2777
        %v2782 = vadd.f32 %v2774, %v2777
        %vm2783 = vcmp.gt.f32.partialorder %v2779, 0.0
        %vm2784 = vcmp.gt.f32.partialorder %v2780, 0.0
        %vm2785 = vcmp.gt.f32.partialorder %v2781, 0.0
        %vm2786 = vcmp.gt.f32.partialorder %v2782, 0.0
        %v2787 = vmul.f32 %v2779, 0.2
        %v2788 = vmul.f32 %v2780, 0.2
        %v2789 = vmul.f32 %v2781, 0.2
        %v2790 = vmul.f32 %v2782, 0.2
        %v2791 = vsel %vm2783, %v2779, %v2787
        %v2792 = vsel %vm2784, %v2780, %v2788
        %v2793 = vsel %vm2785, %v2781, %v2789
        %v2794 = vsel %vm2786, %v2782, %v2790
        %v2799 = vrot.slane %v2791, 2
        %v2800 = vrot.slane %v2791, 4
        %v2801 = vrot.slane %v2791, 6
        %v2802 = vrot.slane %v2792, 2
        %v2803 = vrot.slane %v2792, 4
        %v2804 = vrot.slane %v2792, 6
        %v2805 = vrot.slane %v2793, 2
        %v2806 = vrot.slane %v2793, 4
        %v2807 = vrot.slane %v2793, 6
        %v2808 = vrot.slane %v2794, 2
        %v2809 = vrot.slane %v2794, 4
        %v2810 = vrot.slane %v2794, 6
        %2823 = vst [vmem:[#allocation3] sm:$0x3] %v2791
        %2824 = vst [vmem:[#allocation3 + $0x2] sm:$0x3] %v2799
        %2825 = vst [vmem:[#allocation3 + $0x4] sm:$0x3] %v2800
        %2826 = vst [vmem:[#allocation3 + $0x6] sm:$0x3] %v2801
        %2827 = vst [vmem:[#allocation3 + $0x8] sm:$0x3] %v2792
        %2828 = vst [vmem:[#allocation3 + $0xa] sm:$0x3] %v2802
        %2829 = vst [vmem:[#allocation3 + $0xc] sm:$0x3] %v2803
        %2830 = vst [vmem:[#allocation3 + $0xe] sm:$0x3] %v2804
        %2831 = vst [vmem:[#allocation3 + $0x10] sm:$0x3] %v2793
        %2832 = vst [vmem:[#allocation3 + $0x12] sm:$0x3] %v2805
        %2833 = vst [vmem:[#allocation3 + $0x14] sm:$0x3] %v2806
        %2834 = vst [vmem:[#allocation3 + $0x16] sm:$0x3] %v2807
        %2835 = vst [vmem:[#allocation3 + $0x18] sm:$0x3] %v2794
        %2836 = vst [vmem:[#allocation3 + $0x1a] sm:$0x3] %v2808
        %2837 = vst [vmem:[#allocation3 + $0x1c] sm:$0x3] %v2809
        %2838 = vst [vmem:[#allocation3 + $0x1e] sm:$0x3] %v2810
        %2839 = vst [vmem:[#allocation4] sm:$0xff] 0.0
        %2840 = vst [vmem:[#allocation4 + $0x8] sm:$0xff] 0.0
      $region76: #{discriminator_forward.1} parent=71 // pred_fallthru
        _
      %v2841 = vld [vmem:[#allocation4] sm:$0xff]
      %v2842 = vld [vmem:[#allocation4 + $0x8] sm:$0xff]
      %s2843 = smul.u32 %s24, 4
      %s2844 = smul.u32 %s2843, 2
      %s2845 = scalar_lea.vmem [#allocation3], %s2844
      %v2846 = vld [vmem:[%s2845] sm:$0x3]
      %v2847 = vld [vmem:[%s429] sm:$0xff]
      %v2848 = vld [vmem:[%s429 + $0x8] sm:$0xff]
      %v2849 = vld [vmem:[%s429 + $0x10] sm:$0xff]
      %v2850 = vld [vmem:[%s429 + $0x18] sm:$0xff]
      %v2851 = vld [vmem:[%s429 + $0x20] sm:$0xff]
      %v2852 = vld [vmem:[%s429 + $0x28] sm:$0xff]
      %v2853 = vld [vmem:[%s429 + $0x30] sm:$0xff]
      %v2854 = vld [vmem:[%s429 + $0x38] sm:$0xff]
      %v2855 = vld [vmem:[%s429 + $0x40] sm:$0xff]
      %v2856 = vld [vmem:[%s429 + $0x48] sm:$0xff]
      %v2857 = vld [vmem:[%s429 + $0x50] sm:$0xff]
      %v2858 = vld [vmem:[%s429 + $0x58] sm:$0xff]
      %v2859 = vld [vmem:[%s429 + $0x60] sm:$0xff]
      %v2860 = vld [vmem:[%s429 + $0x68] sm:$0xff]
      %v2861 = vld [vmem:[%s429 + $0x70] sm:$0xff]
      %v2862 = vld [vmem:[%s429 + $0x78] sm:$0xff]
      %v2863 = vld [vmem:[%s429 + $0x80] sm:$0xff]
      %v2864 = vld [vmem:[%s429 + $0x88] sm:$0xff]
      %v2865 = vld [vmem:[%s429 + $0x90] sm:$0xff]
      %v2866 = vld [vmem:[%s429 + $0x98] sm:$0xff]
      %v2867 = vld [vmem:[%s429 + $0xa0] sm:$0xff]
      %v2868 = vld [vmem:[%s429 + $0xa8] sm:$0xff]
      %v2869 = vld [vmem:[%s429 + $0xb0] sm:$0xff]
      %v2870 = vld [vmem:[%s429 + $0xb8] sm:$0xff]
      %v2871 = vld [vmem:[%s429 + $0xc0] sm:$0xff]
      %v2872 = vld [vmem:[%s429 + $0xc8] sm:$0xff]
      %v2873 = vld [vmem:[%s429 + $0xd0] sm:$0xff]
      %v2874 = vld [vmem:[%s429 + $0xd8] sm:$0xff]
      %v2875 = vld [vmem:[%s429 + $0xe0] sm:$0xff]
      %v2876 = vld [vmem:[%s429 + $0xe8] sm:$0xff]
      %v2877 = vld [vmem:[%s429 + $0xf0] sm:$0xff]
      %v2878 = vld [vmem:[%s429 + $0xf8] sm:$0xff]
      %v2879 = vld [vmem:[%s429 + $0x100] sm:$0xff]
      %v2880 = vld [vmem:[%s429 + $0x108] sm:$0xff]
      %v2881 = vld [vmem:[%s429 + $0x110] sm:$0xff]
      %v2882 = vld [vmem:[%s429 + $0x118] sm:$0xff]
      %v2883 = vld [vmem:[%s429 + $0x120] sm:$0xff]
      %v2884 = vld [vmem:[%s429 + $0x128] sm:$0xff]
      %v2885 = vld [vmem:[%s429 + $0x130] sm:$0xff]
      %v2886 = vld [vmem:[%s429 + $0x138] sm:$0xff]
      %v2887 = vld [vmem:[%s429 + $0x140] sm:$0xff]
      %v2888 = vld [vmem:[%s429 + $0x148] sm:$0xff]
      %v2889 = vld [vmem:[%s429 + $0x150] sm:$0xff]
      %v2890 = vld [vmem:[%s429 + $0x158] sm:$0xff]
      %v2891 = vld [vmem:[%s429 + $0x160] sm:$0xff]
      %v2892 = vld [vmem:[%s429 + $0x168] sm:$0xff]
      %v2893 = vld [vmem:[%s429 + $0x170] sm:$0xff]
      %v2894 = vld [vmem:[%s429 + $0x178] sm:$0xff]
      %v2895 = vld [vmem:[%s429 + $0x180] sm:$0xff]
      %v2896 = vld [vmem:[%s429 + $0x188] sm:$0xff]
      %v2897 = vld [vmem:[%s429 + $0x190] sm:$0xff]
      %v2898 = vld [vmem:[%s429 + $0x198] sm:$0xff]
      %v2899 = vld [vmem:[%s429 + $0x1a0] sm:$0xff]
      %v2900 = vld [vmem:[%s429 + $0x1a8] sm:$0xff]
      %v2901 = vld [vmem:[%s429 + $0x1b0] sm:$0xff]
      %v2902 = vld [vmem:[%s429 + $0x1b8] sm:$0xff]
      %v2903 = vld [vmem:[%s429 + $0x1c0] sm:$0xff]
      %v2904 = vld [vmem:[%s429 + $0x1c8] sm:$0xff]
      %v2905 = vld [vmem:[%s429 + $0x1d0] sm:$0xff]
      %v2906 = vld [vmem:[%s429 + $0x1d8] sm:$0xff]
      %v2907 = vld [vmem:[%s429 + $0x1e0] sm:$0xff]
      %v2908 = vld [vmem:[%s429 + $0x1e8] sm:$0xff]
      %v2909 = vld [vmem:[%s429 + $0x1f0] sm:$0xff]
      %v2910 = vld [vmem:[%s429 + $0x1f8] sm:$0xff]
      %v2911 = vld [vmem:[%s429 + $0x200] sm:$0xff]
      %v2912 = vld [vmem:[%s429 + $0x208] sm:$0xff]
      %v2913 = vld [vmem:[%s429 + $0x210] sm:$0xff]
      %v2914 = vld [vmem:[%s429 + $0x218] sm:$0xff]
      %v2915 = vld [vmem:[%s429 + $0x220] sm:$0xff]
      %v2916 = vld [vmem:[%s429 + $0x228] sm:$0xff]
      %v2917 = vld [vmem:[%s429 + $0x230] sm:$0xff]
      %v2918 = vld [vmem:[%s429 + $0x238] sm:$0xff]
      %v2919 = vld [vmem:[%s429 + $0x240] sm:$0xff]
      %v2920 = vld [vmem:[%s429 + $0x248] sm:$0xff]
      %v2921 = vld [vmem:[%s429 + $0x250] sm:$0xff]
      %v2922 = vld [vmem:[%s429 + $0x258] sm:$0xff]
      %v2923 = vld [vmem:[%s429 + $0x260] sm:$0xff]
      %v2924 = vld [vmem:[%s429 + $0x268] sm:$0xff]
      %v2925 = vld [vmem:[%s429 + $0x270] sm:$0xff]
      %v2926 = vld [vmem:[%s429 + $0x278] sm:$0xff]
      %v2927 = vld [vmem:[%s429 + $0x280] sm:$0xff]
      %v2928 = vld [vmem:[%s429 + $0x288] sm:$0xff]
      %v2929 = vld [vmem:[%s429 + $0x290] sm:$0xff]
      %v2930 = vld [vmem:[%s429 + $0x298] sm:$0xff]
      %v2931 = vld [vmem:[%s429 + $0x2a0] sm:$0xff]
      %v2932 = vld [vmem:[%s429 + $0x2a8] sm:$0xff]
      %v2933 = vld [vmem:[%s429 + $0x2b0] sm:$0xff]
      %v2934 = vld [vmem:[%s429 + $0x2b8] sm:$0xff]
      %v2935 = vld [vmem:[%s429 + $0x2c0] sm:$0xff]
      %v2936 = vld [vmem:[%s429 + $0x2c8] sm:$0xff]
      %v2937 = vld [vmem:[%s429 + $0x2d0] sm:$0xff]
      %v2938 = vld [vmem:[%s429 + $0x2d8] sm:$0xff]
      %v2939 = vld [vmem:[%s429 + $0x2e0] sm:$0xff]
      %v2940 = vld [vmem:[%s429 + $0x2e8] sm:$0xff]
      %v2941 = vld [vmem:[%s429 + $0x2f0] sm:$0xff]
      %v2942 = vld [vmem:[%s429 + $0x2f8] sm:$0xff]
      %v2943 = vld [vmem:[%s429 + $0x300] sm:$0xff]
      %v2944 = vld [vmem:[%s429 + $0x308] sm:$0xff]
      %v2945 = vld [vmem:[%s429 + $0x310] sm:$0xff]
      %v2946 = vld [vmem:[%s429 + $0x318] sm:$0xff]
      %v2947 = vld [vmem:[%s429 + $0x320] sm:$0xff]
      %v2948 = vld [vmem:[%s429 + $0x328] sm:$0xff]
      %v2949 = vld [vmem:[%s429 + $0x330] sm:$0xff]
      %v2950 = vld [vmem:[%s429 + $0x338] sm:$0xff]
      %v2951 = vld [vmem:[%s429 + $0x340] sm:$0xff]
      %v2952 = vld [vmem:[%s429 + $0x348] sm:$0xff]
      %v2953 = vld [vmem:[%s429 + $0x350] sm:$0xff]
      %v2954 = vld [vmem:[%s429 + $0x358] sm:$0xff]
      %v2955 = vld [vmem:[%s429 + $0x360] sm:$0xff]
      %v2956 = vld [vmem:[%s429 + $0x368] sm:$0xff]
      %v2957 = vld [vmem:[%s429 + $0x370] sm:$0xff]
      %v2958 = vld [vmem:[%s429 + $0x378] sm:$0xff]
      %v2959 = vld [vmem:[%s429 + $0x380] sm:$0xff]
      %v2960 = vld [vmem:[%s429 + $0x388] sm:$0xff]
      %v2961 = vld [vmem:[%s429 + $0x390] sm:$0xff]
      %v2962 = vld [vmem:[%s429 + $0x398] sm:$0xff]
      %v2963 = vld [vmem:[%s429 + $0x3a0] sm:$0xff]
      %v2964 = vld [vmem:[%s429 + $0x3a8] sm:$0xff]
      %v2965 = vld [vmem:[%s429 + $0x3b0] sm:$0xff]
      %v2966 = vld [vmem:[%s429 + $0x3b8] sm:$0xff]
      %v2967 = vld [vmem:[%s429 + $0x3c0] sm:$0xff]
      %v2968 = vld [vmem:[%s429 + $0x3c8] sm:$0xff]
      %v2969 = vld [vmem:[%s429 + $0x3d0] sm:$0xff]
      %v2970 = vld [vmem:[%s429 + $0x3d8] sm:$0xff]
      %v2971 = vld [vmem:[%s429 + $0x3e0] sm:$0xff]
      %v2972 = vld [vmem:[%s429 + $0x3e8] sm:$0xff]
      %v2973 = vld [vmem:[%s429 + $0x3f0] sm:$0xff]
      %v2974 = vld [vmem:[%s429 + $0x3f8] sm:$0xff]
      %2975 = vmatpush.msra.mxu0 %v2967
      %2976 = vmatpush.msra.mxu0 %v2959
      %2977 = vmatpush.msra.mxu0 %v2951
      %2978 = vmatpush.msra.mxu0 %v2943
      %2979 = vmatpush.msra.mxu0 %v2935
      %2980 = vmatpush.msra.mxu0 %v2927
      %2981 = vmatpush.msra.mxu0 %v2919
      %2982 = vmatpush.msra.mxu0 %v2911
      %2983 = vmatpush.msra.mxu0 %v2903
      %2984 = vmatpush.msra.mxu0 %v2895
      %2985 = vmatpush.msra.mxu0 %v2887
      %2986 = vmatpush.msra.mxu0 %v2879
      %2987 = vmatpush.msra.mxu0 %v2871
      %2988 = vmatpush.msra.mxu0 %v2863
      %2989 = vmatpush.msra.mxu0 %v2855
      %2990 = vmatpush.msra.mxu0 %v2847
      %2991 = vmatmul.f32.gmra.mxu0 %v2846
      %v2992 = vpop.f32.mrf.mxu0
      %v2993 = vadd.f32 0.0, %v2992
      %2994 = vdwg.mxu0
      %2995 = vmatpush.msra.mxu0 %v2968
      %2996 = vmatpush.msra.mxu0 %v2960
      %2997 = vmatpush.msra.mxu0 %v2952
      %2998 = vmatpush.msra.mxu0 %v2944
      %2999 = vmatpush.msra.mxu0 %v2936
      %3000 = vmatpush.msra.mxu0 %v2928
      %3001 = vmatpush.msra.mxu0 %v2920
      %3002 = vmatpush.msra.mxu0 %v2912
      %3003 = vmatpush.msra.mxu0 %v2904
      %3004 = vmatpush.msra.mxu0 %v2896
      %3005 = vmatpush.msra.mxu0 %v2888
      %3006 = vmatpush.msra.mxu0 %v2880
      %3007 = vmatpush.msra.mxu0 %v2872
      %3008 = vmatpush.msra.mxu0 %v2864
      %3009 = vmatpush.msra.mxu0 %v2856
      %3010 = vmatpush.msra.mxu0 %v2848
      %3011 = vmatmul.f32.gmra.mxu0 %v2846
      %v3012 = vpop.f32.mrf.mxu0
      %v3013 = vadd.f32 0.0, %v3012
      %3014 = vdwg.mxu0
      %3015 = vmatpush.msra.mxu0 %v2969
      %3016 = vmatpush.msra.mxu0 %v2961
      %3017 = vmatpush.msra.mxu0 %v2953
      %3018 = vmatpush.msra.mxu0 %v2945
      %3019 = vmatpush.msra.mxu0 %v2937
      %3020 = vmatpush.msra.mxu0 %v2929
      %3021 = vmatpush.msra.mxu0 %v2921
      %3022 = vmatpush.msra.mxu0 %v2913
      %3023 = vmatpush.msra.mxu0 %v2905
      %3024 = vmatpush.msra.mxu0 %v2897
      %3025 = vmatpush.msra.mxu0 %v2889
      %3026 = vmatpush.msra.mxu0 %v2881
      %3027 = vmatpush.msra.mxu0 %v2873
      %3028 = vmatpush.msra.mxu0 %v2865
      %3029 = vmatpush.msra.mxu0 %v2857
      %3030 = vmatpush.msra.mxu0 %v2849
      %3031 = vmatmul.f32.gmra.mxu0 %v2846
      %v3032 = vpop.f32.mrf.mxu0
      %v3033 = vadd.f32 0.0, %v3032
      %3034 = vdwg.mxu0
      %3035 = vmatpush.msra.mxu0 %v2970
      %3036 = vmatpush.msra.mxu0 %v2962
      %3037 = vmatpush.msra.mxu0 %v2954
      %3038 = vmatpush.msra.mxu0 %v2946
      %3039 = vmatpush.msra.mxu0 %v2938
      %3040 = vmatpush.msra.mxu0 %v2930
      %3041 = vmatpush.msra.mxu0 %v2922
      %3042 = vmatpush.msra.mxu0 %v2914
      %3043 = vmatpush.msra.mxu0 %v2906
      %3044 = vmatpush.msra.mxu0 %v2898
      %3045 = vmatpush.msra.mxu0 %v2890
      %3046 = vmatpush.msra.mxu0 %v2882
      %3047 = vmatpush.msra.mxu0 %v2874
      %3048 = vmatpush.msra.mxu0 %v2866
      %3049 = vmatpush.msra.mxu0 %v2858
      %3050 = vmatpush.msra.mxu0 %v2850
      %3051 = vmatmul.f32.gmra.mxu0 %v2846
      %v3052 = vpop.f32.mrf.mxu0
      %v3053 = vadd.f32 0.0, %v3052
      %3054 = vdwg.mxu0
      %3055 = vmatpush.msra.mxu0 %v2971
      %3056 = vmatpush.msra.mxu0 %v2963
      %3057 = vmatpush.msra.mxu0 %v2955
      %3058 = vmatpush.msra.mxu0 %v2947
      %3059 = vmatpush.msra.mxu0 %v2939
      %3060 = vmatpush.msra.mxu0 %v2931
      %3061 = vmatpush.msra.mxu0 %v2923
      %3062 = vmatpush.msra.mxu0 %v2915
      %3063 = vmatpush.msra.mxu0 %v2907
      %3064 = vmatpush.msra.mxu0 %v2899
      %3065 = vmatpush.msra.mxu0 %v2891
      %3066 = vmatpush.msra.mxu0 %v2883
      %3067 = vmatpush.msra.mxu0 %v2875
      %3068 = vmatpush.msra.mxu0 %v2867
      %3069 = vmatpush.msra.mxu0 %v2859
      %3070 = vmatpush.msra.mxu0 %v2851
      %3071 = vmatmul.f32.gmra.mxu0 %v2846
      %v3072 = vpop.f32.mrf.mxu0
      %v3073 = vadd.f32 0.0, %v3072
      %3074 = vdwg.mxu0
      %3075 = vmatpush.msra.mxu0 %v2972
      %3076 = vmatpush.msra.mxu0 %v2964
      %3077 = vmatpush.msra.mxu0 %v2956
      %3078 = vmatpush.msra.mxu0 %v2948
      %3079 = vmatpush.msra.mxu0 %v2940
      %3080 = vmatpush.msra.mxu0 %v2932
      %3081 = vmatpush.msra.mxu0 %v2924
      %3082 = vmatpush.msra.mxu0 %v2916
      %3083 = vmatpush.msra.mxu0 %v2908
      %3084 = vmatpush.msra.mxu0 %v2900
      %3085 = vmatpush.msra.mxu0 %v2892
      %3086 = vmatpush.msra.mxu0 %v2884
      %3087 = vmatpush.msra.mxu0 %v2876
      %3088 = vmatpush.msra.mxu0 %v2868
      %3089 = vmatpush.msra.mxu0 %v2860
      %3090 = vmatpush.msra.mxu0 %v2852
      %3091 = vmatmul.f32.gmra.mxu0 %v2846
      %v3092 = vpop.f32.mrf.mxu0
      %v3093 = vadd.f32 0.0, %v3092
      %3094 = vdwg.mxu0
      %3095 = vmatpush.msra.mxu0 %v2973
      %3096 = vmatpush.msra.mxu0 %v2965
      %3097 = vmatpush.msra.mxu0 %v2957
      %3098 = vmatpush.msra.mxu0 %v2949
      %3099 = vmatpush.msra.mxu0 %v2941
      %3100 = vmatpush.msra.mxu0 %v2933
      %3101 = vmatpush.msra.mxu0 %v2925
      %3102 = vmatpush.msra.mxu0 %v2917
      %3103 = vmatpush.msra.mxu0 %v2909
      %3104 = vmatpush.msra.mxu0 %v2901
      %3105 = vmatpush.msra.mxu0 %v2893
      %3106 = vmatpush.msra.mxu0 %v2885
      %3107 = vmatpush.msra.mxu0 %v2877
      %3108 = vmatpush.msra.mxu0 %v2869
      %3109 = vmatpush.msra.mxu0 %v2861
      %3110 = vmatpush.msra.mxu0 %v2853
      %3111 = vmatmul.f32.gmra.mxu0 %v2846
      %v3112 = vpop.f32.mrf.mxu0
      %v3113 = vadd.f32 0.0, %v3112
      %3114 = vdwg.mxu0
      %3115 = vmatpush.msra.mxu0 %v2974
      %3116 = vmatpush.msra.mxu0 %v2966
      %3117 = vmatpush.msra.mxu0 %v2958
      %3118 = vmatpush.msra.mxu0 %v2950
      %3119 = vmatpush.msra.mxu0 %v2942
      %3120 = vmatpush.msra.mxu0 %v2934
      %3121 = vmatpush.msra.mxu0 %v2926
      %3122 = vmatpush.msra.mxu0 %v2918
      %3123 = vmatpush.msra.mxu0 %v2910
      %3124 = vmatpush.msra.mxu0 %v2902
      %3125 = vmatpush.msra.mxu0 %v2894
      %3126 = vmatpush.msra.mxu0 %v2886
      %3127 = vmatpush.msra.mxu0 %v2878
      %3128 = vmatpush.msra.mxu0 %v2870
      %3129 = vmatpush.msra.mxu0 %v2862
      %3130 = vmatpush.msra.mxu0 %v2854
      %3131 = vmatmul.f32.gmra.mxu0 %v2846
      %v3132 = vpop.f32.mrf.mxu0
      %v3133 = vadd.f32 0.0, %v3132
      %3134 = vdwg.mxu0
      %v3143 = vrot.slane %v3013, 6
      %v3144 = vrot.slane %v3033, 4
      %v3145 = vrot.slane %v3053, 2
      %v3146 = vrot.slane %v3093, 6
      %v3147 = vrot.slane %v3113, 4
      %v3148 = vrot.slane %v3133, 2
      %vm3149 = vcmask 1041408
      %v3150 = vsel %vm3149, %v2993, %v3143
      %vm3151 = vcmask 1045508
      %v3152 = vsel %vm3151, %v3144, %v3145
      %vm3153 = vcmask 1043456
      %v3154 = vsel %vm3153, %v3150, %v3152
      %v3155 = vsel %vm3149, %v3073, %v3146
      %v3156 = vsel %vm3151, %v3147, %v3148
      %v3157 = vsel %vm3153, %v3155, %v3156
      %v3160 = vadd.f32 %v2841, %v3154
      %v3161 = vadd.f32 %v2842, %v3157
      %s3162 = sadd.s32 %s2843, 1
      %s3163 = smul.u32 %s3162, 2
      %s3164 = scalar_lea.vmem [#allocation3], %s3163
      %v3165 = vld [vmem:[%s3164] sm:$0x3]
      %s3166 = scalar_lea.vmem %s429, 1024
      %v3167 = vld [vmem:[%s3166] sm:$0xff]
      %v3168 = vld [vmem:[%s3166 + $0x8] sm:$0xff]
      %v3169 = vld [vmem:[%s3166 + $0x10] sm:$0xff]
      %v3170 = vld [vmem:[%s3166 + $0x18] sm:$0xff]
      %v3171 = vld [vmem:[%s3166 + $0x20] sm:$0xff]
      %v3172 = vld [vmem:[%s3166 + $0x28] sm:$0xff]
      %v3173 = vld [vmem:[%s3166 + $0x30] sm:$0xff]
      %v3174 = vld [vmem:[%s3166 + $0x38] sm:$0xff]
      %v3175 = vld [vmem:[%s3166 + $0x40] sm:$0xff]
      %v3176 = vld [vmem:[%s3166 + $0x48] sm:$0xff]
      %v3177 = vld [vmem:[%s3166 + $0x50] sm:$0xff]
      %v3178 = vld [vmem:[%s3166 + $0x58] sm:$0xff]
      %v3179 = vld [vmem:[%s3166 + $0x60] sm:$0xff]
      %v3180 = vld [vmem:[%s3166 + $0x68] sm:$0xff]
      %v3181 = vld [vmem:[%s3166 + $0x70] sm:$0xff]
      %v3182 = vld [vmem:[%s3166 + $0x78] sm:$0xff]
      %v3183 = vld [vmem:[%s3166 + $0x80] sm:$0xff]
      %v3184 = vld [vmem:[%s3166 + $0x88] sm:$0xff]
      %v3185 = vld [vmem:[%s3166 + $0x90] sm:$0xff]
      %v3186 = vld [vmem:[%s3166 + $0x98] sm:$0xff]
      %v3187 = vld [vmem:[%s3166 + $0xa0] sm:$0xff]
      %v3188 = vld [vmem:[%s3166 + $0xa8] sm:$0xff]
      %v3189 = vld [vmem:[%s3166 + $0xb0] sm:$0xff]
      %v3190 = vld [vmem:[%s3166 + $0xb8] sm:$0xff]
      %v3191 = vld [vmem:[%s3166 + $0xc0] sm:$0xff]
      %v3192 = vld [vmem:[%s3166 + $0xc8] sm:$0xff]
      %v3193 = vld [vmem:[%s3166 + $0xd0] sm:$0xff]
      %v3194 = vld [vmem:[%s3166 + $0xd8] sm:$0xff]
      %v3195 = vld [vmem:[%s3166 + $0xe0] sm:$0xff]
      %v3196 = vld [vmem:[%s3166 + $0xe8] sm:$0xff]
      %v3197 = vld [vmem:[%s3166 + $0xf0] sm:$0xff]
      %v3198 = vld [vmem:[%s3166 + $0xf8] sm:$0xff]
      %v3199 = vld [vmem:[%s3166 + $0x100] sm:$0xff]
      %v3200 = vld [vmem:[%s3166 + $0x108] sm:$0xff]
      %v3201 = vld [vmem:[%s3166 + $0x110] sm:$0xff]
      %v3202 = vld [vmem:[%s3166 + $0x118] sm:$0xff]
      %v3203 = vld [vmem:[%s3166 + $0x120] sm:$0xff]
      %v3204 = vld [vmem:[%s3166 + $0x128] sm:$0xff]
      %v3205 = vld [vmem:[%s3166 + $0x130] sm:$0xff]
      %v3206 = vld [vmem:[%s3166 + $0x138] sm:$0xff]
      %v3207 = vld [vmem:[%s3166 + $0x140] sm:$0xff]
      %v3208 = vld [vmem:[%s3166 + $0x148] sm:$0xff]
      %v3209 = vld [vmem:[%s3166 + $0x150] sm:$0xff]
      %v3210 = vld [vmem:[%s3166 + $0x158] sm:$0xff]
      %v3211 = vld [vmem:[%s3166 + $0x160] sm:$0xff]
      %v3212 = vld [vmem:[%s3166 + $0x168] sm:$0xff]
      %v3213 = vld [vmem:[%s3166 + $0x170] sm:$0xff]
      %v3214 = vld [vmem:[%s3166 + $0x178] sm:$0xff]
      %v3215 = vld [vmem:[%s3166 + $0x180] sm:$0xff]
      %v3216 = vld [vmem:[%s3166 + $0x188] sm:$0xff]
      %v3217 = vld [vmem:[%s3166 + $0x190] sm:$0xff]
      %v3218 = vld [vmem:[%s3166 + $0x198] sm:$0xff]
      %v3219 = vld [vmem:[%s3166 + $0x1a0] sm:$0xff]
      %v3220 = vld [vmem:[%s3166 + $0x1a8] sm:$0xff]
      %v3221 = vld [vmem:[%s3166 + $0x1b0] sm:$0xff]
      %v3222 = vld [vmem:[%s3166 + $0x1b8] sm:$0xff]
      %v3223 = vld [vmem:[%s3166 + $0x1c0] sm:$0xff]
      %v3224 = vld [vmem:[%s3166 + $0x1c8] sm:$0xff]
      %v3225 = vld [vmem:[%s3166 + $0x1d0] sm:$0xff]
      %v3226 = vld [vmem:[%s3166 + $0x1d8] sm:$0xff]
      %v3227 = vld [vmem:[%s3166 + $0x1e0] sm:$0xff]
      %v3228 = vld [vmem:[%s3166 + $0x1e8] sm:$0xff]
      %v3229 = vld [vmem:[%s3166 + $0x1f0] sm:$0xff]
      %v3230 = vld [vmem:[%s3166 + $0x1f8] sm:$0xff]
      %v3231 = vld [vmem:[%s3166 + $0x200] sm:$0xff]
      %v3232 = vld [vmem:[%s3166 + $0x208] sm:$0xff]
      %v3233 = vld [vmem:[%s3166 + $0x210] sm:$0xff]
      %v3234 = vld [vmem:[%s3166 + $0x218] sm:$0xff]
      %v3235 = vld [vmem:[%s3166 + $0x220] sm:$0xff]
      %v3236 = vld [vmem:[%s3166 + $0x228] sm:$0xff]
      %v3237 = vld [vmem:[%s3166 + $0x230] sm:$0xff]
      %v3238 = vld [vmem:[%s3166 + $0x238] sm:$0xff]
      %v3239 = vld [vmem:[%s3166 + $0x240] sm:$0xff]
      %v3240 = vld [vmem:[%s3166 + $0x248] sm:$0xff]
      %v3241 = vld [vmem:[%s3166 + $0x250] sm:$0xff]
      %v3242 = vld [vmem:[%s3166 + $0x258] sm:$0xff]
      %v3243 = vld [vmem:[%s3166 + $0x260] sm:$0xff]
      %v3244 = vld [vmem:[%s3166 + $0x268] sm:$0xff]
      %v3245 = vld [vmem:[%s3166 + $0x270] sm:$0xff]
      %v3246 = vld [vmem:[%s3166 + $0x278] sm:$0xff]
      %v3247 = vld [vmem:[%s3166 + $0x280] sm:$0xff]
      %v3248 = vld [vmem:[%s3166 + $0x288] sm:$0xff]
      %v3249 = vld [vmem:[%s3166 + $0x290] sm:$0xff]
      %v3250 = vld [vmem:[%s3166 + $0x298] sm:$0xff]
      %v3251 = vld [vmem:[%s3166 + $0x2a0] sm:$0xff]
      %v3252 = vld [vmem:[%s3166 + $0x2a8] sm:$0xff]
      %v3253 = vld [vmem:[%s3166 + $0x2b0] sm:$0xff]
      %v3254 = vld [vmem:[%s3166 + $0x2b8] sm:$0xff]
      %v3255 = vld [vmem:[%s3166 + $0x2c0] sm:$0xff]
      %v3256 = vld [vmem:[%s3166 + $0x2c8] sm:$0xff]
      %v3257 = vld [vmem:[%s3166 + $0x2d0] sm:$0xff]
      %v3258 = vld [vmem:[%s3166 + $0x2d8] sm:$0xff]
      %v3259 = vld [vmem:[%s3166 + $0x2e0] sm:$0xff]
      %v3260 = vld [vmem:[%s3166 + $0x2e8] sm:$0xff]
      %v3261 = vld [vmem:[%s3166 + $0x2f0] sm:$0xff]
      %v3262 = vld [vmem:[%s3166 + $0x2f8] sm:$0xff]
      %v3263 = vld [vmem:[%s3166 + $0x300] sm:$0xff]
      %v3264 = vld [vmem:[%s3166 + $0x308] sm:$0xff]
      %v3265 = vld [vmem:[%s3166 + $0x310] sm:$0xff]
      %v3266 = vld [vmem:[%s3166 + $0x318] sm:$0xff]
      %v3267 = vld [vmem:[%s3166 + $0x320] sm:$0xff]
      %v3268 = vld [vmem:[%s3166 + $0x328] sm:$0xff]
      %v3269 = vld [vmem:[%s3166 + $0x330] sm:$0xff]
      %v3270 = vld [vmem:[%s3166 + $0x338] sm:$0xff]
      %v3271 = vld [vmem:[%s3166 + $0x340] sm:$0xff]
      %v3272 = vld [vmem:[%s3166 + $0x348] sm:$0xff]
      %v3273 = vld [vmem:[%s3166 + $0x350] sm:$0xff]
      %v3274 = vld [vmem:[%s3166 + $0x358] sm:$0xff]
      %v3275 = vld [vmem:[%s3166 + $0x360] sm:$0xff]
      %v3276 = vld [vmem:[%s3166 + $0x368] sm:$0xff]
      %v3277 = vld [vmem:[%s3166 + $0x370] sm:$0xff]
      %v3278 = vld [vmem:[%s3166 + $0x378] sm:$0xff]
      %v3279 = vld [vmem:[%s3166 + $0x380] sm:$0xff]
      %v3280 = vld [vmem:[%s3166 + $0x388] sm:$0xff]
      %v3281 = vld [vmem:[%s3166 + $0x390] sm:$0xff]
      %v3282 = vld [vmem:[%s3166 + $0x398] sm:$0xff]
      %v3283 = vld [vmem:[%s3166 + $0x3a0] sm:$0xff]
      %v3284 = vld [vmem:[%s3166 + $0x3a8] sm:$0xff]
      %v3285 = vld [vmem:[%s3166 + $0x3b0] sm:$0xff]
      %v3286 = vld [vmem:[%s3166 + $0x3b8] sm:$0xff]
      %v3287 = vld [vmem:[%s3166 + $0x3c0] sm:$0xff]
      %v3288 = vld [vmem:[%s3166 + $0x3c8] sm:$0xff]
      %v3289 = vld [vmem:[%s3166 + $0x3d0] sm:$0xff]
      %v3290 = vld [vmem:[%s3166 + $0x3d8] sm:$0xff]
      %v3291 = vld [vmem:[%s3166 + $0x3e0] sm:$0xff]
      %v3292 = vld [vmem:[%s3166 + $0x3e8] sm:$0xff]
      %v3293 = vld [vmem:[%s3166 + $0x3f0] sm:$0xff]
      %v3294 = vld [vmem:[%s3166 + $0x3f8] sm:$0xff]
      %3295 = vmatpush.msra.mxu0 %v3287
      %3296 = vmatpush.msra.mxu0 %v3279
      %3297 = vmatpush.msra.mxu0 %v3271
      %3298 = vmatpush.msra.mxu0 %v3263
      %3299 = vmatpush.msra.mxu0 %v3255
      %3300 = vmatpush.msra.mxu0 %v3247
      %3301 = vmatpush.msra.mxu0 %v3239
      %3302 = vmatpush.msra.mxu0 %v3231
      %3303 = vmatpush.msra.mxu0 %v3223
      %3304 = vmatpush.msra.mxu0 %v3215
      %3305 = vmatpush.msra.mxu0 %v3207
      %3306 = vmatpush.msra.mxu0 %v3199
      %3307 = vmatpush.msra.mxu0 %v3191
      %3308 = vmatpush.msra.mxu0 %v3183
      %3309 = vmatpush.msra.mxu0 %v3175
      %3310 = vmatpush.msra.mxu0 %v3167
      %3311 = vmatmul.f32.gmra.mxu0 %v3165
      %v3312 = vpop.f32.mrf.mxu0
      %v3313 = vadd.f32 0.0, %v3312
      %3314 = vdwg.mxu0
      %3315 = vmatpush.msra.mxu0 %v3288
      %3316 = vmatpush.msra.mxu0 %v3280
      %3317 = vmatpush.msra.mxu0 %v3272
      %3318 = vmatpush.msra.mxu0 %v3264
      %3319 = vmatpush.msra.mxu0 %v3256
      %3320 = vmatpush.msra.mxu0 %v3248
      %3321 = vmatpush.msra.mxu0 %v3240
      %3322 = vmatpush.msra.mxu0 %v3232
      %3323 = vmatpush.msra.mxu0 %v3224
      %3324 = vmatpush.msra.mxu0 %v3216
      %3325 = vmatpush.msra.mxu0 %v3208
      %3326 = vmatpush.msra.mxu0 %v3200
      %3327 = vmatpush.msra.mxu0 %v3192
      %3328 = vmatpush.msra.mxu0 %v3184
      %3329 = vmatpush.msra.mxu0 %v3176
      %3330 = vmatpush.msra.mxu0 %v3168
      %3331 = vmatmul.f32.gmra.mxu0 %v3165
      %v3332 = vpop.f32.mrf.mxu0
      %v3333 = vadd.f32 0.0, %v3332
      %3334 = vdwg.mxu0
      %3335 = vmatpush.msra.mxu0 %v3289
      %3336 = vmatpush.msra.mxu0 %v3281
      %3337 = vmatpush.msra.mxu0 %v3273
      %3338 = vmatpush.msra.mxu0 %v3265
      %3339 = vmatpush.msra.mxu0 %v3257
      %3340 = vmatpush.msra.mxu0 %v3249
      %3341 = vmatpush.msra.mxu0 %v3241
      %3342 = vmatpush.msra.mxu0 %v3233
      %3343 = vmatpush.msra.mxu0 %v3225
      %3344 = vmatpush.msra.mxu0 %v3217
      %3345 = vmatpush.msra.mxu0 %v3209
      %3346 = vmatpush.msra.mxu0 %v3201
      %3347 = vmatpush.msra.mxu0 %v3193
      %3348 = vmatpush.msra.mxu0 %v3185
      %3349 = vmatpush.msra.mxu0 %v3177
      %3350 = vmatpush.msra.mxu0 %v3169
      %3351 = vmatmul.f32.gmra.mxu0 %v3165
      %v3352 = vpop.f32.mrf.mxu0
      %v3353 = vadd.f32 0.0, %v3352
      %3354 = vdwg.mxu0
      %3355 = vmatpush.msra.mxu0 %v3290
      %3356 = vmatpush.msra.mxu0 %v3282
      %3357 = vmatpush.msra.mxu0 %v3274
      %3358 = vmatpush.msra.mxu0 %v3266
      %3359 = vmatpush.msra.mxu0 %v3258
      %3360 = vmatpush.msra.mxu0 %v3250
      %3361 = vmatpush.msra.mxu0 %v3242
      %3362 = vmatpush.msra.mxu0 %v3234
      %3363 = vmatpush.msra.mxu0 %v3226
      %3364 = vmatpush.msra.mxu0 %v3218
      %3365 = vmatpush.msra.mxu0 %v3210
      %3366 = vmatpush.msra.mxu0 %v3202
      %3367 = vmatpush.msra.mxu0 %v3194
      %3368 = vmatpush.msra.mxu0 %v3186
      %3369 = vmatpush.msra.mxu0 %v3178
      %3370 = vmatpush.msra.mxu0 %v3170
      %3371 = vmatmul.f32.gmra.mxu0 %v3165
      %v3372 = vpop.f32.mrf.mxu0
      %v3373 = vadd.f32 0.0, %v3372
      %3374 = vdwg.mxu0
      %3375 = vmatpush.msra.mxu0 %v3291
      %3376 = vmatpush.msra.mxu0 %v3283
      %3377 = vmatpush.msra.mxu0 %v3275
      %3378 = vmatpush.msra.mxu0 %v3267
      %3379 = vmatpush.msra.mxu0 %v3259
      %3380 = vmatpush.msra.mxu0 %v3251
      %3381 = vmatpush.msra.mxu0 %v3243
      %3382 = vmatpush.msra.mxu0 %v3235
      %3383 = vmatpush.msra.mxu0 %v3227
      %3384 = vmatpush.msra.mxu0 %v3219
      %3385 = vmatpush.msra.mxu0 %v3211
      %3386 = vmatpush.msra.mxu0 %v3203
      %3387 = vmatpush.msra.mxu0 %v3195
      %3388 = vmatpush.msra.mxu0 %v3187
      %3389 = vmatpush.msra.mxu0 %v3179
      %3390 = vmatpush.msra.mxu0 %v3171
      %3391 = vmatmul.f32.gmra.mxu0 %v3165
      %v3392 = vpop.f32.mrf.mxu0
      %v3393 = vadd.f32 0.0, %v3392
      %3394 = vdwg.mxu0
      %3395 = vmatpush.msra.mxu0 %v3292
      %3396 = vmatpush.msra.mxu0 %v3284
      %3397 = vmatpush.msra.mxu0 %v3276
      %3398 = vmatpush.msra.mxu0 %v3268
      %3399 = vmatpush.msra.mxu0 %v3260
      %3400 = vmatpush.msra.mxu0 %v3252
      %3401 = vmatpush.msra.mxu0 %v3244
      %3402 = vmatpush.msra.mxu0 %v3236
      %3403 = vmatpush.msra.mxu0 %v3228
      %3404 = vmatpush.msra.mxu0 %v3220
      %3405 = vmatpush.msra.mxu0 %v3212
      %3406 = vmatpush.msra.mxu0 %v3204
      %3407 = vmatpush.msra.mxu0 %v3196
      %3408 = vmatpush.msra.mxu0 %v3188
      %3409 = vmatpush.msra.mxu0 %v3180
      %3410 = vmatpush.msra.mxu0 %v3172
      %3411 = vmatmul.f32.gmra.mxu0 %v3165
      %v3412 = vpop.f32.mrf.mxu0
      %v3413 = vadd.f32 0.0, %v3412
      %3414 = vdwg.mxu0
      %3415 = vmatpush.msra.mxu0 %v3293
      %3416 = vmatpush.msra.mxu0 %v3285
      %3417 = vmatpush.msra.mxu0 %v3277
      %3418 = vmatpush.msra.mxu0 %v3269
      %3419 = vmatpush.msra.mxu0 %v3261
      %3420 = vmatpush.msra.mxu0 %v3253
      %3421 = vmatpush.msra.mxu0 %v3245
      %3422 = vmatpush.msra.mxu0 %v3237
      %3423 = vmatpush.msra.mxu0 %v3229
      %3424 = vmatpush.msra.mxu0 %v3221
      %3425 = vmatpush.msra.mxu0 %v3213
      %3426 = vmatpush.msra.mxu0 %v3205
      %3427 = vmatpush.msra.mxu0 %v3197
      %3428 = vmatpush.msra.mxu0 %v3189
      %3429 = vmatpush.msra.mxu0 %v3181
      %3430 = vmatpush.msra.mxu0 %v3173
      %3431 = vmatmul.f32.gmra.mxu0 %v3165
      %v3432 = vpop.f32.mrf.mxu0
      %v3433 = vadd.f32 0.0, %v3432
      %3434 = vdwg.mxu0
      %3435 = vmatpush.msra.mxu0 %v3294
      %3436 = vmatpush.msra.mxu0 %v3286
      %3437 = vmatpush.msra.mxu0 %v3278
      %3438 = vmatpush.msra.mxu0 %v3270
      %3439 = vmatpush.msra.mxu0 %v3262
      %3440 = vmatpush.msra.mxu0 %v3254
      %3441 = vmatpush.msra.mxu0 %v3246
      %3442 = vmatpush.msra.mxu0 %v3238
      %3443 = vmatpush.msra.mxu0 %v3230
      %3444 = vmatpush.msra.mxu0 %v3222
      %3445 = vmatpush.msra.mxu0 %v3214
      %3446 = vmatpush.msra.mxu0 %v3206
      %3447 = vmatpush.msra.mxu0 %v3198
      %3448 = vmatpush.msra.mxu0 %v3190
      %3449 = vmatpush.msra.mxu0 %v3182
      %3450 = vmatpush.msra.mxu0 %v3174
      %3451 = vmatmul.f32.gmra.mxu0 %v3165
      %v3452 = vpop.f32.mrf.mxu0
      %v3453 = vadd.f32 0.0, %v3452
      %3454 = vdwg.mxu0
      %v3463 = vrot.slane %v3333, 6
      %v3464 = vrot.slane %v3353, 4
      %v3465 = vrot.slane %v3373, 2
      %v3466 = vrot.slane %v3413, 6
      %v3467 = vrot.slane %v3433, 4
      %v3468 = vrot.slane %v3453, 2
      %v3469 = vsel %vm3149, %v3313, %v3463
      %v3470 = vsel %vm3151, %v3464, %v3465
      %v3471 = vsel %vm3153, %v3469, %v3470
      %v3472 = vsel %vm3149, %v3393, %v3466
      %v3473 = vsel %vm3151, %v3467, %v3468
      %v3474 = vsel %vm3153, %v3472, %v3473
      %v3477 = vadd.f32 %v3160, %v3471
      %v3478 = vadd.f32 %v3161, %v3474
      %s3479 = sadd.s32 %s2843, 2
      %s3480 = smul.u32 %s3479, 2
      %s3481 = scalar_lea.vmem [#allocation3], %s3480
      %v3482 = vld [vmem:[%s3481] sm:$0x3]
      %s3483 = scalar_lea.vmem %s429, 2048
      %v3484 = vld [vmem:[%s3483] sm:$0xff]
      %v3485 = vld [vmem:[%s3483 + $0x8] sm:$0xff]
      %v3486 = vld [vmem:[%s3483 + $0x10] sm:$0xff]
      %v3487 = vld [vmem:[%s3483 + $0x18] sm:$0xff]
      %v3488 = vld [vmem:[%s3483 + $0x20] sm:$0xff]
      %v3489 = vld [vmem:[%s3483 + $0x28] sm:$0xff]
      %v3490 = vld [vmem:[%s3483 + $0x30] sm:$0xff]
      %v3491 = vld [vmem:[%s3483 + $0x38] sm:$0xff]
      %v3492 = vld [vmem:[%s3483 + $0x40] sm:$0xff]
      %v3493 = vld [vmem:[%s3483 + $0x48] sm:$0xff]
      %v3494 = vld [vmem:[%s3483 + $0x50] sm:$0xff]
      %v3495 = vld [vmem:[%s3483 + $0x58] sm:$0xff]
      %v3496 = vld [vmem:[%s3483 + $0x60] sm:$0xff]
      %v3497 = vld [vmem:[%s3483 + $0x68] sm:$0xff]
      %v3498 = vld [vmem:[%s3483 + $0x70] sm:$0xff]
      %v3499 = vld [vmem:[%s3483 + $0x78] sm:$0xff]
      %v3500 = vld [vmem:[%s3483 + $0x80] sm:$0xff]
      %v3501 = vld [vmem:[%s3483 + $0x88] sm:$0xff]
      %v3502 = vld [vmem:[%s3483 + $0x90] sm:$0xff]
      %v3503 = vld [vmem:[%s3483 + $0x98] sm:$0xff]
      %v3504 = vld [vmem:[%s3483 + $0xa0] sm:$0xff]
      %v3505 = vld [vmem:[%s3483 + $0xa8] sm:$0xff]
      %v3506 = vld [vmem:[%s3483 + $0xb0] sm:$0xff]
      %v3507 = vld [vmem:[%s3483 + $0xb8] sm:$0xff]
      %v3508 = vld [vmem:[%s3483 + $0xc0] sm:$0xff]
      %v3509 = vld [vmem:[%s3483 + $0xc8] sm:$0xff]
      %v3510 = vld [vmem:[%s3483 + $0xd0] sm:$0xff]
      %v3511 = vld [vmem:[%s3483 + $0xd8] sm:$0xff]
      %v3512 = vld [vmem:[%s3483 + $0xe0] sm:$0xff]
      %v3513 = vld [vmem:[%s3483 + $0xe8] sm:$0xff]
      %v3514 = vld [vmem:[%s3483 + $0xf0] sm:$0xff]
      %v3515 = vld [vmem:[%s3483 + $0xf8] sm:$0xff]
      %v3516 = vld [vmem:[%s3483 + $0x100] sm:$0xff]
      %v3517 = vld [vmem:[%s3483 + $0x108] sm:$0xff]
      %v3518 = vld [vmem:[%s3483 + $0x110] sm:$0xff]
      %v3519 = vld [vmem:[%s3483 + $0x118] sm:$0xff]
      %v3520 = vld [vmem:[%s3483 + $0x120] sm:$0xff]
      %v3521 = vld [vmem:[%s3483 + $0x128] sm:$0xff]
      %v3522 = vld [vmem:[%s3483 + $0x130] sm:$0xff]
      %v3523 = vld [vmem:[%s3483 + $0x138] sm:$0xff]
      %v3524 = vld [vmem:[%s3483 + $0x140] sm:$0xff]
      %v3525 = vld [vmem:[%s3483 + $0x148] sm:$0xff]
      %v3526 = vld [vmem:[%s3483 + $0x150] sm:$0xff]
      %v3527 = vld [vmem:[%s3483 + $0x158] sm:$0xff]
      %v3528 = vld [vmem:[%s3483 + $0x160] sm:$0xff]
      %v3529 = vld [vmem:[%s3483 + $0x168] sm:$0xff]
      %v3530 = vld [vmem:[%s3483 + $0x170] sm:$0xff]
      %v3531 = vld [vmem:[%s3483 + $0x178] sm:$0xff]
      %v3532 = vld [vmem:[%s3483 + $0x180] sm:$0xff]
      %v3533 = vld [vmem:[%s3483 + $0x188] sm:$0xff]
      %v3534 = vld [vmem:[%s3483 + $0x190] sm:$0xff]
      %v3535 = vld [vmem:[%s3483 + $0x198] sm:$0xff]
      %v3536 = vld [vmem:[%s3483 + $0x1a0] sm:$0xff]
      %v3537 = vld [vmem:[%s3483 + $0x1a8] sm:$0xff]
      %v3538 = vld [vmem:[%s3483 + $0x1b0] sm:$0xff]
      %v3539 = vld [vmem:[%s3483 + $0x1b8] sm:$0xff]
      %v3540 = vld [vmem:[%s3483 + $0x1c0] sm:$0xff]
      %v3541 = vld [vmem:[%s3483 + $0x1c8] sm:$0xff]
      %v3542 = vld [vmem:[%s3483 + $0x1d0] sm:$0xff]
      %v3543 = vld [vmem:[%s3483 + $0x1d8] sm:$0xff]
      %v3544 = vld [vmem:[%s3483 + $0x1e0] sm:$0xff]
      %v3545 = vld [vmem:[%s3483 + $0x1e8] sm:$0xff]
      %v3546 = vld [vmem:[%s3483 + $0x1f0] sm:$0xff]
      %v3547 = vld [vmem:[%s3483 + $0x1f8] sm:$0xff]
      %v3548 = vld [vmem:[%s3483 + $0x200] sm:$0xff]
      %v3549 = vld [vmem:[%s3483 + $0x208] sm:$0xff]
      %v3550 = vld [vmem:[%s3483 + $0x210] sm:$0xff]
      %v3551 = vld [vmem:[%s3483 + $0x218] sm:$0xff]
      %v3552 = vld [vmem:[%s3483 + $0x220] sm:$0xff]
      %v3553 = vld [vmem:[%s3483 + $0x228] sm:$0xff]
      %v3554 = vld [vmem:[%s3483 + $0x230] sm:$0xff]
      %v3555 = vld [vmem:[%s3483 + $0x238] sm:$0xff]
      %v3556 = vld [vmem:[%s3483 + $0x240] sm:$0xff]
      %v3557 = vld [vmem:[%s3483 + $0x248] sm:$0xff]
      %v3558 = vld [vmem:[%s3483 + $0x250] sm:$0xff]
      %v3559 = vld [vmem:[%s3483 + $0x258] sm:$0xff]
      %v3560 = vld [vmem:[%s3483 + $0x260] sm:$0xff]
      %v3561 = vld [vmem:[%s3483 + $0x268] sm:$0xff]
      %v3562 = vld [vmem:[%s3483 + $0x270] sm:$0xff]
      %v3563 = vld [vmem:[%s3483 + $0x278] sm:$0xff]
      %v3564 = vld [vmem:[%s3483 + $0x280] sm:$0xff]
      %v3565 = vld [vmem:[%s3483 + $0x288] sm:$0xff]
      %v3566 = vld [vmem:[%s3483 + $0x290] sm:$0xff]
      %v3567 = vld [vmem:[%s3483 + $0x298] sm:$0xff]
      %v3568 = vld [vmem:[%s3483 + $0x2a0] sm:$0xff]
      %v3569 = vld [vmem:[%s3483 + $0x2a8] sm:$0xff]
      %v3570 = vld [vmem:[%s3483 + $0x2b0] sm:$0xff]
      %v3571 = vld [vmem:[%s3483 + $0x2b8] sm:$0xff]
      %v3572 = vld [vmem:[%s3483 + $0x2c0] sm:$0xff]
      %v3573 = vld [vmem:[%s3483 + $0x2c8] sm:$0xff]
      %v3574 = vld [vmem:[%s3483 + $0x2d0] sm:$0xff]
      %v3575 = vld [vmem:[%s3483 + $0x2d8] sm:$0xff]
      %v3576 = vld [vmem:[%s3483 + $0x2e0] sm:$0xff]
      %v3577 = vld [vmem:[%s3483 + $0x2e8] sm:$0xff]
      %v3578 = vld [vmem:[%s3483 + $0x2f0] sm:$0xff]
      %v3579 = vld [vmem:[%s3483 + $0x2f8] sm:$0xff]
      %v3580 = vld [vmem:[%s3483 + $0x300] sm:$0xff]
      %v3581 = vld [vmem:[%s3483 + $0x308] sm:$0xff]
      %v3582 = vld [vmem:[%s3483 + $0x310] sm:$0xff]
      %v3583 = vld [vmem:[%s3483 + $0x318] sm:$0xff]
      %v3584 = vld [vmem:[%s3483 + $0x320] sm:$0xff]
      %v3585 = vld [vmem:[%s3483 + $0x328] sm:$0xff]
      %v3586 = vld [vmem:[%s3483 + $0x330] sm:$0xff]
      %v3587 = vld [vmem:[%s3483 + $0x338] sm:$0xff]
      %v3588 = vld [vmem:[%s3483 + $0x340] sm:$0xff]
      %v3589 = vld [vmem:[%s3483 + $0x348] sm:$0xff]
      %v3590 = vld [vmem:[%s3483 + $0x350] sm:$0xff]
      %v3591 = vld [vmem:[%s3483 + $0x358] sm:$0xff]
      %v3592 = vld [vmem:[%s3483 + $0x360] sm:$0xff]
      %v3593 = vld [vmem:[%s3483 + $0x368] sm:$0xff]
      %v3594 = vld [vmem:[%s3483 + $0x370] sm:$0xff]
      %v3595 = vld [vmem:[%s3483 + $0x378] sm:$0xff]
      %v3596 = vld [vmem:[%s3483 + $0x380] sm:$0xff]
      %v3597 = vld [vmem:[%s3483 + $0x388] sm:$0xff]
      %v3598 = vld [vmem:[%s3483 + $0x390] sm:$0xff]
      %v3599 = vld [vmem:[%s3483 + $0x398] sm:$0xff]
      %v3600 = vld [vmem:[%s3483 + $0x3a0] sm:$0xff]
      %v3601 = vld [vmem:[%s3483 + $0x3a8] sm:$0xff]
      %v3602 = vld [vmem:[%s3483 + $0x3b0] sm:$0xff]
      %v3603 = vld [vmem:[%s3483 + $0x3b8] sm:$0xff]
      %v3604 = vld [vmem:[%s3483 + $0x3c0] sm:$0xff]
      %v3605 = vld [vmem:[%s3483 + $0x3c8] sm:$0xff]
      %v3606 = vld [vmem:[%s3483 + $0x3d0] sm:$0xff]
      %v3607 = vld [vmem:[%s3483 + $0x3d8] sm:$0xff]
      %v3608 = vld [vmem:[%s3483 + $0x3e0] sm:$0xff]
      %v3609 = vld [vmem:[%s3483 + $0x3e8] sm:$0xff]
      %v3610 = vld [vmem:[%s3483 + $0x3f0] sm:$0xff]
      %v3611 = vld [vmem:[%s3483 + $0x3f8] sm:$0xff]
      %3612 = vmatpush.msra.mxu0 %v3604
      %3613 = vmatpush.msra.mxu0 %v3596
      %3614 = vmatpush.msra.mxu0 %v3588
      %3615 = vmatpush.msra.mxu0 %v3580
      %3616 = vmatpush.msra.mxu0 %v3572
      %3617 = vmatpush.msra.mxu0 %v3564
      %3618 = vmatpush.msra.mxu0 %v3556
      %3619 = vmatpush.msra.mxu0 %v3548
      %3620 = vmatpush.msra.mxu0 %v3540
      %3621 = vmatpush.msra.mxu0 %v3532
      %3622 = vmatpush.msra.mxu0 %v3524
      %3623 = vmatpush.msra.mxu0 %v3516
      %3624 = vmatpush.msra.mxu0 %v3508
      %3625 = vmatpush.msra.mxu0 %v3500
      %3626 = vmatpush.msra.mxu0 %v3492
      %3627 = vmatpush.msra.mxu0 %v3484
      %3628 = vmatmul.f32.gmra.mxu0 %v3482
      %v3629 = vpop.f32.mrf.mxu0
      %v3630 = vadd.f32 0.0, %v3629
      %3631 = vdwg.mxu0
      %3632 = vmatpush.msra.mxu0 %v3605
      %3633 = vmatpush.msra.mxu0 %v3597
      %3634 = vmatpush.msra.mxu0 %v3589
      %3635 = vmatpush.msra.mxu0 %v3581
      %3636 = vmatpush.msra.mxu0 %v3573
      %3637 = vmatpush.msra.mxu0 %v3565
      %3638 = vmatpush.msra.mxu0 %v3557
      %3639 = vmatpush.msra.mxu0 %v3549
      %3640 = vmatpush.msra.mxu0 %v3541
      %3641 = vmatpush.msra.mxu0 %v3533
      %3642 = vmatpush.msra.mxu0 %v3525
      %3643 = vmatpush.msra.mxu0 %v3517
      %3644 = vmatpush.msra.mxu0 %v3509
      %3645 = vmatpush.msra.mxu0 %v3501
      %3646 = vmatpush.msra.mxu0 %v3493
      %3647 = vmatpush.msra.mxu0 %v3485
      %3648 = vmatmul.f32.gmra.mxu0 %v3482
      %v3649 = vpop.f32.mrf.mxu0
      %v3650 = vadd.f32 0.0, %v3649
      %3651 = vdwg.mxu0
      %3652 = vmatpush.msra.mxu0 %v3606
      %3653 = vmatpush.msra.mxu0 %v3598
      %3654 = vmatpush.msra.mxu0 %v3590
      %3655 = vmatpush.msra.mxu0 %v3582
      %3656 = vmatpush.msra.mxu0 %v3574
      %3657 = vmatpush.msra.mxu0 %v3566
      %3658 = vmatpush.msra.mxu0 %v3558
      %3659 = vmatpush.msra.mxu0 %v3550
      %3660 = vmatpush.msra.mxu0 %v3542
      %3661 = vmatpush.msra.mxu0 %v3534
      %3662 = vmatpush.msra.mxu0 %v3526
      %3663 = vmatpush.msra.mxu0 %v3518
      %3664 = vmatpush.msra.mxu0 %v3510
      %3665 = vmatpush.msra.mxu0 %v3502
      %3666 = vmatpush.msra.mxu0 %v3494
      %3667 = vmatpush.msra.mxu0 %v3486
      %3668 = vmatmul.f32.gmra.mxu0 %v3482
      %v3669 = vpop.f32.mrf.mxu0
      %v3670 = vadd.f32 0.0, %v3669
      %3671 = vdwg.mxu0
      %3672 = vmatpush.msra.mxu0 %v3607
      %3673 = vmatpush.msra.mxu0 %v3599
      %3674 = vmatpush.msra.mxu0 %v3591
      %3675 = vmatpush.msra.mxu0 %v3583
      %3676 = vmatpush.msra.mxu0 %v3575
      %3677 = vmatpush.msra.mxu0 %v3567
      %3678 = vmatpush.msra.mxu0 %v3559
      %3679 = vmatpush.msra.mxu0 %v3551
      %3680 = vmatpush.msra.mxu0 %v3543
      %3681 = vmatpush.msra.mxu0 %v3535
      %3682 = vmatpush.msra.mxu0 %v3527
      %3683 = vmatpush.msra.mxu0 %v3519
      %3684 = vmatpush.msra.mxu0 %v3511
      %3685 = vmatpush.msra.mxu0 %v3503
      %3686 = vmatpush.msra.mxu0 %v3495
      %3687 = vmatpush.msra.mxu0 %v3487
      %3688 = vmatmul.f32.gmra.mxu0 %v3482
      %v3689 = vpop.f32.mrf.mxu0
      %v3690 = vadd.f32 0.0, %v3689
      %3691 = vdwg.mxu0
      %3692 = vmatpush.msra.mxu0 %v3608
      %3693 = vmatpush.msra.mxu0 %v3600
      %3694 = vmatpush.msra.mxu0 %v3592
      %3695 = vmatpush.msra.mxu0 %v3584
      %3696 = vmatpush.msra.mxu0 %v3576
      %3697 = vmatpush.msra.mxu0 %v3568
      %3698 = vmatpush.msra.mxu0 %v3560
      %3699 = vmatpush.msra.mxu0 %v3552
      %3700 = vmatpush.msra.mxu0 %v3544
      %3701 = vmatpush.msra.mxu0 %v3536
      %3702 = vmatpush.msra.mxu0 %v3528
      %3703 = vmatpush.msra.mxu0 %v3520
      %3704 = vmatpush.msra.mxu0 %v3512
      %3705 = vmatpush.msra.mxu0 %v3504
      %3706 = vmatpush.msra.mxu0 %v3496
      %3707 = vmatpush.msra.mxu0 %v3488
      %3708 = vmatmul.f32.gmra.mxu0 %v3482
      %v3709 = vpop.f32.mrf.mxu0
      %v3710 = vadd.f32 0.0, %v3709
      %3711 = vdwg.mxu0
      %3712 = vmatpush.msra.mxu0 %v3609
      %3713 = vmatpush.msra.mxu0 %v3601
      %3714 = vmatpush.msra.mxu0 %v3593
      %3715 = vmatpush.msra.mxu0 %v3585
      %3716 = vmatpush.msra.mxu0 %v3577
      %3717 = vmatpush.msra.mxu0 %v3569
      %3718 = vmatpush.msra.mxu0 %v3561
      %3719 = vmatpush.msra.mxu0 %v3553
      %3720 = vmatpush.msra.mxu0 %v3545
      %3721 = vmatpush.msra.mxu0 %v3537
      %3722 = vmatpush.msra.mxu0 %v3529
      %3723 = vmatpush.msra.mxu0 %v3521
      %3724 = vmatpush.msra.mxu0 %v3513
      %3725 = vmatpush.msra.mxu0 %v3505
      %3726 = vmatpush.msra.mxu0 %v3497
      %3727 = vmatpush.msra.mxu0 %v3489
      %3728 = vmatmul.f32.gmra.mxu0 %v3482
      %v3729 = vpop.f32.mrf.mxu0
      %v3730 = vadd.f32 0.0, %v3729
      %3731 = vdwg.mxu0
      %3732 = vmatpush.msra.mxu0 %v3610
      %3733 = vmatpush.msra.mxu0 %v3602
      %3734 = vmatpush.msra.mxu0 %v3594
      %3735 = vmatpush.msra.mxu0 %v3586
      %3736 = vmatpush.msra.mxu0 %v3578
      %3737 = vmatpush.msra.mxu0 %v3570
      %3738 = vmatpush.msra.mxu0 %v3562
      %3739 = vmatpush.msra.mxu0 %v3554
      %3740 = vmatpush.msra.mxu0 %v3546
      %3741 = vmatpush.msra.mxu0 %v3538
      %3742 = vmatpush.msra.mxu0 %v3530
      %3743 = vmatpush.msra.mxu0 %v3522
      %3744 = vmatpush.msra.mxu0 %v3514
      %3745 = vmatpush.msra.mxu0 %v3506
      %3746 = vmatpush.msra.mxu0 %v3498
      %3747 = vmatpush.msra.mxu0 %v3490
      %3748 = vmatmul.f32.gmra.mxu0 %v3482
      %v3749 = vpop.f32.mrf.mxu0
      %v3750 = vadd.f32 0.0, %v3749
      %3751 = vdwg.mxu0
      %3752 = vmatpush.msra.mxu0 %v3611
      %3753 = vmatpush.msra.mxu0 %v3603
      %3754 = vmatpush.msra.mxu0 %v3595
      %3755 = vmatpush.msra.mxu0 %v3587
      %3756 = vmatpush.msra.mxu0 %v3579
      %3757 = vmatpush.msra.mxu0 %v3571
      %3758 = vmatpush.msra.mxu0 %v3563
      %3759 = vmatpush.msra.mxu0 %v3555
      %3760 = vmatpush.msra.mxu0 %v3547
      %3761 = vmatpush.msra.mxu0 %v3539
      %3762 = vmatpush.msra.mxu0 %v3531
      %3763 = vmatpush.msra.mxu0 %v3523
      %3764 = vmatpush.msra.mxu0 %v3515
      %3765 = vmatpush.msra.mxu0 %v3507
      %3766 = vmatpush.msra.mxu0 %v3499
      %3767 = vmatpush.msra.mxu0 %v3491
      %3768 = vmatmul.f32.gmra.mxu0 %v3482
      %v3769 = vpop.f32.mrf.mxu0
      %v3770 = vadd.f32 0.0, %v3769
      %3771 = vdwg.mxu0
      %v3780 = vrot.slane %v3650, 6
      %v3781 = vrot.slane %v3670, 4
      %v3782 = vrot.slane %v3690, 2
      %v3783 = vrot.slane %v3730, 6
      %v3784 = vrot.slane %v3750, 4
      %v3785 = vrot.slane %v3770, 2
      %v3786 = vsel %vm3149, %v3630, %v3780
      %v3787 = vsel %vm3151, %v3781, %v3782
      %v3788 = vsel %vm3153, %v3786, %v3787
      %v3789 = vsel %vm3149, %v3710, %v3783
      %v3790 = vsel %vm3151, %v3784, %v3785
      %v3791 = vsel %vm3153, %v3789, %v3790
      %v3794 = vadd.f32 %v3477, %v3788
      %v3795 = vadd.f32 %v3478, %v3791
      %s3796 = sadd.s32 %s2843, 3
      %s3797 = smul.u32 %s3796, 2
      %s3798 = scalar_lea.vmem [#allocation3], %s3797
      %v3799 = vld [vmem:[%s3798] sm:$0x3]
      %s3800 = scalar_lea.vmem %s429, 3072
      %v3801 = vld [vmem:[%s3800] sm:$0xff]
      %v3802 = vld [vmem:[%s3800 + $0x8] sm:$0xff]
      %v3803 = vld [vmem:[%s3800 + $0x10] sm:$0xff]
      %v3804 = vld [vmem:[%s3800 + $0x18] sm:$0xff]
      %v3805 = vld [vmem:[%s3800 + $0x20] sm:$0xff]
      %v3806 = vld [vmem:[%s3800 + $0x28] sm:$0xff]
      %v3807 = vld [vmem:[%s3800 + $0x30] sm:$0xff]
      %v3808 = vld [vmem:[%s3800 + $0x38] sm:$0xff]
      %v3809 = vld [vmem:[%s3800 + $0x40] sm:$0xff]
      %v3810 = vld [vmem:[%s3800 + $0x48] sm:$0xff]
      %v3811 = vld [vmem:[%s3800 + $0x50] sm:$0xff]
      %v3812 = vld [vmem:[%s3800 + $0x58] sm:$0xff]
      %v3813 = vld [vmem:[%s3800 + $0x60] sm:$0xff]
      %v3814 = vld [vmem:[%s3800 + $0x68] sm:$0xff]
      %v3815 = vld [vmem:[%s3800 + $0x70] sm:$0xff]
      %v3816 = vld [vmem:[%s3800 + $0x78] sm:$0xff]
      %v3817 = vld [vmem:[%s3800 + $0x80] sm:$0xff]
      %v3818 = vld [vmem:[%s3800 + $0x88] sm:$0xff]
      %v3819 = vld [vmem:[%s3800 + $0x90] sm:$0xff]
      %v3820 = vld [vmem:[%s3800 + $0x98] sm:$0xff]
      %v3821 = vld [vmem:[%s3800 + $0xa0] sm:$0xff]
      %v3822 = vld [vmem:[%s3800 + $0xa8] sm:$0xff]
      %v3823 = vld [vmem:[%s3800 + $0xb0] sm:$0xff]
      %v3824 = vld [vmem:[%s3800 + $0xb8] sm:$0xff]
      %v3825 = vld [vmem:[%s3800 + $0xc0] sm:$0xff]
      %v3826 = vld [vmem:[%s3800 + $0xc8] sm:$0xff]
      %v3827 = vld [vmem:[%s3800 + $0xd0] sm:$0xff]
      %v3828 = vld [vmem:[%s3800 + $0xd8] sm:$0xff]
      %v3829 = vld [vmem:[%s3800 + $0xe0] sm:$0xff]
      %v3830 = vld [vmem:[%s3800 + $0xe8] sm:$0xff]
      %v3831 = vld [vmem:[%s3800 + $0xf0] sm:$0xff]
      %v3832 = vld [vmem:[%s3800 + $0xf8] sm:$0xff]
      %v3833 = vld [vmem:[%s3800 + $0x100] sm:$0xff]
      %v3834 = vld [vmem:[%s3800 + $0x108] sm:$0xff]
      %v3835 = vld [vmem:[%s3800 + $0x110] sm:$0xff]
      %v3836 = vld [vmem:[%s3800 + $0x118] sm:$0xff]
      %v3837 = vld [vmem:[%s3800 + $0x120] sm:$0xff]
      %v3838 = vld [vmem:[%s3800 + $0x128] sm:$0xff]
      %v3839 = vld [vmem:[%s3800 + $0x130] sm:$0xff]
      %v3840 = vld [vmem:[%s3800 + $0x138] sm:$0xff]
      %v3841 = vld [vmem:[%s3800 + $0x140] sm:$0xff]
      %v3842 = vld [vmem:[%s3800 + $0x148] sm:$0xff]
      %v3843 = vld [vmem:[%s3800 + $0x150] sm:$0xff]
      %v3844 = vld [vmem:[%s3800 + $0x158] sm:$0xff]
      %v3845 = vld [vmem:[%s3800 + $0x160] sm:$0xff]
      %v3846 = vld [vmem:[%s3800 + $0x168] sm:$0xff]
      %v3847 = vld [vmem:[%s3800 + $0x170] sm:$0xff]
      %v3848 = vld [vmem:[%s3800 + $0x178] sm:$0xff]
      %v3849 = vld [vmem:[%s3800 + $0x180] sm:$0xff]
      %v3850 = vld [vmem:[%s3800 + $0x188] sm:$0xff]
      %v3851 = vld [vmem:[%s3800 + $0x190] sm:$0xff]
      %v3852 = vld [vmem:[%s3800 + $0x198] sm:$0xff]
      %v3853 = vld [vmem:[%s3800 + $0x1a0] sm:$0xff]
      %v3854 = vld [vmem:[%s3800 + $0x1a8] sm:$0xff]
      %v3855 = vld [vmem:[%s3800 + $0x1b0] sm:$0xff]
      %v3856 = vld [vmem:[%s3800 + $0x1b8] sm:$0xff]
      %v3857 = vld [vmem:[%s3800 + $0x1c0] sm:$0xff]
      %v3858 = vld [vmem:[%s3800 + $0x1c8] sm:$0xff]
      %v3859 = vld [vmem:[%s3800 + $0x1d0] sm:$0xff]
      %v3860 = vld [vmem:[%s3800 + $0x1d8] sm:$0xff]
      %v3861 = vld [vmem:[%s3800 + $0x1e0] sm:$0xff]
      %v3862 = vld [vmem:[%s3800 + $0x1e8] sm:$0xff]
      %v3863 = vld [vmem:[%s3800 + $0x1f0] sm:$0xff]
      %v3864 = vld [vmem:[%s3800 + $0x1f8] sm:$0xff]
      %v3865 = vld [vmem:[%s3800 + $0x200] sm:$0xff]
      %v3866 = vld [vmem:[%s3800 + $0x208] sm:$0xff]
      %v3867 = vld [vmem:[%s3800 + $0x210] sm:$0xff]
      %v3868 = vld [vmem:[%s3800 + $0x218] sm:$0xff]
      %v3869 = vld [vmem:[%s3800 + $0x220] sm:$0xff]
      %v3870 = vld [vmem:[%s3800 + $0x228] sm:$0xff]
      %v3871 = vld [vmem:[%s3800 + $0x230] sm:$0xff]
      %v3872 = vld [vmem:[%s3800 + $0x238] sm:$0xff]
      %v3873 = vld [vmem:[%s3800 + $0x240] sm:$0xff]
      %v3874 = vld [vmem:[%s3800 + $0x248] sm:$0xff]
      %v3875 = vld [vmem:[%s3800 + $0x250] sm:$0xff]
      %v3876 = vld [vmem:[%s3800 + $0x258] sm:$0xff]
      %v3877 = vld [vmem:[%s3800 + $0x260] sm:$0xff]
      %v3878 = vld [vmem:[%s3800 + $0x268] sm:$0xff]
      %v3879 = vld [vmem:[%s3800 + $0x270] sm:$0xff]
      %v3880 = vld [vmem:[%s3800 + $0x278] sm:$0xff]
      %v3881 = vld [vmem:[%s3800 + $0x280] sm:$0xff]
      %v3882 = vld [vmem:[%s3800 + $0x288] sm:$0xff]
      %v3883 = vld [vmem:[%s3800 + $0x290] sm:$0xff]
      %v3884 = vld [vmem:[%s3800 + $0x298] sm:$0xff]
      %v3885 = vld [vmem:[%s3800 + $0x2a0] sm:$0xff]
      %v3886 = vld [vmem:[%s3800 + $0x2a8] sm:$0xff]
      %v3887 = vld [vmem:[%s3800 + $0x2b0] sm:$0xff]
      %v3888 = vld [vmem:[%s3800 + $0x2b8] sm:$0xff]
      %v3889 = vld [vmem:[%s3800 + $0x2c0] sm:$0xff]
      %v3890 = vld [vmem:[%s3800 + $0x2c8] sm:$0xff]
      %v3891 = vld [vmem:[%s3800 + $0x2d0] sm:$0xff]
      %v3892 = vld [vmem:[%s3800 + $0x2d8] sm:$0xff]
      %v3893 = vld [vmem:[%s3800 + $0x2e0] sm:$0xff]
      %v3894 = vld [vmem:[%s3800 + $0x2e8] sm:$0xff]
      %v3895 = vld [vmem:[%s3800 + $0x2f0] sm:$0xff]
      %v3896 = vld [vmem:[%s3800 + $0x2f8] sm:$0xff]
      %v3897 = vld [vmem:[%s3800 + $0x300] sm:$0xff]
      %v3898 = vld [vmem:[%s3800 + $0x308] sm:$0xff]
      %v3899 = vld [vmem:[%s3800 + $0x310] sm:$0xff]
      %v3900 = vld [vmem:[%s3800 + $0x318] sm:$0xff]
      %v3901 = vld [vmem:[%s3800 + $0x320] sm:$0xff]
      %v3902 = vld [vmem:[%s3800 + $0x328] sm:$0xff]
      %v3903 = vld [vmem:[%s3800 + $0x330] sm:$0xff]
      %v3904 = vld [vmem:[%s3800 + $0x338] sm:$0xff]
      %v3905 = vld [vmem:[%s3800 + $0x340] sm:$0xff]
      %v3906 = vld [vmem:[%s3800 + $0x348] sm:$0xff]
      %v3907 = vld [vmem:[%s3800 + $0x350] sm:$0xff]
      %v3908 = vld [vmem:[%s3800 + $0x358] sm:$0xff]
      %v3909 = vld [vmem:[%s3800 + $0x360] sm:$0xff]
      %v3910 = vld [vmem:[%s3800 + $0x368] sm:$0xff]
      %v3911 = vld [vmem:[%s3800 + $0x370] sm:$0xff]
      %v3912 = vld [vmem:[%s3800 + $0x378] sm:$0xff]
      %v3913 = vld [vmem:[%s3800 + $0x380] sm:$0xff]
      %v3914 = vld [vmem:[%s3800 + $0x388] sm:$0xff]
      %v3915 = vld [vmem:[%s3800 + $0x390] sm:$0xff]
      %v3916 = vld [vmem:[%s3800 + $0x398] sm:$0xff]
      %v3917 = vld [vmem:[%s3800 + $0x3a0] sm:$0xff]
      %v3918 = vld [vmem:[%s3800 + $0x3a8] sm:$0xff]
      %v3919 = vld [vmem:[%s3800 + $0x3b0] sm:$0xff]
      %v3920 = vld [vmem:[%s3800 + $0x3b8] sm:$0xff]
      %v3921 = vld [vmem:[%s3800 + $0x3c0] sm:$0xff]
      %v3922 = vld [vmem:[%s3800 + $0x3c8] sm:$0xff]
      %v3923 = vld [vmem:[%s3800 + $0x3d0] sm:$0xff]
      %v3924 = vld [vmem:[%s3800 + $0x3d8] sm:$0xff]
      %v3925 = vld [vmem:[%s3800 + $0x3e0] sm:$0xff]
      %v3926 = vld [vmem:[%s3800 + $0x3e8] sm:$0xff]
      %v3927 = vld [vmem:[%s3800 + $0x3f0] sm:$0xff]
      %v3928 = vld [vmem:[%s3800 + $0x3f8] sm:$0xff]
      %3929 = vmatpush.msra.mxu0 %v3921
      %3930 = vmatpush.msra.mxu0 %v3913
      %3931 = vmatpush.msra.mxu0 %v3905
      %3932 = vmatpush.msra.mxu0 %v3897
      %3933 = vmatpush.msra.mxu0 %v3889
      %3934 = vmatpush.msra.mxu0 %v3881
      %3935 = vmatpush.msra.mxu0 %v3873
      %3936 = vmatpush.msra.mxu0 %v3865
      %3937 = vmatpush.msra.mxu0 %v3857
      %3938 = vmatpush.msra.mxu0 %v3849
      %3939 = vmatpush.msra.mxu0 %v3841
      %3940 = vmatpush.msra.mxu0 %v3833
      %3941 = vmatpush.msra.mxu0 %v3825
      %3942 = vmatpush.msra.mxu0 %v3817
      %3943 = vmatpush.msra.mxu0 %v3809
      %3944 = vmatpush.msra.mxu0 %v3801
      %3945 = vmatmul.f32.gmra.mxu0 %v3799
      %v3946 = vpop.f32.mrf.mxu0
      %v3947 = vadd.f32 0.0, %v3946
      %3948 = vdwg.mxu0
      %3949 = vmatpush.msra.mxu0 %v3922
      %3950 = vmatpush.msra.mxu0 %v3914
      %3951 = vmatpush.msra.mxu0 %v3906
      %3952 = vmatpush.msra.mxu0 %v3898
      %3953 = vmatpush.msra.mxu0 %v3890
      %3954 = vmatpush.msra.mxu0 %v3882
      %3955 = vmatpush.msra.mxu0 %v3874
      %3956 = vmatpush.msra.mxu0 %v3866
      %3957 = vmatpush.msra.mxu0 %v3858
      %3958 = vmatpush.msra.mxu0 %v3850
      %3959 = vmatpush.msra.mxu0 %v3842
      %3960 = vmatpush.msra.mxu0 %v3834
      %3961 = vmatpush.msra.mxu0 %v3826
      %3962 = vmatpush.msra.mxu0 %v3818
      %3963 = vmatpush.msra.mxu0 %v3810
      %3964 = vmatpush.msra.mxu0 %v3802
      %3965 = vmatmul.f32.gmra.mxu0 %v3799
      %v3966 = vpop.f32.mrf.mxu0
      %v3967 = vadd.f32 0.0, %v3966
      %3968 = vdwg.mxu0
      %3969 = vmatpush.msra.mxu0 %v3923
      %3970 = vmatpush.msra.mxu0 %v3915
      %3971 = vmatpush.msra.mxu0 %v3907
      %3972 = vmatpush.msra.mxu0 %v3899
      %3973 = vmatpush.msra.mxu0 %v3891
      %3974 = vmatpush.msra.mxu0 %v3883
      %3975 = vmatpush.msra.mxu0 %v3875
      %3976 = vmatpush.msra.mxu0 %v3867
      %3977 = vmatpush.msra.mxu0 %v3859
      %3978 = vmatpush.msra.mxu0 %v3851
      %3979 = vmatpush.msra.mxu0 %v3843
      %3980 = vmatpush.msra.mxu0 %v3835
      %3981 = vmatpush.msra.mxu0 %v3827
      %3982 = vmatpush.msra.mxu0 %v3819
      %3983 = vmatpush.msra.mxu0 %v3811
      %3984 = vmatpush.msra.mxu0 %v3803
      %3985 = vmatmul.f32.gmra.mxu0 %v3799
      %v3986 = vpop.f32.mrf.mxu0
      %v3987 = vadd.f32 0.0, %v3986
      %3988 = vdwg.mxu0
      %3989 = vmatpush.msra.mxu0 %v3924
      %3990 = vmatpush.msra.mxu0 %v3916
      %3991 = vmatpush.msra.mxu0 %v3908
      %3992 = vmatpush.msra.mxu0 %v3900
      %3993 = vmatpush.msra.mxu0 %v3892
      %3994 = vmatpush.msra.mxu0 %v3884
      %3995 = vmatpush.msra.mxu0 %v3876
      %3996 = vmatpush.msra.mxu0 %v3868
      %3997 = vmatpush.msra.mxu0 %v3860
      %3998 = vmatpush.msra.mxu0 %v3852
      %3999 = vmatpush.msra.mxu0 %v3844
      %4000 = vmatpush.msra.mxu0 %v3836
      %4001 = vmatpush.msra.mxu0 %v3828
      %4002 = vmatpush.msra.mxu0 %v3820
      %4003 = vmatpush.msra.mxu0 %v3812
      %4004 = vmatpush.msra.mxu0 %v3804
      %4005 = vmatmul.f32.gmra.mxu0 %v3799
      %v4006 = vpop.f32.mrf.mxu0
      %v4007 = vadd.f32 0.0, %v4006
      %4008 = vdwg.mxu0
      %4009 = vmatpush.msra.mxu0 %v3925
      %4010 = vmatpush.msra.mxu0 %v3917
      %4011 = vmatpush.msra.mxu0 %v3909
      %4012 = vmatpush.msra.mxu0 %v3901
      %4013 = vmatpush.msra.mxu0 %v3893
      %4014 = vmatpush.msra.mxu0 %v3885
      %4015 = vmatpush.msra.mxu0 %v3877
      %4016 = vmatpush.msra.mxu0 %v3869
      %4017 = vmatpush.msra.mxu0 %v3861
      %4018 = vmatpush.msra.mxu0 %v3853
      %4019 = vmatpush.msra.mxu0 %v3845
      %4020 = vmatpush.msra.mxu0 %v3837
      %4021 = vmatpush.msra.mxu0 %v3829
      %4022 = vmatpush.msra.mxu0 %v3821
      %4023 = vmatpush.msra.mxu0 %v3813
      %4024 = vmatpush.msra.mxu0 %v3805
      %4025 = vmatmul.f32.gmra.mxu0 %v3799
      %v4026 = vpop.f32.mrf.mxu0
      %v4027 = vadd.f32 0.0, %v4026
      %4028 = vdwg.mxu0
      %4029 = vmatpush.msra.mxu0 %v3926
      %4030 = vmatpush.msra.mxu0 %v3918
      %4031 = vmatpush.msra.mxu0 %v3910
      %4032 = vmatpush.msra.mxu0 %v3902
      %4033 = vmatpush.msra.mxu0 %v3894
      %4034 = vmatpush.msra.mxu0 %v3886
      %4035 = vmatpush.msra.mxu0 %v3878
      %4036 = vmatpush.msra.mxu0 %v3870
      %4037 = vmatpush.msra.mxu0 %v3862
      %4038 = vmatpush.msra.mxu0 %v3854
      %4039 = vmatpush.msra.mxu0 %v3846
      %4040 = vmatpush.msra.mxu0 %v3838
      %4041 = vmatpush.msra.mxu0 %v3830
      %4042 = vmatpush.msra.mxu0 %v3822
      %4043 = vmatpush.msra.mxu0 %v3814
      %4044 = vmatpush.msra.mxu0 %v3806
      %4045 = vmatmul.f32.gmra.mxu0 %v3799
      %v4046 = vpop.f32.mrf.mxu0
      %v4047 = vadd.f32 0.0, %v4046
      %4048 = vdwg.mxu0
      %4049 = vmatpush.msra.mxu0 %v3927
      %4050 = vmatpush.msra.mxu0 %v3919
      %4051 = vmatpush.msra.mxu0 %v3911
      %4052 = vmatpush.msra.mxu0 %v3903
      %4053 = vmatpush.msra.mxu0 %v3895
      %4054 = vmatpush.msra.mxu0 %v3887
      %4055 = vmatpush.msra.mxu0 %v3879
      %4056 = vmatpush.msra.mxu0 %v3871
      %4057 = vmatpush.msra.mxu0 %v3863
      %4058 = vmatpush.msra.mxu0 %v3855
      %4059 = vmatpush.msra.mxu0 %v3847
      %4060 = vmatpush.msra.mxu0 %v3839
      %4061 = vmatpush.msra.mxu0 %v3831
      %4062 = vmatpush.msra.mxu0 %v3823
      %4063 = vmatpush.msra.mxu0 %v3815
      %4064 = vmatpush.msra.mxu0 %v3807
      %4065 = vmatmul.f32.gmra.mxu0 %v3799
      %v4066 = vpop.f32.mrf.mxu0
      %v4067 = vadd.f32 0.0, %v4066
      %4068 = vdwg.mxu0
      %4069 = vmatpush.msra.mxu0 %v3928
      %4070 = vmatpush.msra.mxu0 %v3920
      %4071 = vmatpush.msra.mxu0 %v3912
      %4072 = vmatpush.msra.mxu0 %v3904
      %4073 = vmatpush.msra.mxu0 %v3896
      %4074 = vmatpush.msra.mxu0 %v3888
      %4075 = vmatpush.msra.mxu0 %v3880
      %4076 = vmatpush.msra.mxu0 %v3872
      %4077 = vmatpush.msra.mxu0 %v3864
      %4078 = vmatpush.msra.mxu0 %v3856
      %4079 = vmatpush.msra.mxu0 %v3848
      %4080 = vmatpush.msra.mxu0 %v3840
      %4081 = vmatpush.msra.mxu0 %v3832
      %4082 = vmatpush.msra.mxu0 %v3824
      %4083 = vmatpush.msra.mxu0 %v3816
      %4084 = vmatpush.msra.mxu0 %v3808
      %4085 = vmatmul.f32.gmra.mxu0 %v3799
      %v4086 = vpop.f32.mrf.mxu0
      %v4087 = vadd.f32 0.0, %v4086
      %4088 = vdwg.mxu0
      %v4097 = vrot.slane %v3967, 6
      %v4098 = vrot.slane %v3987, 4
      %v4099 = vrot.slane %v4007, 2
      %v4100 = vrot.slane %v4047, 6
      %v4101 = vrot.slane %v4067, 4
      %v4102 = vrot.slane %v4087, 2
      %v4103 = vsel %vm3149, %v3947, %v4097
      %v4104 = vsel %vm3151, %v4098, %v4099
      %v4105 = vsel %vm3153, %v4103, %v4104
      %v4106 = vsel %vm3149, %v4027, %v4100
      %v4107 = vsel %vm3151, %v4101, %v4102
      %v4108 = vsel %vm3153, %v4106, %v4107
      %v4111 = vadd.f32 %v3794, %v4105
      %v4112 = vadd.f32 %v3795, %v4108
      %4113 = vst [vmem:[#allocation4] sm:$0xff] %v4111
      %4114 = vst [vmem:[#allocation4 + $0x8] sm:$0xff] %v4112
      %p4115 = scmp.eq.s32.totalorder %s24, 3
      // Predicated region
      $region77: #{discriminator_forward.1} parent=71 // pred_check
        %p4116 = pneg %p4115
      $region78: #{discriminator_forward.1} parent=71 // pred_check_branch
        %4118 = sbr.rel (%p4116) target = $region80
      $region79: #{discriminator_forward.1} parent=71 // pred_region
        %v4119 = vld [vmem:[#allocation4] sm:$0xff]
        %v4120 = vld [vmem:[#allocation4 + $0x8] sm:$0xff]
        %v4121 = vld [vmem:[%s8] sm:$0xff]
        %v4123 = vperm.slane %v4121, 0
        %v4124 = vperm.slane %v4121, 1
        %v4125 = vperm.slane %v4121, 2
        %v4126 = vperm.slane %v4121, 3
        %v4127 = vperm.slane %v4121, 4
        %v4128 = vperm.slane %v4121, 5
        %v4129 = vperm.slane %v4121, 6
        %v4130 = vperm.slane %v4121, 7
        %v4131 = vrot.slane %v4124, 6
        %v4132 = vrot.slane %v4125, 4
        %v4133 = vrot.slane %v4126, 2
        %v4134 = vrot.slane %v4128, 6
        %v4135 = vrot.slane %v4129, 4
        %v4136 = vrot.slane %v4130, 2
        %v4137 = vsel %vm3149, %v4123, %v4131
        %v4138 = vsel %vm3151, %v4132, %v4133
        %v4139 = vsel %vm3153, %v4137, %v4138
        %v4140 = vsel %vm3149, %v4127, %v4134
        %v4141 = vsel %vm3151, %v4135, %v4136
        %v4142 = vsel %vm3153, %v4140, %v4141
        %v4145 = vadd.f32 %v4119, %v4139
        %v4146 = vadd.f32 %v4120, %v4142
        %4149 = vst [vmem:[#allocation1] ss:$4 sm:$0xff] %v4145
        %s4150 = scalar_lea.vmem [#allocation1], 32
        %4151 = vst [vmem:[%s4150] ss:$4 sm:$0xff] %v4146
        %v4152 = vld.sshfl [vmem:[#allocation1] sm:$0xff pattern:$0x73625140]
        %v4153 = vld.sshfl [vmem:[#allocation1 + $0x8] sm:$0xff pattern:$0x73625140]
        %v4154 = vld.sshfl [vmem:[#allocation1 + $0x10] sm:$0xff pattern:$0x73625140]
        %v4155 = vld.sshfl [vmem:[#allocation1 + $0x18] sm:$0xff pattern:$0x73625140]
        %v4156 = vld.sshfl [vmem:[#allocation1 + $0x20] sm:$0xff pattern:$0x73625140]
        %v4157 = vld.sshfl [vmem:[#allocation1 + $0x28] sm:$0xff pattern:$0x73625140]
        %v4158 = vld.sshfl [vmem:[#allocation1 + $0x30] sm:$0xff pattern:$0x73625140]
        %v4159 = vld.sshfl [vmem:[#allocation1 + $0x38] sm:$0xff pattern:$0x73625140]
        %v4168 = vsel %vm3149, %v4152, 0.0
        %v4169 = vrot.slane %v4168, 4
        %v4170 = vadd.f32 %v4168, %v4169
        %v4171 = vrot.slane %v4170, 2
        %v4172 = vadd.f32 %v4170, %v4171
        %v4173 = vrot.slane %v4172, 1
        %v4174 = vadd.f32 %v4172, %v4173
        %v4175 = vsel %vm3149, %v4153, 0.0
        %v4176 = vrot.slane %v4175, 4
        %v4177 = vadd.f32 %v4175, %v4176
        %v4178 = vrot.slane %v4177, 2
        %v4179 = vadd.f32 %v4177, %v4178
        %v4180 = vrot.slane %v4179, 1
        %v4181 = vadd.f32 %v4179, %v4180
        %v4182 = vsel %vm3149, %v4154, 0.0
        %v4183 = vrot.slane %v4182, 4
        %v4184 = vadd.f32 %v4182, %v4183
        %v4185 = vrot.slane %v4184, 2
        %v4186 = vadd.f32 %v4184, %v4185
        %v4187 = vrot.slane %v4186, 1
        %v4188 = vadd.f32 %v4186, %v4187
        %v4189 = vsel %vm3149, %v4155, 0.0
        %v4190 = vrot.slane %v4189, 4
        %v4191 = vadd.f32 %v4189, %v4190
        %v4192 = vrot.slane %v4191, 2
        %v4193 = vadd.f32 %v4191, %v4192
        %v4194 = vrot.slane %v4193, 1
        %v4195 = vadd.f32 %v4193, %v4194
        %v4196 = vsel %vm3149, %v4156, 0.0
        %v4197 = vrot.slane %v4196, 4
        %v4198 = vadd.f32 %v4196, %v4197
        %v4199 = vrot.slane %v4198, 2
        %v4200 = vadd.f32 %v4198, %v4199
        %v4201 = vrot.slane %v4200, 1
        %v4202 = vadd.f32 %v4200, %v4201
        %v4203 = vsel %vm3149, %v4157, 0.0
        %v4204 = vrot.slane %v4203, 4
        %v4205 = vadd.f32 %v4203, %v4204
        %v4206 = vrot.slane %v4205, 2
        %v4207 = vadd.f32 %v4205, %v4206
        %v4208 = vrot.slane %v4207, 1
        %v4209 = vadd.f32 %v4207, %v4208
        %v4210 = vsel %vm3149, %v4158, 0.0
        %v4211 = vrot.slane %v4210, 4
        %v4212 = vadd.f32 %v4210, %v4211
        %v4213 = vrot.slane %v4212, 2
        %v4214 = vadd.f32 %v4212, %v4213
        %v4215 = vrot.slane %v4214, 1
        %v4216 = vadd.f32 %v4214, %v4215
        %v4217 = vsel %vm3149, %v4159, 0.0
        %v4218 = vrot.slane %v4217, 4
        %v4219 = vadd.f32 %v4217, %v4218
        %v4220 = vrot.slane %v4219, 2
        %v4221 = vadd.f32 %v4219, %v4220
        %v4222 = vrot.slane %v4221, 1
        %v4223 = vadd.f32 %v4221, %v4222
        %v4224 = vrcp.pop 2.0
        %v4225 = vmul.f32 2.0, %v4224
        %v4226 = vsub.f32 1.0, %v4225
        %v4227 = vmul.f32 %v4224, %v4226
        %v4228 = vadd.f32 %v4224, %v4227
        %vm4229 = vweird.f32 %v4224
        %v4230 = vsel %vm4229, %v4224, %v4228
        %v4231 = vmul.f32 %v4174, %v4230
        %v4232 = vmul.f32 %v4181, %v4230
        %v4233 = vmul.f32 %v4188, %v4230
        %v4234 = vmul.f32 %v4195, %v4230
        %v4235 = vmul.f32 %v4202, %v4230
        %v4236 = vmul.f32 %v4209, %v4230
        %v4237 = vmul.f32 %v4216, %v4230
        %v4238 = vmul.f32 %v4223, %v4230
        %v4247 = vrot.slane %v4232, 6
        %v4248 = vrot.slane %v4233, 4
        %v4249 = vrot.slane %v4234, 2
        %v4250 = vrot.slane %v4236, 6
        %v4251 = vrot.slane %v4237, 4
        %v4252 = vrot.slane %v4238, 2
        %v4253 = vsel %vm3149, %v4231, %v4247
        %v4254 = vsel %vm3151, %v4248, %v4249
        %v4255 = vsel %vm3153, %v4253, %v4254
        %v4256 = vsel %vm3149, %v4235, %v4250
        %v4257 = vsel %vm3151, %v4251, %v4252
        %v4258 = vsel %vm3153, %v4256, %v4257
        %v4261 = vsub.f32 %v4145, %v4255
        %v4262 = vsub.f32 %v4146, %v4258
        %v4263 = vmul.f32 %v4261, %v4261
        %v4264 = vmul.f32 %v4262, %v4262
        %4267 = vst [vmem:[#allocation1] ss:$4 sm:$0xff] %v4263
        %s4268 = scalar_lea.vmem [#allocation1], 32
        %4269 = vst [vmem:[%s4268] ss:$4 sm:$0xff] %v4264
        %v4270 = vld.sshfl [vmem:[#allocation1] sm:$0xff pattern:$0x73625140]
        %v4271 = vld.sshfl [vmem:[#allocation1 + $0x8] sm:$0xff pattern:$0x73625140]
        %v4272 = vld.sshfl [vmem:[#allocation1 + $0x10] sm:$0xff pattern:$0x73625140]
        %v4273 = vld.sshfl [vmem:[#allocation1 + $0x18] sm:$0xff pattern:$0x73625140]
        %v4274 = vld.sshfl [vmem:[#allocation1 + $0x20] sm:$0xff pattern:$0x73625140]
        %v4275 = vld.sshfl [vmem:[#allocation1 + $0x28] sm:$0xff pattern:$0x73625140]
        %v4276 = vld.sshfl [vmem:[#allocation1 + $0x30] sm:$0xff pattern:$0x73625140]
        %v4277 = vld.sshfl [vmem:[#allocation1 + $0x38] sm:$0xff pattern:$0x73625140]
        %v4286 = vsel %vm3149, %v4270, 0.0
        %v4287 = vrot.slane %v4286, 4
        %v4288 = vadd.f32 %v4286, %v4287
        %v4289 = vrot.slane %v4288, 2
        %v4290 = vadd.f32 %v4288, %v4289
        %v4291 = vrot.slane %v4290, 1
        %v4292 = vadd.f32 %v4290, %v4291
        %v4293 = vsel %vm3149, %v4271, 0.0
        %v4294 = vrot.slane %v4293, 4
        %v4295 = vadd.f32 %v4293, %v4294
        %v4296 = vrot.slane %v4295, 2
        %v4297 = vadd.f32 %v4295, %v4296
        %v4298 = vrot.slane %v4297, 1
        %v4299 = vadd.f32 %v4297, %v4298
        %v4300 = vsel %vm3149, %v4272, 0.0
        %v4301 = vrot.slane %v4300, 4
        %v4302 = vadd.f32 %v4300, %v4301
        %v4303 = vrot.slane %v4302, 2
        %v4304 = vadd.f32 %v4302, %v4303
        %v4305 = vrot.slane %v4304, 1
        %v4306 = vadd.f32 %v4304, %v4305
        %v4307 = vsel %vm3149, %v4273, 0.0
        %v4308 = vrot.slane %v4307, 4
        %v4309 = vadd.f32 %v4307, %v4308
        %v4310 = vrot.slane %v4309, 2
        %v4311 = vadd.f32 %v4309, %v4310
        %v4312 = vrot.slane %v4311, 1
        %v4313 = vadd.f32 %v4311, %v4312
        %v4314 = vsel %vm3149, %v4274, 0.0
        %v4315 = vrot.slane %v4314, 4
        %v4316 = vadd.f32 %v4314, %v4315
        %v4317 = vrot.slane %v4316, 2
        %v4318 = vadd.f32 %v4316, %v4317
        %v4319 = vrot.slane %v4318, 1
        %v4320 = vadd.f32 %v4318, %v4319
        %v4321 = vsel %vm3149, %v4275, 0.0
        %v4322 = vrot.slane %v4321, 4
        %v4323 = vadd.f32 %v4321, %v4322
        %v4324 = vrot.slane %v4323, 2
        %v4325 = vadd.f32 %v4323, %v4324
        %v4326 = vrot.slane %v4325, 1
        %v4327 = vadd.f32 %v4325, %v4326
        %v4328 = vsel %vm3149, %v4276, 0.0
        %v4329 = vrot.slane %v4328, 4
        %v4330 = vadd.f32 %v4328, %v4329
        %v4331 = vrot.slane %v4330, 2
        %v4332 = vadd.f32 %v4330, %v4331
        %v4333 = vrot.slane %v4332, 1
        %v4334 = vadd.f32 %v4332, %v4333
        %v4335 = vsel %vm3149, %v4277, 0.0
        %v4336 = vrot.slane %v4335, 4
        %v4337 = vadd.f32 %v4335, %v4336
        %v4338 = vrot.slane %v4337, 2
        %v4339 = vadd.f32 %v4337, %v4338
        %v4340 = vrot.slane %v4339, 1
        %v4341 = vadd.f32 %v4339, %v4340
        %v4342 = vmul.f32 %v4292, %v4230
        %v4343 = vmul.f32 %v4299, %v4230
        %v4344 = vmul.f32 %v4306, %v4230
        %v4345 = vmul.f32 %v4313, %v4230
        %v4346 = vmul.f32 %v4320, %v4230
        %v4347 = vmul.f32 %v4327, %v4230
        %v4348 = vmul.f32 %v4334, %v4230
        %v4349 = vmul.f32 %v4341, %v4230
        %v4350 = vadd.f32 %v4342, 1e-05
        %v4351 = vadd.f32 %v4343, 1e-05
        %v4352 = vadd.f32 %v4344, 1e-05
        %v4353 = vadd.f32 %v4345, 1e-05
        %v4354 = vadd.f32 %v4346, 1e-05
        %v4355 = vadd.f32 %v4347, 1e-05
        %v4356 = vadd.f32 %v4348, 1e-05
        %v4357 = vadd.f32 %v4349, 1e-05
        %v4358 = vrsqrt.pop %v4350
        %v4359 = vmul.f32 %v4358, %v4350
        %v4360 = vmul.f32 %v4359, %v4358
        %v4361 = vmul.f32 0.5, %v4360
        %v4362 = vsub.f32 1.5, %v4361
        %v4363 = vmul.f32 %v4358, %v4362
        %vm4364 = vweird.f32 %v4350
        %vm4365 = vweird.f32 %v4358
        %vm4366 = vmor %vm4364, %vm4365
        %v4367 = vsel %vm4366, %v4358, %v4363
        %v4368 = vrsqrt.pop %v4351
        %v4369 = vmul.f32 %v4368, %v4351
        %v4370 = vmul.f32 %v4369, %v4368
        %v4371 = vmul.f32 0.5, %v4370
        %v4372 = vsub.f32 1.5, %v4371
        %v4373 = vmul.f32 %v4368, %v4372
        %vm4374 = vweird.f32 %v4351
        %vm4375 = vweird.f32 %v4368
        %vm4376 = vmor %vm4374, %vm4375
        %v4377 = vsel %vm4376, %v4368, %v4373
        %v4378 = vrsqrt.pop %v4352
        %v4379 = vmul.f32 %v4378, %v4352
        %v4380 = vmul.f32 %v4379, %v4378
        %v4381 = vmul.f32 0.5, %v4380
        %v4382 = vsub.f32 1.5, %v4381
        %v4383 = vmul.f32 %v4378, %v4382
        %vm4384 = vweird.f32 %v4352
        %vm4385 = vweird.f32 %v4378
        %vm4386 = vmor %vm4384, %vm4385
        %v4387 = vsel %vm4386, %v4378, %v4383
        %v4388 = vrsqrt.pop %v4353
        %v4389 = vmul.f32 %v4388, %v4353
        %v4390 = vmul.f32 %v4389, %v4388
        %v4391 = vmul.f32 0.5, %v4390
        %v4392 = vsub.f32 1.5, %v4391
        %v4393 = vmul.f32 %v4388, %v4392
        %vm4394 = vweird.f32 %v4353
        %vm4395 = vweird.f32 %v4388
        %vm4396 = vmor %vm4394, %vm4395
        %v4397 = vsel %vm4396, %v4388, %v4393
        %v4398 = vrsqrt.pop %v4354
        %v4399 = vmul.f32 %v4398, %v4354
        %v4400 = vmul.f32 %v4399, %v4398
        %v4401 = vmul.f32 0.5, %v4400
        %v4402 = vsub.f32 1.5, %v4401
        %v4403 = vmul.f32 %v4398, %v4402
        %vm4404 = vweird.f32 %v4354
        %vm4405 = vweird.f32 %v4398
        %vm4406 = vmor %vm4404, %vm4405
        %v4407 = vsel %vm4406, %v4398, %v4403
        %v4408 = vrsqrt.pop %v4355
        %v4409 = vmul.f32 %v4408, %v4355
        %v4410 = vmul.f32 %v4409, %v4408
        %v4411 = vmul.f32 0.5, %v4410
        %v4412 = vsub.f32 1.5, %v4411
        %v4413 = vmul.f32 %v4408, %v4412
        %vm4414 = vweird.f32 %v4355
        %vm4415 = vweird.f32 %v4408
        %vm4416 = vmor %vm4414, %vm4415
        %v4417 = vsel %vm4416, %v4408, %v4413
        %v4418 = vrsqrt.pop %v4356
        %v4419 = vmul.f32 %v4418, %v4356
        %v4420 = vmul.f32 %v4419, %v4418
        %v4421 = vmul.f32 0.5, %v4420
        %v4422 = vsub.f32 1.5, %v4421
        %v4423 = vmul.f32 %v4418, %v4422
        %vm4424 = vweird.f32 %v4356
        %vm4425 = vweird.f32 %v4418
        %vm4426 = vmor %vm4424, %vm4425
        %v4427 = vsel %vm4426, %v4418, %v4423
        %v4428 = vrsqrt.pop %v4357
        %v4429 = vmul.f32 %v4428, %v4357
        %v4430 = vmul.f32 %v4429, %v4428
        %v4431 = vmul.f32 0.5, %v4430
        %v4432 = vsub.f32 1.5, %v4431
        %v4433 = vmul.f32 %v4428, %v4432
        %vm4434 = vweird.f32 %v4357
        %vm4435 = vweird.f32 %v4428
        %vm4436 = vmor %vm4434, %vm4435
        %v4437 = vsel %vm4436, %v4428, %v4433
        %v4446 = vrot.slane %v4377, 6
        %v4447 = vrot.slane %v4387, 4
        %v4448 = vrot.slane %v4397, 2
        %v4449 = vrot.slane %v4417, 6
        %v4450 = vrot.slane %v4427, 4
        %v4451 = vrot.slane %v4437, 2
        %v4452 = vsel %vm3149, %v4367, %v4446
        %v4453 = vsel %vm3151, %v4447, %v4448
        %v4454 = vsel %vm3153, %v4452, %v4453
        %v4455 = vsel %vm3149, %v4407, %v4449
        %v4456 = vsel %vm3151, %v4450, %v4451
        %v4457 = vsel %vm3153, %v4455, %v4456
        %v4460 = vmul.f32 %v4261, %v4454
        %v4461 = vmul.f32 %v4262, %v4457
        %v4462 = vld [vmem:[%s9] sm:$0xff]
        %v4464 = vperm.slane %v4462, 0
        %v4465 = vperm.slane %v4462, 1
        %v4466 = vperm.slane %v4462, 2
        %v4467 = vperm.slane %v4462, 3
        %v4468 = vperm.slane %v4462, 4
        %v4469 = vperm.slane %v4462, 5
        %v4470 = vperm.slane %v4462, 6
        %v4471 = vperm.slane %v4462, 7
        %v4472 = vrot.slane %v4465, 6
        %v4473 = vrot.slane %v4466, 4
        %v4474 = vrot.slane %v4467, 2
        %v4475 = vrot.slane %v4469, 6
        %v4476 = vrot.slane %v4470, 4
        %v4477 = vrot.slane %v4471, 2
        %v4478 = vsel %vm3149, %v4464, %v4472
        %v4479 = vsel %vm3151, %v4473, %v4474
        %v4480 = vsel %vm3153, %v4478, %v4479
        %v4481 = vsel %vm3149, %v4468, %v4475
        %v4482 = vsel %vm3151, %v4476, %v4477
        %v4483 = vsel %vm3153, %v4481, %v4482
        %v4486 = vmul.f32 %v4460, %v4480
        %v4487 = vmul.f32 %v4461, %v4483
        %v4488 = vld [vmem:[%s10] sm:$0xff]
        %v4490 = vperm.slane %v4488, 0
        %v4491 = vperm.slane %v4488, 1
        %v4492 = vperm.slane %v4488, 2
        %v4493 = vperm.slane %v4488, 3
        %v4494 = vperm.slane %v4488, 4
        %v4495 = vperm.slane %v4488, 5
        %v4496 = vperm.slane %v4488, 6
        %v4497 = vperm.slane %v4488, 7
        %v4498 = vrot.slane %v4491, 6
        %v4499 = vrot.slane %v4492, 4
        %v4500 = vrot.slane %v4493, 2
        %v4501 = vrot.slane %v4495, 6
        %v4502 = vrot.slane %v4496, 4
        %v4503 = vrot.slane %v4497, 2
        %v4504 = vsel %vm3149, %v4490, %v4498
        %v4505 = vsel %vm3151, %v4499, %v4500
        %v4506 = vsel %vm3153, %v4504, %v4505
        %v4507 = vsel %vm3149, %v4494, %v4501
        %v4508 = vsel %vm3151, %v4502, %v4503
        %v4509 = vsel %vm3153, %v4507, %v4508
        %v4512 = vadd.f32 %v4486, %v4506
        %v4513 = vadd.f32 %v4487, %v4509
        %vm4514 = vcmp.gt.f32.partialorder %v4512, 0.0
        %vm4515 = vcmp.gt.f32.partialorder %v4513, 0.0
        %v4516 = vmul.f32 %v4512, 0.2
        %v4517 = vmul.f32 %v4513, 0.2
        %v4518 = vsel %vm4514, %v4512, %v4516
        %v4519 = vsel %vm4515, %v4513, %v4517
        %v4520 = vld [vmem:[%s11] sm:$0xff]
        %v4521 = vld [vmem:[%s11 + $0x8] sm:$0xff]
        %v4522 = vld [vmem:[%s11 + $0x10] sm:$0xff]
        %v4523 = vld [vmem:[%s11 + $0x18] sm:$0xff]
        %v4524 = vld [vmem:[%s11 + $0x20] sm:$0xff]
        %v4525 = vld [vmem:[%s11 + $0x28] sm:$0xff]
        %v4526 = vld [vmem:[%s11 + $0x30] sm:$0xff]
        %v4527 = vld [vmem:[%s11 + $0x38] sm:$0xff]
        %v4528 = vld [vmem:[%s11 + $0x40] sm:$0xff]
        %v4529 = vld [vmem:[%s11 + $0x48] sm:$0xff]
        %v4530 = vld [vmem:[%s11 + $0x50] sm:$0xff]
        %v4531 = vld [vmem:[%s11 + $0x58] sm:$0xff]
        %v4532 = vld [vmem:[%s11 + $0x60] sm:$0xff]
        %v4533 = vld [vmem:[%s11 + $0x68] sm:$0xff]
        %v4534 = vld [vmem:[%s11 + $0x70] sm:$0xff]
        %v4535 = vld [vmem:[%s11 + $0x78] sm:$0xff]
        %v4536 = vld [vmem:[%s11 + $0x80] sm:$0xff]
        %v4537 = vld [vmem:[%s11 + $0x88] sm:$0xff]
        %v4538 = vld [vmem:[%s11 + $0x90] sm:$0xff]
        %v4539 = vld [vmem:[%s11 + $0x98] sm:$0xff]
        %v4540 = vld [vmem:[%s11 + $0xa0] sm:$0xff]
        %v4541 = vld [vmem:[%s11 + $0xa8] sm:$0xff]
        %v4542 = vld [vmem:[%s11 + $0xb0] sm:$0xff]
        %v4543 = vld [vmem:[%s11 + $0xb8] sm:$0xff]
        %v4544 = vld [vmem:[%s11 + $0xc0] sm:$0xff]
        %v4545 = vld [vmem:[%s11 + $0xc8] sm:$0xff]
        %v4546 = vld [vmem:[%s11 + $0xd0] sm:$0xff]
        %v4547 = vld [vmem:[%s11 + $0xd8] sm:$0xff]
        %v4548 = vld [vmem:[%s11 + $0xe0] sm:$0xff]
        %v4549 = vld [vmem:[%s11 + $0xe8] sm:$0xff]
        %v4550 = vld [vmem:[%s11 + $0xf0] sm:$0xff]
        %v4551 = vld [vmem:[%s11 + $0xf8] sm:$0xff]
        %v4552 = vld [vmem:[%s11 + $0x100] sm:$0xff]
        %v4553 = vld [vmem:[%s11 + $0x108] sm:$0xff]
        %v4554 = vld [vmem:[%s11 + $0x110] sm:$0xff]
        %v4555 = vld [vmem:[%s11 + $0x118] sm:$0xff]
        %v4556 = vld [vmem:[%s11 + $0x120] sm:$0xff]
        %v4557 = vld [vmem:[%s11 + $0x128] sm:$0xff]
        %v4558 = vld [vmem:[%s11 + $0x130] sm:$0xff]
        %v4559 = vld [vmem:[%s11 + $0x138] sm:$0xff]
        %v4560 = vld [vmem:[%s11 + $0x140] sm:$0xff]
        %v4561 = vld [vmem:[%s11 + $0x148] sm:$0xff]
        %v4562 = vld [vmem:[%s11 + $0x150] sm:$0xff]
        %v4563 = vld [vmem:[%s11 + $0x158] sm:$0xff]
        %v4564 = vld [vmem:[%s11 + $0x160] sm:$0xff]
        %v4565 = vld [vmem:[%s11 + $0x168] sm:$0xff]
        %v4566 = vld [vmem:[%s11 + $0x170] sm:$0xff]
        %v4567 = vld [vmem:[%s11 + $0x178] sm:$0xff]
        %v4568 = vld [vmem:[%s11 + $0x180] sm:$0xff]
        %v4569 = vld [vmem:[%s11 + $0x188] sm:$0xff]
        %v4570 = vld [vmem:[%s11 + $0x190] sm:$0xff]
        %v4571 = vld [vmem:[%s11 + $0x198] sm:$0xff]
        %v4572 = vld [vmem:[%s11 + $0x1a0] sm:$0xff]
        %v4573 = vld [vmem:[%s11 + $0x1a8] sm:$0xff]
        %v4574 = vld [vmem:[%s11 + $0x1b0] sm:$0xff]
        %v4575 = vld [vmem:[%s11 + $0x1b8] sm:$0xff]
        %v4576 = vld [vmem:[%s11 + $0x1c0] sm:$0xff]
        %v4577 = vld [vmem:[%s11 + $0x1c8] sm:$0xff]
        %v4578 = vld [vmem:[%s11 + $0x1d0] sm:$0xff]
        %v4579 = vld [vmem:[%s11 + $0x1d8] sm:$0xff]
        %v4580 = vld [vmem:[%s11 + $0x1e0] sm:$0xff]
        %v4581 = vld [vmem:[%s11 + $0x1e8] sm:$0xff]
        %v4582 = vld [vmem:[%s11 + $0x1f0] sm:$0xff]
        %v4583 = vld [vmem:[%s11 + $0x1f8] sm:$0xff]
        %v4584 = vld [vmem:[%s11 + $0x200] sm:$0xff]
        %v4585 = vld [vmem:[%s11 + $0x208] sm:$0xff]
        %v4586 = vld [vmem:[%s11 + $0x210] sm:$0xff]
        %v4587 = vld [vmem:[%s11 + $0x218] sm:$0xff]
        %v4588 = vld [vmem:[%s11 + $0x220] sm:$0xff]
        %v4589 = vld [vmem:[%s11 + $0x228] sm:$0xff]
        %v4590 = vld [vmem:[%s11 + $0x230] sm:$0xff]
        %v4591 = vld [vmem:[%s11 + $0x238] sm:$0xff]
        %v4592 = vld [vmem:[%s11 + $0x240] sm:$0xff]
        %v4593 = vld [vmem:[%s11 + $0x248] sm:$0xff]
        %v4594 = vld [vmem:[%s11 + $0x250] sm:$0xff]
        %v4595 = vld [vmem:[%s11 + $0x258] sm:$0xff]
        %v4596 = vld [vmem:[%s11 + $0x260] sm:$0xff]
        %v4597 = vld [vmem:[%s11 + $0x268] sm:$0xff]
        %v4598 = vld [vmem:[%s11 + $0x270] sm:$0xff]
        %v4599 = vld [vmem:[%s11 + $0x278] sm:$0xff]
        %v4600 = vld [vmem:[%s11 + $0x280] sm:$0xff]
        %v4601 = vld [vmem:[%s11 + $0x288] sm:$0xff]
        %v4602 = vld [vmem:[%s11 + $0x290] sm:$0xff]
        %v4603 = vld [vmem:[%s11 + $0x298] sm:$0xff]
        %v4604 = vld [vmem:[%s11 + $0x2a0] sm:$0xff]
        %v4605 = vld [vmem:[%s11 + $0x2a8] sm:$0xff]
        %v4606 = vld [vmem:[%s11 + $0x2b0] sm:$0xff]
        %v4607 = vld [vmem:[%s11 + $0x2b8] sm:$0xff]
        %v4608 = vld [vmem:[%s11 + $0x2c0] sm:$0xff]
        %v4609 = vld [vmem:[%s11 + $0x2c8] sm:$0xff]
        %v4610 = vld [vmem:[%s11 + $0x2d0] sm:$0xff]
        %v4611 = vld [vmem:[%s11 + $0x2d8] sm:$0xff]
        %v4612 = vld [vmem:[%s11 + $0x2e0] sm:$0xff]
        %v4613 = vld [vmem:[%s11 + $0x2e8] sm:$0xff]
        %v4614 = vld [vmem:[%s11 + $0x2f0] sm:$0xff]
        %v4615 = vld [vmem:[%s11 + $0x2f8] sm:$0xff]
        %v4616 = vld [vmem:[%s11 + $0x300] sm:$0xff]
        %v4617 = vld [vmem:[%s11 + $0x308] sm:$0xff]
        %v4618 = vld [vmem:[%s11 + $0x310] sm:$0xff]
        %v4619 = vld [vmem:[%s11 + $0x318] sm:$0xff]
        %v4620 = vld [vmem:[%s11 + $0x320] sm:$0xff]
        %v4621 = vld [vmem:[%s11 + $0x328] sm:$0xff]
        %v4622 = vld [vmem:[%s11 + $0x330] sm:$0xff]
        %v4623 = vld [vmem:[%s11 + $0x338] sm:$0xff]
        %v4624 = vld [vmem:[%s11 + $0x340] sm:$0xff]
        %v4625 = vld [vmem:[%s11 + $0x348] sm:$0xff]
        %v4626 = vld [vmem:[%s11 + $0x350] sm:$0xff]
        %v4627 = vld [vmem:[%s11 + $0x358] sm:$0xff]
        %v4628 = vld [vmem:[%s11 + $0x360] sm:$0xff]
        %v4629 = vld [vmem:[%s11 + $0x368] sm:$0xff]
        %v4630 = vld [vmem:[%s11 + $0x370] sm:$0xff]
        %v4631 = vld [vmem:[%s11 + $0x378] sm:$0xff]
        %v4632 = vld [vmem:[%s11 + $0x380] sm:$0xff]
        %v4633 = vld [vmem:[%s11 + $0x388] sm:$0xff]
        %v4634 = vld [vmem:[%s11 + $0x390] sm:$0xff]
        %v4635 = vld [vmem:[%s11 + $0x398] sm:$0xff]
        %v4636 = vld [vmem:[%s11 + $0x3a0] sm:$0xff]
        %v4637 = vld [vmem:[%s11 + $0x3a8] sm:$0xff]
        %v4638 = vld [vmem:[%s11 + $0x3b0] sm:$0xff]
        %v4639 = vld [vmem:[%s11 + $0x3b8] sm:$0xff]
        %v4640 = vld [vmem:[%s11 + $0x3c0] sm:$0xff]
        %v4641 = vld [vmem:[%s11 + $0x3c8] sm:$0xff]
        %v4642 = vld [vmem:[%s11 + $0x3d0] sm:$0xff]
        %v4643 = vld [vmem:[%s11 + $0x3d8] sm:$0xff]
        %v4644 = vld [vmem:[%s11 + $0x3e0] sm:$0xff]
        %v4645 = vld [vmem:[%s11 + $0x3e8] sm:$0xff]
        %v4646 = vld [vmem:[%s11 + $0x3f0] sm:$0xff]
        %v4647 = vld [vmem:[%s11 + $0x3f8] sm:$0xff]
        %v4648 = vld [vmem:[%s12] sm:$0x1]
        %v4650 = vperm.slane %v4648, 0
        %4654 = vst [vmem:[#allocation1] ss:$4 sm:$0xff] %v4518
        %s4655 = scalar_lea.vmem [#allocation1], 32
        %4656 = vst [vmem:[%s4655] ss:$4 sm:$0xff] %v4519
        %v4657 = vld.sshfl [vmem:[#allocation1] sm:$0xff pattern:$0x73625140]
        %v4658 = vld.sshfl [vmem:[#allocation1 + $0x8] sm:$0xff pattern:$0x73625140]
        %v4659 = vld.sshfl [vmem:[#allocation1 + $0x10] sm:$0xff pattern:$0x73625140]
        %v4660 = vld.sshfl [vmem:[#allocation1 + $0x18] sm:$0xff pattern:$0x73625140]
        %v4661 = vld.sshfl [vmem:[#allocation1 + $0x20] sm:$0xff pattern:$0x73625140]
        %v4662 = vld.sshfl [vmem:[#allocation1 + $0x28] sm:$0xff pattern:$0x73625140]
        %v4663 = vld.sshfl [vmem:[#allocation1 + $0x30] sm:$0xff pattern:$0x73625140]
        %v4664 = vld.sshfl [vmem:[#allocation1 + $0x38] sm:$0xff pattern:$0x73625140]
        %4673 = vmatpush.msra.mxu0 %v4535
        %4674 = vmatpush.msra.mxu0 %v4534
        %4675 = vmatpush.msra.mxu0 %v4533
        %4676 = vmatpush.msra.mxu0 %v4532
        %4677 = vmatpush.msra.mxu0 %v4531
        %4678 = vmatpush.msra.mxu0 %v4530
        %4679 = vmatpush.msra.mxu0 %v4529
        %4680 = vmatpush.msra.mxu0 %v4528
        %4681 = vmatpush.msra.mxu0 %v4527
        %4682 = vmatpush.msra.mxu0 %v4526
        %4683 = vmatpush.msra.mxu0 %v4525
        %4684 = vmatpush.msra.mxu0 %v4524
        %4685 = vmatpush.msra.mxu0 %v4523
        %4686 = vmatpush.msra.mxu0 %v4522
        %4687 = vmatpush.msra.mxu0 %v4521
        %4688 = vmatpush.msra.mxu0 %v4520
        %4689 = vmatmul.f32.gmra.mxu0 %v4657
        %v4690 = vpop.f32.mrf.mxu0
        %v4691 = vadd.f32 %v4650, %v4690
        %4692 = vdwg.mxu0
        %4693 = vmatpush.msra.mxu0 %v4551
        %4694 = vmatpush.msra.mxu0 %v4550
        %4695 = vmatpush.msra.mxu0 %v4549
        %4696 = vmatpush.msra.mxu0 %v4548
        %4697 = vmatpush.msra.mxu0 %v4547
        %4698 = vmatpush.msra.mxu0 %v4546
        %4699 = vmatpush.msra.mxu0 %v4545
        %4700 = vmatpush.msra.mxu0 %v4544
        %4701 = vmatpush.msra.mxu0 %v4543
        %4702 = vmatpush.msra.mxu0 %v4542
        %4703 = vmatpush.msra.mxu0 %v4541
        %4704 = vmatpush.msra.mxu0 %v4540
        %4705 = vmatpush.msra.mxu0 %v4539
        %4706 = vmatpush.msra.mxu0 %v4538
        %4707 = vmatpush.msra.mxu0 %v4537
        %4708 = vmatpush.msra.mxu0 %v4536
        %4709 = vmatmul.f32.gmra.mxu0 %v4658
        %v4710 = vpop.f32.mrf.mxu0
        %v4711 = vadd.f32 %v4691, %v4710
        %4712 = vdwg.mxu0
        %4713 = vmatpush.msra.mxu0 %v4567
        %4714 = vmatpush.msra.mxu0 %v4566
        %4715 = vmatpush.msra.mxu0 %v4565
        %4716 = vmatpush.msra.mxu0 %v4564
        %4717 = vmatpush.msra.mxu0 %v4563
        %4718 = vmatpush.msra.mxu0 %v4562
        %4719 = vmatpush.msra.mxu0 %v4561
        %4720 = vmatpush.msra.mxu0 %v4560
        %4721 = vmatpush.msra.mxu0 %v4559
        %4722 = vmatpush.msra.mxu0 %v4558
        %4723 = vmatpush.msra.mxu0 %v4557
        %4724 = vmatpush.msra.mxu0 %v4556
        %4725 = vmatpush.msra.mxu0 %v4555
        %4726 = vmatpush.msra.mxu0 %v4554
        %4727 = vmatpush.msra.mxu0 %v4553
        %4728 = vmatpush.msra.mxu0 %v4552
        %4729 = vmatmul.f32.gmra.mxu0 %v4659
        %v4730 = vpop.f32.mrf.mxu0
        %v4731 = vadd.f32 %v4711, %v4730
        %4732 = vdwg.mxu0
        %4733 = vmatpush.msra.mxu0 %v4583
        %4734 = vmatpush.msra.mxu0 %v4582
        %4735 = vmatpush.msra.mxu0 %v4581
        %4736 = vmatpush.msra.mxu0 %v4580
        %4737 = vmatpush.msra.mxu0 %v4579
        %4738 = vmatpush.msra.mxu0 %v4578
        %4739 = vmatpush.msra.mxu0 %v4577
        %4740 = vmatpush.msra.mxu0 %v4576
        %4741 = vmatpush.msra.mxu0 %v4575
        %4742 = vmatpush.msra.mxu0 %v4574
        %4743 = vmatpush.msra.mxu0 %v4573
        %4744 = vmatpush.msra.mxu0 %v4572
        %4745 = vmatpush.msra.mxu0 %v4571
        %4746 = vmatpush.msra.mxu0 %v4570
        %4747 = vmatpush.msra.mxu0 %v4569
        %4748 = vmatpush.msra.mxu0 %v4568
        %4749 = vmatmul.f32.gmra.mxu0 %v4660
        %v4750 = vpop.f32.mrf.mxu0
        %v4751 = vadd.f32 %v4731, %v4750
        %4752 = vdwg.mxu0
        %4753 = vmatpush.msra.mxu0 %v4599
        %4754 = vmatpush.msra.mxu0 %v4598
        %4755 = vmatpush.msra.mxu0 %v4597
        %4756 = vmatpush.msra.mxu0 %v4596
        %4757 = vmatpush.msra.mxu0 %v4595
        %4758 = vmatpush.msra.mxu0 %v4594
        %4759 = vmatpush.msra.mxu0 %v4593
        %4760 = vmatpush.msra.mxu0 %v4592
        %4761 = vmatpush.msra.mxu0 %v4591
        %4762 = vmatpush.msra.mxu0 %v4590
        %4763 = vmatpush.msra.mxu0 %v4589
        %4764 = vmatpush.msra.mxu0 %v4588
        %4765 = vmatpush.msra.mxu0 %v4587
        %4766 = vmatpush.msra.mxu0 %v4586
        %4767 = vmatpush.msra.mxu0 %v4585
        %4768 = vmatpush.msra.mxu0 %v4584
        %4769 = vmatmul.f32.gmra.mxu0 %v4661
        %v4770 = vpop.f32.mrf.mxu0
        %v4771 = vadd.f32 %v4751, %v4770
        %4772 = vdwg.mxu0
        %4773 = vmatpush.msra.mxu0 %v4615
        %4774 = vmatpush.msra.mxu0 %v4614
        %4775 = vmatpush.msra.mxu0 %v4613
        %4776 = vmatpush.msra.mxu0 %v4612
        %4777 = vmatpush.msra.mxu0 %v4611
        %4778 = vmatpush.msra.mxu0 %v4610
        %4779 = vmatpush.msra.mxu0 %v4609
        %4780 = vmatpush.msra.mxu0 %v4608
        %4781 = vmatpush.msra.mxu0 %v4607
        %4782 = vmatpush.msra.mxu0 %v4606
        %4783 = vmatpush.msra.mxu0 %v4605
        %4784 = vmatpush.msra.mxu0 %v4604
        %4785 = vmatpush.msra.mxu0 %v4603
        %4786 = vmatpush.msra.mxu0 %v4602
        %4787 = vmatpush.msra.mxu0 %v4601
        %4788 = vmatpush.msra.mxu0 %v4600
        %4789 = vmatmul.f32.gmra.mxu0 %v4662
        %v4790 = vpop.f32.mrf.mxu0
        %v4791 = vadd.f32 %v4771, %v4790
        %4792 = vdwg.mxu0
        %4793 = vmatpush.msra.mxu0 %v4631
        %4794 = vmatpush.msra.mxu0 %v4630
        %4795 = vmatpush.msra.mxu0 %v4629
        %4796 = vmatpush.msra.mxu0 %v4628
        %4797 = vmatpush.msra.mxu0 %v4627
        %4798 = vmatpush.msra.mxu0 %v4626
        %4799 = vmatpush.msra.mxu0 %v4625
        %4800 = vmatpush.msra.mxu0 %v4624
        %4801 = vmatpush.msra.mxu0 %v4623
        %4802 = vmatpush.msra.mxu0 %v4622
        %4803 = vmatpush.msra.mxu0 %v4621
        %4804 = vmatpush.msra.mxu0 %v4620
        %4805 = vmatpush.msra.mxu0 %v4619
        %4806 = vmatpush.msra.mxu0 %v4618
        %4807 = vmatpush.msra.mxu0 %v4617
        %4808 = vmatpush.msra.mxu0 %v4616
        %4809 = vmatmul.f32.gmra.mxu0 %v4663
        %v4810 = vpop.f32.mrf.mxu0
        %v4811 = vadd.f32 %v4791, %v4810
        %4812 = vdwg.mxu0
        %4813 = vmatpush.msra.mxu0 %v4647
        %4814 = vmatpush.msra.mxu0 %v4646
        %4815 = vmatpush.msra.mxu0 %v4645
        %4816 = vmatpush.msra.mxu0 %v4644
        %4817 = vmatpush.msra.mxu0 %v4643
        %4818 = vmatpush.msra.mxu0 %v4642
        %4819 = vmatpush.msra.mxu0 %v4641
        %4820 = vmatpush.msra.mxu0 %v4640
        %4821 = vmatpush.msra.mxu0 %v4639
        %4822 = vmatpush.msra.mxu0 %v4638
        %4823 = vmatpush.msra.mxu0 %v4637
        %4824 = vmatpush.msra.mxu0 %v4636
        %4825 = vmatpush.msra.mxu0 %v4635
        %4826 = vmatpush.msra.mxu0 %v4634
        %4827 = vmatpush.msra.mxu0 %v4633
        %4828 = vmatpush.msra.mxu0 %v4632
        %4829 = vmatmul.f32.gmra.mxu0 %v4664
        %v4830 = vpop.f32.mrf.mxu0
        %v4831 = vadd.f32 %v4811, %v4830
        %4832 = vdwg.mxu0
        %v4833 = vsub.f32 0.0, %v4831
        %v4834 = vmul.f32 %v4833, 1.442695
        %v4835 = vpow.pop %v4834
        %v4836 = vadd.f32 %v4835, 1.0
        %v4837 = vrcp.pop %v4836
        %v4838 = vmul.f32 %v4836, %v4837
        %v4839 = vsub.f32 1.0, %v4838
        %v4840 = vmul.f32 %v4837, %v4839
        %v4841 = vadd.f32 %v4837, %v4840
        %vm4842 = vweird.f32 %v4836
        %vm4843 = vweird.f32 %v4837
        %vm4844 = vmor %vm4842, %vm4843
        %v4845 = vsel %vm4844, %v4837, %v4841
        %v4846 = vand.u32 2147483647, %v4836
        %vm4847 = vcmp.eq.f32.partialorder %v4846, 8.507059e+37
        %v4848 = vand.u32 %v4836, 2147483648
        %v4849 = vor.u32 1.1754944e-38, %v4848
        %v4850 = vsel %vm4847, %v4849, %v4845
        %4851 = vst [vmem:[%s13] sm:$0x3] %v4850
      $region80: #{discriminator_forward.1} parent=71 // pred_fallthru
        _
      // Predicated region
      $region81: #{discriminator_forward.1} parent=71 // pred_check
        %p4852 = pneg %p315
      $region82: #{discriminator_forward.1} parent=71 // pred_check_branch
        %4854 = sbr.rel (%p4852) target = $region84
      $region83: #{discriminator_forward.1} parent=71 // pred_region
        _
      $region84: #{discriminator_forward.1} parent=71 // pred_fallthru
        _
      // Predicated region
      $region85: #{discriminator_forward.1} parent=71 // pred_check
        %p4855 = pneg %p315
      $region86: #{discriminator_forward.1} parent=71 // pred_check_branch
        %4857 = sbr.rel (%p4855) target = $region88
      $region87: #{discriminator_forward.1} parent=71 // pred_region
        _
      $region88: #{discriminator_forward.1} parent=71 // pred_fallthru
        _
    $region72: #{discriminator_forward.1} parent=5 // pred_fallthru
      _
    %p4858 = scmp.le.s32.totalorder 2, %s19
    // Predicated region
    $region89: #{discriminator_forward.1} parent=5 // pred_check
      %p4859 = pneg %p4858
    $region90: #{discriminator_forward.1} parent=5 // pred_check_branch
      %4861 = sbr.rel (%p4859) target = $region92
    $region91: #{discriminator_forward.1} parent=5 // pred_region
      %s4862 = ssub.s32 %s19, 2
    $region92: #{discriminator_forward.1} parent=5 // pred_fallthru
      _
  $region6: #{discriminator_forward.1} parent=0 // loop_footer
    %s23 = sadd.s32 1, %s19
  $region7: #{discriminator_forward.1} parent=0 // loop_footer_branch
    %18 = sbr.rel target = $region3
  $region8: #{discriminator_forward.1} parent=0 // loop_exit
    _

</llo_original>
